<compile_context>
chip_gen: v7x
topology: tpu7x:2x2x1
jax: 0.10.0
libtpu: 0.0.40
codegen_flags: <defaults>
</compile_context>

<pallas_src>
import numpy as np
import jax
import jax.numpy as jnp
from jax import lax
from jax.experimental import pallas as pl
from jax.experimental.pallas import tpu as pltpu


def _round_up(x, m):
    return ((x + m - 1) // m) * m


# ----------------------------------------------------------------------------
# Weight packing: fuse r/z/n gates along the lane axis and pad to (8,128) tiles
# ----------------------------------------------------------------------------
def _pack_direction(wi, wh, bi, bh, Hp):
    """wi:[3,D,H] wh:[3,H,H] bi,bh:[3,1,H] ->
       Wi:[D,3Hp] f32   (for the hoisted XLA GEMM)
       Wh:[Hp,3Hp] bf16 (recurrent weights, bf16 MXU path)
       b_in:[1,3Hp] f32 (= bi, with bh folded in for the r,z gates)
       bhn:[1,Hp]  f32  (h-bias of the n gate; r-scaled inside the kernel)."""
    D, H = wi.shape[1], wi.shape[2]
    Wi = jnp.zeros((D, 3 * Hp), jnp.float32)
    Wh = jnp.zeros((Hp, 3 * Hp), jnp.float32)
    b_in = jnp.zeros((1, 3 * Hp), jnp.float32)
    bhn = jnp.zeros((1, Hp), jnp.float32)
    for g in range(3):
        lo = g * Hp
        Wi = Wi.at[:, lo:lo + H].set(wi[g])
        Wh = Wh.at[:H, lo:lo + H].set(wh[g])
    b_in = b_in.at[0, 0 * Hp:0 * Hp + H].set(bi[0, 0] + bh[0, 0])   # r gate: fold b_hr
    b_in = b_in.at[0, 1 * Hp:1 * Hp + H].set(bi[1, 0] + bh[1, 0])   # z gate: fold b_hz
    b_in = b_in.at[0, 2 * Hp:2 * Hp + H].set(bi[2, 0])              # n gate: b_hn stays (r-scaled)
    bhn = bhn.at[0, :H].set(bh[2, 0])
    return Wi, Wh.astype(jnp.bfloat16), b_in, bhn


# ----------------------------------------------------------------------------
# Pallas recurrent kernel: one grid step = one time block, BOTH directions fused
# ----------------------------------------------------------------------------
def _make_bigru_kernel(TT, Hp, T_pad, G, unroll):
    def kernel(lens_ref, gif_ref, gib_ref, whf_ref, whb_ref, bhnf_ref, bhnb_ref,
               outf_ref, outb_ref, hn_ref, hf_scr, hb_scr):
        g = pl.program_id(0)

        @pl.when(g == 0)
        def _():
            hf_scr[...] = jnp.zeros_like(hf_scr)
            hb_scr[...] = jnp.zeros_like(hb_scr)

        lens = lens_ref[...]                       # [Bp, 1] int32 sequence lengths
        whf = whf_ref[...]                         # [Hp, 3Hp] bf16 (resident weights)
        whb = whb_ref[...]
        Bp = hf_scr.shape[0]
        # Hoisted broadcasts (JAX does not CSE broadcast_in_dim inside the loop).
        bhnf = jnp.broadcast_to(bhnf_ref[...], (Bp, Hp))
        bhnb = jnp.broadcast_to(bhnb_ref[...], (Bp, Hp))
        t0 = g * TT                                # original-time offset of this block

        def cell(gi, gh, bhn, h):
            r = jax.nn.sigmoid(gi[:, 0:Hp] + gh[:, 0:Hp])
            z = jax.nn.sigmoid(gi[:, Hp:2 * Hp] + gh[:, Hp:2 * Hp])
            n = jnp.tanh(gi[:, 2 * Hp:] + r * (gh[:, 2 * Hp:] + bhn))
            return (1.0 - z) * n + z * h

        def step(s, carry):
            hf, hb = carry
            # Both directions use the same static-stride local index s: the backward
            # slab is pre-reversed, so no direction-dependent dynamic addressing.
            gif = gif_ref[s].astype(jnp.float32)             # [Bp, 3Hp]
            gib = gib_ref[s].astype(jnp.float32)
            # Two independent recurrent matmuls back-to-back -> ILP on a single TC.
            ghf = jnp.dot(hf.astype(jnp.bfloat16), whf,
                          preferred_element_type=jnp.float32)
            ghb = jnp.dot(hb.astype(jnp.bfloat16), whb,
                          preferred_element_type=jnp.float32)
            cf = cell(gif, ghf, bhnf, hf)
            cb = cell(gib, ghb, bhnb, hb)
            vf = (t0 + s) < lens                             # [Bp,1] valid (fwd time)
            vb = (T_pad - 1 - t0 - s) < lens                 # [Bp,1] valid (bwd time)
            outf_ref[s] = jnp.where(vf, cf, 0.0)             # padded -> 0 (pack/pad)
            outb_ref[TT - 1 - s] = jnp.where(vb, cb, 0.0)    # un-reverse locally
            return (jnp.where(vf, cf, hf), jnp.where(vb, cb, hb))

        hf, hb = lax.fori_loop(0, TT, step, (hf_scr[...], hb_scr[...]),
                               unroll=unroll)
        hf_scr[...] = hf
        hb_scr[...] = hb

        @pl.when(g == G - 1)                       # final hiddens, flushed at grid end
        def _():
            hn_ref[:, 0:Hp] = hf
            hn_ref[:, Hp:2 * Hp] = hb

    return kernel


def bigru_pallas(data, seq_lens, params, *, time_block=32, unroll=True):
    """data: [B, T, D] f32, seq_lens: [B] ints.  Returns padded time-major pieces."""
    B, T, D = data.shape
    H = params["wi_fw"].shape[-1]
    Bp = _round_up(B, 8)                           # sublane padding
    Hp = _round_up(H, 128)                         # lane padding (no padding past 128 for H<=128)
    TT = max(1, min(time_block, T))                # time steps per grid iteration
    T_pad = _round_up(T, TT)
    G = T_pad // TT

    # --- fused / padded weights (zero padding keeps padded lanes at h == 0) ---
    Wi_f, Wh_f, bin_f, bhn_f = _pack_direction(
        params["wi_fw"], params["wh_fw"], params["bi_fw"], params["bh_fw"], Hp)
    Wi_b, Wh_b, bin_b, bhn_b = _pack_direction(
        params["wi_bw"], params["wh_bw"], params["bi_bw"], params["bh_bw"], Hp)

    # --- time-major padded input [T_pad, Bp, D]; reverse on the SMALL tensor ---
    x_tm = jnp.transpose(data, (1, 0, 2)).astype(jnp.float32)
    x_p = jnp.zeros((T_pad, Bp, D), jnp.float32).at[:T, :B, :].set(x_tm)
    x_rev = x_p[::-1]

    # --- hoisted input projections: one big MXU GEMM per direction, streamed bf16 ---
    gi_f = (jnp.einsum("tbd,dh->tbh", x_p, Wi_f) + bin_f).astype(jnp.bfloat16)
    gi_b = (jnp.einsum("tbd,dh->tbh", x_rev, Wi_b) + bin_b).astype(jnp.bfloat16)

    # --- sequence lengths as a tiny [Bp,1] VMEM input (replaces a [T,B,1] mask) ---
    lens = jnp.zeros((Bp,), jnp.int32).at[:B].set(jnp.asarray(seq_lens, jnp.int32))
    lens2 = lens.reshape(Bp, 1)

    kernel = _make_bigru_kernel(TT, Hp, T_pad, G, unroll)

    # --- explicit VMEM budget: 2x double-buffered gi blocks + 2x out blocks + weights ---
    gi_block = TT * Bp * 3 * Hp * 2                # bf16
    out_block = TT * Bp * Hp * 4                   # f32
    w_bytes = 2 * Hp * 3 * Hp * 2 + 2 * Bp * Hp * 4 + Bp * 2 * Hp * 4
    vmem_need = 2 * (2 * gi_block + 2 * out_block) + w_bytes + (4 << 20)
    vmem_limit = int(min(max(vmem_need, 32 << 20), 64 << 20))   # safe on 64 MiB v7x

    out_f, out_b, hn = pl.pallas_call(
        kernel,
        grid=(G,),
        in_specs=[
            pl.BlockSpec((Bp, 1), lambda g: (0, 0)),                      # seq lens
            pl.BlockSpec((TT, Bp, 3 * Hp), lambda g: (g, 0, 0)),          # gi fwd
            pl.BlockSpec((TT, Bp, 3 * Hp), lambda g: (g, 0, 0)),          # gi bwd (rev)
            pl.BlockSpec((Hp, 3 * Hp), lambda g: (0, 0)),                 # Wh fwd
            pl.BlockSpec((Hp, 3 * Hp), lambda g: (0, 0)),                 # Wh bwd
            pl.BlockSpec((1, Hp), lambda g: (0, 0)),                      # bhn fwd
            pl.BlockSpec((1, Hp), lambda g: (0, 0)),                      # bhn bwd
        ],
        out_specs=[
            pl.BlockSpec((TT, Bp, Hp), lambda g: (g, 0, 0)),              # out fwd
            pl.BlockSpec((TT, Bp, Hp), lambda g: (G - 1 - g, 0, 0)),      # out bwd (orig order)
            pl.BlockSpec((Bp, 2 * Hp), lambda g: (0, 0)),                 # h_n (fw|bw lanes)
        ],
        out_shape=[
            jax.ShapeDtypeStruct((T_pad, Bp, Hp), jnp.float32),
            jax.ShapeDtypeStruct((T_pad, Bp, Hp), jnp.float32),
            jax.ShapeDtypeStruct((Bp, 2 * Hp), jnp.float32),
        ],
        scratch_shapes=[pltpu.VMEM((Bp, Hp), jnp.float32),
                        pltpu.VMEM((Bp, Hp), jnp.float32)],
        compiler_params=pltpu.CompilerParams(
            dimension_semantics=("arbitrary",),        # time blocks carry the recurrence
            vmem_limit_bytes=vmem_limit),
    )(lens2, gi_f, gi_b, Wh_f, Wh_b, bhn_f, bhn_b)

    return out_f, out_b, hn


# ----------------------------------------------------------------------------
# Public wrapper mirroring Encoder.forward(data, mask, seq_lens)
# ----------------------------------------------------------------------------
def encoder_forward(params, data, mask, seq_lens):
    # `mask` is accepted for signature parity with the PyTorch module; the
    # reference forward never uses it in the computation.
    del mask
    seq_lens_np = np.asarray(seq_lens)
    B, T, D = data.shape
    H = params["wi_fw"].shape[-1]
    Hp = _round_up(H, 128)

    out_f, out_b, hn = bigru_pallas(data, seq_lens_np, params)

    out_fw = out_f[:T, :B, :H]                                 # strip time/batch/lane padding
    out_bw = out_b[:T, :B, :H]
    output = jnp.concatenate([out_fw, out_bw], axis=-1)        # [T, B, 2H]
    output = jnp.transpose(output, (1, 0, 2))                  # [B, T, 2H]
    # pad_packed_sequence(batch_first=True) trims time to max(seq_lens).
    max_len = int(seq_lens_np.max())
    output = output[:, :max_len, :]
    # h_n: [num_layers=1, B, 2H] (fw/bk concatenated along feature dim)
    h_n = jnp.concatenate([hn[:B, :H], hn[:B, Hp:Hp + H]], axis=-1)[None]
    return output, h_n


# ----------------------------------------------------------------------------
# Deterministic parameter init (PyTorch-like uniform(-1/sqrt(H), 1/sqrt(H)))
# ----------------------------------------------------------------------------
def init_params(key, input_size, hidden_size):
    scale = 1.0 / np.sqrt(hidden_size)
    shapes = {
        "wi_fw": (3, input_size, hidden_size), "wh_fw": (3, hidden_size, hidden_size),
        "bi_fw": (3, 1, hidden_size),          "bh_fw": (3, 1, hidden_size),
        "wi_bw": (3, input_size, hidden_size), "wh_bw": (3, hidden_size, hidden_size),
        "bi_bw": (3, 1, hidden_size),          "bh_bw": (3, 1, hidden_size),
    }
    params = {}
    for name, shp in shapes.items():
        key, sub = jax.random.split(key)
        params[name] = jax.random.uniform(sub, shp, jnp.float32, -scale, scale)
    return params


# ----------------------------------------------------------------------------
# Pure-JAX f32 reference (same masking semantics) used for a correctness check
# ----------------------------------------------------------------------------
def reference_forward(params, data, seq_lens):
    B, T, D = data.shape
    H = params["wi_fw"].shape[-1]
    lens = jnp.asarray(seq_lens, jnp.int32)

    def cell(x, h, wi, wh, bi, bh):
        r = jax.nn.sigmoid(x @ wi[0] + bi[0] + h @ wh[0] + bh[0])
        z = jax.nn.sigmoid(x @ wi[1] + bi[1] + h @ wh[1] + bh[1])
        n = jnp.tanh(x @ wi[2] + bi[2] + r * (h @ wh[2] + bh[2]))
        return (1.0 - z) * n + z * h

    h_f = jnp.zeros((B, H), jnp.float32)
    outs_f = []
    for t in range(T):
        hn = cell(data[:, t], h_f, params["wi_fw"], params["wh_fw"],
                  params["bi_fw"], params["bh_fw"])
        valid = (t < lens)[:, None]
        h_f = jnp.where(valid, hn, h_f)
        outs_f.append(jnp.where(valid, hn, 0.0))

    h_b = jnp.zeros((B, H), jnp.float32)
    outs_b = [None] * T
    for t in range(T - 1, -1, -1):
        hn = cell(data[:, t], h_b, params["wi_bw"], params["wh_bw"],
                  params["bi_bw"], params["bh_bw"])
        valid = (t < lens)[:, None]
        h_b = jnp.where(valid, hn, h_b)
        outs_b[t] = jnp.where(valid, hn, 0.0)

    out = jnp.concatenate([jnp.stack(outs_f, 1), jnp.stack(outs_b, 1)], -1)
    max_len = int(np.asarray(seq_lens).max())
    h_n = jnp.concatenate([h_f, h_b], -1)[None]
    return out[:, :max_len, :], h_n


if __name__ == "__main__":
    B, T, D, H = 4, 8, 16, 32
    key = jax.random.PRNGKey(0)
    k_data, k_params = jax.random.split(key)

    params = init_params(k_params, D, H)
    data = jax.random.normal(k_data, (B, T, D), jnp.float32)
    seq_lens = np.array([8, 6, 5, 3], dtype=np.int32)         # sorted desc (pack requirement)
    mask = (np.arange(T)[None, :] < seq_lens[:, None]).astype(np.float32)

    output, h_n = encoder_forward(params, data, mask, seq_lens)
    output = jax.block_until_ready(output)
    h_n = jax.block_until_ready(h_n)

    ref_out, ref_hn = reference_forward(params, data, seq_lens)

    assert output.shape == (B, int(seq_lens.max()), 2 * H), output.shape
    assert h_n.shape == (1, B, 2 * H), h_n.shape
    # Looser tolerance: gi / Wh / recurrent-matmul LHS run in bf16 (f32 accumulate).
    np.testing.assert_allclose(np.asarray(output), np.asarray(ref_out), atol=3e-2, rtol=3e-2)
    np.testing.assert_allclose(np.asarray(h_n), np.asarray(ref_hn), atol=3e-2, rtol=3e-2)

    print("KERNEL_OK")
</pallas_src>

<mosaic_0001>
module attributes {stable_mosaic.version = 11 : i64} {
  func.func @kernel(%arg0: i32, %arg1: memref<8x1xi32, #tpu.memory_space<vmem>>, %arg2: memref<8x8x384xbf16, #tpu.memory_space<vmem>>, %arg3: memref<8x8x384xbf16, #tpu.memory_space<vmem>>, %arg4: memref<128x384xbf16, #tpu.memory_space<vmem>>, %arg5: memref<128x384xbf16, #tpu.memory_space<vmem>>, %arg6: memref<1x128xf32, #tpu.memory_space<vmem>>, %arg7: memref<1x128xf32, #tpu.memory_space<vmem>>, %arg8: memref<8x8x128xf32, #tpu.memory_space<vmem>>, %arg9: memref<8x8x128xf32, #tpu.memory_space<vmem>>, %arg10: memref<8x256xf32, #tpu.memory_space<vmem>>, %arg11: memref<8x128xf32, #tpu.memory_space<vmem>>, %arg12: memref<8x128xf32, #tpu.memory_space<vmem>>) attributes {dimension_semantics = [#tpu.dimension_semantics<arbitrary>], iteration_bounds = array<i64: 1>, scalar_prefetch = 0 : i64, scratch_operands = 2 : i64, tpu.core_type = #tpu.core_type<tc>, window_params = [{pipeline_mode = #tpu.pipeline_mode<synchronous>, transform_indices = @transform_0, window_bounds = array<i64: 8, 1>}, {transform_indices = @transform_1, window_bounds = array<i64: 8, 8, 384>}, {transform_indices = @transform_2, window_bounds = array<i64: 8, 8, 384>}, {pipeline_mode = #tpu.pipeline_mode<synchronous>, transform_indices = @transform_3, window_bounds = array<i64: 128, 384>}, {pipeline_mode = #tpu.pipeline_mode<synchronous>, transform_indices = @transform_4, window_bounds = array<i64: 128, 384>}, {pipeline_mode = #tpu.pipeline_mode<synchronous>, transform_indices = @transform_5, window_bounds = array<i64: 1, 128>}, {pipeline_mode = #tpu.pipeline_mode<synchronous>, transform_indices = @transform_6, window_bounds = array<i64: 1, 128>}, {transform_indices = @transform_7, window_bounds = array<i64: 8, 8, 128>}, {transform_indices = @transform_8, window_bounds = array<i64: 8, 8, 128>}, {pipeline_mode = #tpu.pipeline_mode<synchronous>, transform_indices = @transform_9, window_bounds = array<i64: 8, 256>}]} {
    %c0_i32 = arith.constant 0 : i32
    %0 = arith.cmpi eq, %arg0, %c0_i32 : i32
    %1 = arith.extui %0 : i1 to i32
    %c0_i32_0 = arith.constant 0 : i32
    %2 = arith.cmpi ne, %1, %c0_i32_0 : i32
    scf.if %2 {
      %cst_181 = arith.constant 0.000000e+00 : f32
      %788 = vector.broadcast %cst_181 : f32 to vector<8x128xf32>
      %c0_182 = arith.constant 0 : index
      %c0_183 = arith.constant 0 : index
      %789 = vector.load %arg11[%c0_182, %c0_183] : memref<8x128xf32, #tpu.memory_space<vmem>>, vector<8x128xf32>
      tpu.vector_store %arg11[%c0_182, %c0_183], %788 {strides = array<i32>} : memref<8x128xf32, #tpu.memory_space<vmem>>, vector<8x128xf32>,
      %cst_184 = arith.constant 0.000000e+00 : f32
      %790 = vector.broadcast %cst_184 : f32 to vector<8x128xf32>
      %c0_185 = arith.constant 0 : index
      %c0_186 = arith.constant 0 : index
      %791 = vector.load %arg12[%c0_185, %c0_186] : memref<8x128xf32, #tpu.memory_space<vmem>>, vector<8x128xf32>
      tpu.vector_store %arg12[%c0_185, %c0_186], %790 {strides = array<i32>} : memref<8x128xf32, #tpu.memory_space<vmem>>, vector<8x128xf32>,
    } else {
    }
    %c0 = arith.constant 0 : index
    %c0_1 = arith.constant 0 : index
    %3 = vector.load %arg1[%c0, %c0_1] : memref<8x1xi32, #tpu.memory_space<vmem>>, vector<8x1xi32>
    %c0_2 = arith.constant 0 : index
    %c0_3 = arith.constant 0 : index
    %4 = vector.load %arg4[%c0_2, %c0_3] : memref<128x384xbf16, #tpu.memory_space<vmem>>, vector<128x384xbf16>
    %c0_4 = arith.constant 0 : index
    %c0_5 = arith.constant 0 : index
    %5 = vector.load %arg5[%c0_4, %c0_5] : memref<128x384xbf16, #tpu.memory_space<vmem>>, vector<128x384xbf16>
    %c0_6 = arith.constant 0 : index
    %c0_7 = arith.constant 0 : index
    %6 = vector.load %arg6[%c0_6, %c0_7] : memref<1x128xf32, #tpu.memory_space<vmem>>, vector<1x128xf32>
    %7 = vector.shape_cast %6 : vector<1x128xf32> to vector<1x128xf32>
    %8 = vector.broadcast %7 : vector<1x128xf32> to vector<8x128xf32>
    %c0_8 = arith.constant 0 : index
    %c0_9 = arith.constant 0 : index
    %9 = vector.load %arg7[%c0_8, %c0_9] : memref<1x128xf32, #tpu.memory_space<vmem>>, vector<1x128xf32>
    %10 = vector.shape_cast %9 : vector<1x128xf32> to vector<1x128xf32>
    %11 = vector.broadcast %10 : vector<1x128xf32> to vector<8x128xf32>
    %c8_i32 = arith.constant 8 : i32
    %12 = arith.muli %arg0, %c8_i32 : i32
    %c0_10 = arith.constant 0 : index
    %c0_11 = arith.constant 0 : index
    %13 = vector.load %arg11[%c0_10, %c0_11] : memref<8x128xf32, #tpu.memory_space<vmem>>, vector<8x128xf32>
    %c0_12 = arith.constant 0 : index
    %c0_13 = arith.constant 0 : index
    %14 = vector.load %arg12[%c0_12, %c0_13] : memref<8x128xf32, #tpu.memory_space<vmem>>, vector<8x128xf32>
    %c0_i32_14 = arith.constant 0 : i32
    %15 = arith.index_cast %c0_i32_14 : i32 to index
    %c0_15 = arith.constant 0 : index
    %c0_16 = arith.constant 0 : index
    %16 = vector.load %arg2[%15, %c0_15, %c0_16] : memref<8x8x384xbf16, #tpu.memory_space<vmem>>, vector<1x8x384xbf16>
    %17 = vector.shape_cast %16 : vector<1x8x384xbf16> to vector<8x384xbf16>
    %18 = arith.extf %17 : vector<8x384xbf16> to vector<8x384xf32>
    %19 = arith.index_cast %c0_i32_14 : i32 to index
    %c0_17 = arith.constant 0 : index
    %c0_18 = arith.constant 0 : index
    %20 = vector.load %arg3[%19, %c0_17, %c0_18] : memref<8x8x384xbf16, #tpu.memory_space<vmem>>, vector<1x8x384xbf16>
    %21 = vector.shape_cast %20 : vector<1x8x384xbf16> to vector<8x384xbf16>
    %22 = arith.extf %21 : vector<8x384xbf16> to vector<8x384xf32>
    %23 = arith.truncf %13 : vector<8x128xf32> to vector<8x128xbf16>
    %cst = arith.constant dense<0.000000e+00> : vector<8x384xf32>
    %24 = tpu.matmul %23, %4, %cst {dimension_numbers = #tpu.dot_dimension_numbers<[1], [0], [0], [1], [0, 0, 1, 1], [], []>} : vector<8x128xbf16>, vector<128x384xbf16>, vector<8x384xf32> -> vector<8x384xf32>
    %25 = arith.truncf %14 : vector<8x128xf32> to vector<8x128xbf16>
    %cst_19 = arith.constant dense<0.000000e+00> : vector<8x384xf32>
    %26 = tpu.matmul %25, %5, %cst_19 {dimension_numbers = #tpu.dot_dimension_numbers<[1], [0], [0], [1], [0, 0, 1, 1], [], []>} : vector<8x128xbf16>, vector<128x384xbf16>, vector<8x384xf32> -> vector<8x384xf32>
    %27 = vector.extract_strided_slice %18 {offsets = [0, 0], sizes = [8, 128], strides = [1, 1]} : vector<8x384xf32> to vector<8x128xf32>
    %28 = vector.extract_strided_slice %24 {offsets = [0, 0], sizes = [8, 128], strides = [1, 1]} : vector<8x384xf32> to vector<8x128xf32>
    %29 = arith.addf %27, %28 : vector<8x128xf32>
    %30 = arith.negf %29 : vector<8x128xf32>
    %31 = math.exp %30 : vector<8x128xf32>
    %cst_20 = arith.constant 1.000000e+00 : f32
    %32 = vector.broadcast %cst_20 : f32 to vector<8x128xf32>
    %33 = arith.addf %32, %31 : vector<8x128xf32>
    %34 = arith.divf %32, %33 : vector<8x128xf32>
    %35 = vector.extract_strided_slice %18 {offsets = [0, 128], sizes = [8, 128], strides = [1, 1]} : vector<8x384xf32> to vector<8x128xf32>
    %36 = vector.extract_strided_slice %24 {offsets = [0, 128], sizes = [8, 128], strides = [1, 1]} : vector<8x384xf32> to vector<8x128xf32>
    %37 = arith.addf %35, %36 : vector<8x128xf32>
    %38 = arith.negf %37 : vector<8x128xf32>
    %39 = math.exp %38 : vector<8x128xf32>
    %cst_21 = arith.constant 1.000000e+00 : f32
    %40 = vector.broadcast %cst_21 : f32 to vector<8x128xf32>
    %41 = arith.addf %40, %39 : vector<8x128xf32>
    %42 = arith.divf %40, %41 : vector<8x128xf32>
    %43 = vector.extract_strided_slice %18 {offsets = [0, 256], sizes = [8, 128], strides = [1, 1]} : vector<8x384xf32> to vector<8x128xf32>
    %44 = vector.extract_strided_slice %24 {offsets = [0, 256], sizes = [8, 128], strides = [1, 1]} : vector<8x384xf32> to vector<8x128xf32>
    %45 = arith.addf %44, %8 : vector<8x128xf32>
    %46 = arith.mulf %34, %45 : vector<8x128xf32>
    %47 = arith.addf %43, %46 : vector<8x128xf32>
    %48 = math.tanh %47 : vector<8x128xf32>
    %cst_22 = arith.constant 1.000000e+00 : f32
    %49 = vector.broadcast %cst_22 : f32 to vector<8x128xf32>
    %50 = arith.subf %49, %42 : vector<8x128xf32>
    %51 = arith.mulf %50, %48 : vector<8x128xf32>
    %52 = arith.mulf %42, %13 : vector<8x128xf32>
    %53 = arith.addf %51, %52 : vector<8x128xf32>
    %54 = vector.extract_strided_slice %22 {offsets = [0, 0], sizes = [8, 128], strides = [1, 1]} : vector<8x384xf32> to vector<8x128xf32>
    %55 = vector.extract_strided_slice %26 {offsets = [0, 0], sizes = [8, 128], strides = [1, 1]} : vector<8x384xf32> to vector<8x128xf32>
    %56 = arith.addf %54, %55 : vector<8x128xf32>
    %57 = arith.negf %56 : vector<8x128xf32>
    %58 = math.exp %57 : vector<8x128xf32>
    %cst_23 = arith.constant 1.000000e+00 : f32
    %59 = vector.broadcast %cst_23 : f32 to vector<8x128xf32>
    %60 = arith.addf %59, %58 : vector<8x128xf32>
    %61 = arith.divf %59, %60 : vector<8x128xf32>
    %62 = vector.extract_strided_slice %22 {offsets = [0, 128], sizes = [8, 128], strides = [1, 1]} : vector<8x384xf32> to vector<8x128xf32>
    %63 = vector.extract_strided_slice %26 {offsets = [0, 128], sizes = [8, 128], strides = [1, 1]} : vector<8x384xf32> to vector<8x128xf32>
    %64 = arith.addf %62, %63 : vector<8x128xf32>
    %65 = arith.negf %64 : vector<8x128xf32>
    %66 = math.exp %65 : vector<8x128xf32>
    %cst_24 = arith.constant 1.000000e+00 : f32
    %67 = vector.broadcast %cst_24 : f32 to vector<8x128xf32>
    %68 = arith.addf %67, %66 : vector<8x128xf32>
    %69 = arith.divf %67, %68 : vector<8x128xf32>
    %70 = vector.extract_strided_slice %22 {offsets = [0, 256], sizes = [8, 128], strides = [1, 1]} : vector<8x384xf32> to vector<8x128xf32>
    %71 = vector.extract_strided_slice %26 {offsets = [0, 256], sizes = [8, 128], strides = [1, 1]} : vector<8x384xf32> to vector<8x128xf32>
    %72 = arith.addf %71, %11 : vector<8x128xf32>
    %73 = arith.mulf %61, %72 : vector<8x128xf32>
    %74 = arith.addf %70, %73 : vector<8x128xf32>
    %75 = math.tanh %74 : vector<8x128xf32>
    %cst_25 = arith.constant 1.000000e+00 : f32
    %76 = vector.broadcast %cst_25 : f32 to vector<8x128xf32>
    %77 = arith.subf %76, %69 : vector<8x128xf32>
    %78 = arith.mulf %77, %75 : vector<8x128xf32>
    %79 = arith.mulf %69, %14 : vector<8x128xf32>
    %80 = arith.addf %78, %79 : vector<8x128xf32>
    %81 = arith.addi %12, %c0_i32_14 : i32
    %82 = vector.broadcast %81 : i32 to vector<8x1xi32>
    %83 = arith.cmpi slt, %82, %3 : vector<8x1xi32>
    %c7_i32 = arith.constant 7 : i32
    %84 = arith.subi %c7_i32, %12 : i32
    %85 = arith.subi %84, %c0_i32_14 : i32
    %86 = vector.broadcast %85 : i32 to vector<8x1xi32>
    %87 = arith.cmpi slt, %86, %3 : vector<8x1xi32>
    %cst_26 = arith.constant 0.000000e+00 : f32
    %88 = vector.shape_cast %83 : vector<8x1xi1> to vector<8x1xi1>
    %89 = vector.broadcast %88 : vector<8x1xi1> to vector<8x128xi1>
    %90 = vector.broadcast %cst_26 : f32 to vector<8x128xf32>
    %91 = arith.select %89, %53, %90 : vector<8x128xi1>, vector<8x128xf32>
    %92 = arith.index_cast %c0_i32_14 : i32 to index
    %c0_27 = arith.constant 0 : index
    %c0_28 = arith.constant 0 : index
    %93 = vector.load %arg8[%92, %c0_27, %c0_28] : memref<8x8x128xf32, #tpu.memory_space<vmem>>, vector<1x8x128xf32>
    %94 = vector.shape_cast %93 : vector<1x8x128xf32> to vector<8x128xf32>
    %95 = vector.shape_cast %91 : vector<8x128xf32> to vector<1x8x128xf32>
    tpu.vector_store %arg8[%92, %c0_27, %c0_28], %95 {strides = array<i32>} : memref<8x8x128xf32, #tpu.memory_space<vmem>>, vector<1x8x128xf32>,
    %cst_29 = arith.constant 0.000000e+00 : f32
    %96 = vector.shape_cast %87 : vector<8x1xi1> to vector<8x1xi1>
    %97 = vector.broadcast %96 : vector<8x1xi1> to vector<8x128xi1>
    %98 = vector.broadcast %cst_29 : f32 to vector<8x128xf32>
    %99 = arith.select %97, %80, %98 : vector<8x128xi1>, vector<8x128xf32>
    %c7_i32_30 = arith.constant 7 : i32
    %100 = arith.subi %c7_i32_30, %c0_i32_14 : i32
    %101 = arith.index_cast %100 : i32 to index
    %c0_31 = arith.constant 0 : index
    %c0_32 = arith.constant 0 : index
    %102 = vector.load %arg9[%101, %c0_31, %c0_32] : memref<8x8x128xf32, #tpu.memory_space<vmem>>, vector<1x8x128xf32>
    %103 = vector.shape_cast %102 : vector<1x8x128xf32> to vector<8x128xf32>
    %104 = vector.shape_cast %99 : vector<8x128xf32> to vector<1x8x128xf32>
    tpu.vector_store %arg9[%101, %c0_31, %c0_32], %104 {strides = array<i32>} : memref<8x8x128xf32, #tpu.memory_space<vmem>>, vector<1x8x128xf32>,
    %105 = vector.shape_cast %83 : vector<8x1xi1> to vector<8x1xi1>
    %106 = vector.broadcast %105 : vector<8x1xi1> to vector<8x128xi1>
    %107 = arith.select %106, %53, %13 : vector<8x128xi1>, vector<8x128xf32>
    %108 = vector.shape_cast %87 : vector<8x1xi1> to vector<8x1xi1>
    %109 = vector.broadcast %108 : vector<8x1xi1> to vector<8x128xi1>
    %110 = arith.select %109, %80, %14 : vector<8x128xi1>, vector<8x128xf32>
    %c1_i32 = arith.constant 1 : i32
    %111 = arith.index_cast %c1_i32 : i32 to index
    %c0_33 = arith.constant 0 : index
    %c0_34 = arith.constant 0 : index
    %112 = vector.load %arg2[%111, %c0_33, %c0_34] : memref<8x8x384xbf16, #tpu.memory_space<vmem>>, vector<1x8x384xbf16>
    %113 = vector.shape_cast %112 : vector<1x8x384xbf16> to vector<8x384xbf16>
    %114 = arith.extf %113 : vector<8x384xbf16> to vector<8x384xf32>
    %115 = arith.index_cast %c1_i32 : i32 to index
    %c0_35 = arith.constant 0 : index
    %c0_36 = arith.constant 0 : index
    %116 = vector.load %arg3[%115, %c0_35, %c0_36] : memref<8x8x384xbf16, #tpu.memory_space<vmem>>, vector<1x8x384xbf16>
    %117 = vector.shape_cast %116 : vector<1x8x384xbf16> to vector<8x384xbf16>
    %118 = arith.extf %117 : vector<8x384xbf16> to vector<8x384xf32>
    %119 = arith.truncf %107 : vector<8x128xf32> to vector<8x128xbf16>
    %cst_37 = arith.constant dense<0.000000e+00> : vector<8x384xf32>
    %120 = tpu.matmul %119, %4, %cst_37 {dimension_numbers = #tpu.dot_dimension_numbers<[1], [0], [0], [1], [0, 0, 1, 1], [], []>} : vector<8x128xbf16>, vector<128x384xbf16>, vector<8x384xf32> -> vector<8x384xf32>
    %121 = arith.truncf %110 : vector<8x128xf32> to vector<8x128xbf16>
    %cst_38 = arith.constant dense<0.000000e+00> : vector<8x384xf32>
    %122 = tpu.matmul %121, %5, %cst_38 {dimension_numbers = #tpu.dot_dimension_numbers<[1], [0], [0], [1], [0, 0, 1, 1], [], []>} : vector<8x128xbf16>, vector<128x384xbf16>, vector<8x384xf32> -> vector<8x384xf32>
    %123 = vector.extract_strided_slice %114 {offsets = [0, 0], sizes = [8, 128], strides = [1, 1]} : vector<8x384xf32> to vector<8x128xf32>
    %124 = vector.extract_strided_slice %120 {offsets = [0, 0], sizes = [8, 128], strides = [1, 1]} : vector<8x384xf32> to vector<8x128xf32>
    %125 = arith.addf %123, %124 : vector<8x128xf32>
    %126 = arith.negf %125 : vector<8x128xf32>
    %127 = math.exp %126 : vector<8x128xf32>
    %cst_39 = arith.constant 1.000000e+00 : f32
    %128 = vector.broadcast %cst_39 : f32 to vector<8x128xf32>
    %129 = arith.addf %128, %127 : vector<8x128xf32>
    %130 = arith.divf %128, %129 : vector<8x128xf32>
    %131 = vector.extract_strided_slice %114 {offsets = [0, 128], sizes = [8, 128], strides = [1, 1]} : vector<8x384xf32> to vector<8x128xf32>
    %132 = vector.extract_strided_slice %120 {offsets = [0, 128], sizes = [8, 128], strides = [1, 1]} : vector<8x384xf32> to vector<8x128xf32>
    %133 = arith.addf %131, %132 : vector<8x128xf32>
    %134 = arith.negf %133 : vector<8x128xf32>
    %135 = math.exp %134 : vector<8x128xf32>
    %cst_40 = arith.constant 1.000000e+00 : f32
    %136 = vector.broadcast %cst_40 : f32 to vector<8x128xf32>
    %137 = arith.addf %136, %135 : vector<8x128xf32>
    %138 = arith.divf %136, %137 : vector<8x128xf32>
    %139 = vector.extract_strided_slice %114 {offsets = [0, 256], sizes = [8, 128], strides = [1, 1]} : vector<8x384xf32> to vector<8x128xf32>
    %140 = vector.extract_strided_slice %120 {offsets = [0, 256], sizes = [8, 128], strides = [1, 1]} : vector<8x384xf32> to vector<8x128xf32>
    %141 = arith.addf %140, %8 : vector<8x128xf32>
    %142 = arith.mulf %130, %141 : vector<8x128xf32>
    %143 = arith.addf %139, %142 : vector<8x128xf32>
    %144 = math.tanh %143 : vector<8x128xf32>
    %cst_41 = arith.constant 1.000000e+00 : f32
    %145 = vector.broadcast %cst_41 : f32 to vector<8x128xf32>
    %146 = arith.subf %145, %138 : vector<8x128xf32>
    %147 = arith.mulf %146, %144 : vector<8x128xf32>
    %148 = arith.mulf %138, %107 : vector<8x128xf32>
    %149 = arith.addf %147, %148 : vector<8x128xf32>
    %150 = vector.extract_strided_slice %118 {offsets = [0, 0], sizes = [8, 128], strides = [1, 1]} : vector<8x384xf32> to vector<8x128xf32>
    %151 = vector.extract_strided_slice %122 {offsets = [0, 0], sizes = [8, 128], strides = [1, 1]} : vector<8x384xf32> to vector<8x128xf32>
    %152 = arith.addf %150, %151 : vector<8x128xf32>
    %153 = arith.negf %152 : vector<8x128xf32>
    %154 = math.exp %153 : vector<8x128xf32>
    %cst_42 = arith.constant 1.000000e+00 : f32
    %155 = vector.broadcast %cst_42 : f32 to vector<8x128xf32>
    %156 = arith.addf %155, %154 : vector<8x128xf32>
    %157 = arith.divf %155, %156 : vector<8x128xf32>
    %158 = vector.extract_strided_slice %118 {offsets = [0, 128], sizes = [8, 128], strides = [1, 1]} : vector<8x384xf32> to vector<8x128xf32>
    %159 = vector.extract_strided_slice %122 {offsets = [0, 128], sizes = [8, 128], strides = [1, 1]} : vector<8x384xf32> to vector<8x128xf32>
    %160 = arith.addf %158, %159 : vector<8x128xf32>
    %161 = arith.negf %160 : vector<8x128xf32>
    %162 = math.exp %161 : vector<8x128xf32>
    %cst_43 = arith.constant 1.000000e+00 : f32
    %163 = vector.broadcast %cst_43 : f32 to vector<8x128xf32>
    %164 = arith.addf %163, %162 : vector<8x128xf32>
    %165 = arith.divf %163, %164 : vector<8x128xf32>
    %166 = vector.extract_strided_slice %118 {offsets = [0, 256], sizes = [8, 128], strides = [1, 1]} : vector<8x384xf32> to vector<8x128xf32>
    %167 = vector.extract_strided_slice %122 {offsets = [0, 256], sizes = [8, 128], strides = [1, 1]} : vector<8x384xf32> to vector<8x128xf32>
    %168 = arith.addf %167, %11 : vector<8x128xf32>
    %169 = arith.mulf %157, %168 : vector<8x128xf32>
    %170 = arith.addf %166, %169 : vector<8x128xf32>
    %171 = math.tanh %170 : vector<8x128xf32>
    %cst_44 = arith.constant 1.000000e+00 : f32
    %172 = vector.broadcast %cst_44 : f32 to vector<8x128xf32>
    %173 = arith.subf %172, %165 : vector<8x128xf32>
    %174 = arith.mulf %173, %171 : vector<8x128xf32>
    %175 = arith.mulf %165, %110 : vector<8x128xf32>
    %176 = arith.addf %174, %175 : vector<8x128xf32>
    %177 = arith.addi %12, %c1_i32 : i32
    %178 = vector.broadcast %177 : i32 to vector<8x1xi32>
    %179 = arith.cmpi slt, %178, %3 : vector<8x1xi32>
    %c7_i32_45 = arith.constant 7 : i32
    %180 = arith.subi %c7_i32_45, %12 : i32
    %181 = arith.subi %180, %c1_i32 : i32
    %182 = vector.broadcast %181 : i32 to vector<8x1xi32>
    %183 = arith.cmpi slt, %182, %3 : vector<8x1xi32>
    %cst_46 = arith.constant 0.000000e+00 : f32
    %184 = vector.shape_cast %179 : vector<8x1xi1> to vector<8x1xi1>
    %185 = vector.broadcast %184 : vector<8x1xi1> to vector<8x128xi1>
    %186 = vector.broadcast %cst_46 : f32 to vector<8x128xf32>
    %187 = arith.select %185, %149, %186 : vector<8x128xi1>, vector<8x128xf32>
    %188 = arith.index_cast %c1_i32 : i32 to index
    %c0_47 = arith.constant 0 : index
    %c0_48 = arith.constant 0 : index
    %189 = vector.load %arg8[%188, %c0_47, %c0_48] : memref<8x8x128xf32, #tpu.memory_space<vmem>>, vector<1x8x128xf32>
    %190 = vector.shape_cast %189 : vector<1x8x128xf32> to vector<8x128xf32>
    %191 = vector.shape_cast %187 : vector<8x128xf32> to vector<1x8x128xf32>
    tpu.vector_store %arg8[%188, %c0_47, %c0_48], %191 {strides = array<i32>} : memref<8x8x128xf32, #tpu.memory_space<vmem>>, vector<1x8x128xf32>,
    %cst_49 = arith.constant 0.000000e+00 : f32
    %192 = vector.shape_cast %183 : vector<8x1xi1> to vector<8x1xi1>
    %193 = vector.broadcast %192 : vector<8x1xi1> to vector<8x128xi1>
    %194 = vector.broadcast %cst_49 : f32 to vector<8x128xf32>
    %195 = arith.select %193, %176, %194 : vector<8x128xi1>, vector<8x128xf32>
    %c7_i32_50 = arith.constant 7 : i32
    %196 = arith.subi %c7_i32_50, %c1_i32 : i32
    %197 = arith.index_cast %196 : i32 to index
    %c0_51 = arith.constant 0 : index
    %c0_52 = arith.constant 0 : index
    %198 = vector.load %arg9[%197, %c0_51, %c0_52] : memref<8x8x128xf32, #tpu.memory_space<vmem>>, vector<1x8x128xf32>
    %199 = vector.shape_cast %198 : vector<1x8x128xf32> to vector<8x128xf32>
    %200 = vector.shape_cast %195 : vector<8x128xf32> to vector<1x8x128xf32>
    tpu.vector_store %arg9[%197, %c0_51, %c0_52], %200 {strides = array<i32>} : memref<8x8x128xf32, #tpu.memory_space<vmem>>, vector<1x8x128xf32>,
    %201 = vector.shape_cast %179 : vector<8x1xi1> to vector<8x1xi1>
    %202 = vector.broadcast %201 : vector<8x1xi1> to vector<8x128xi1>
    %203 = arith.select %202, %149, %107 : vector<8x128xi1>, vector<8x128xf32>
    %204 = vector.shape_cast %183 : vector<8x1xi1> to vector<8x1xi1>
    %205 = vector.broadcast %204 : vector<8x1xi1> to vector<8x128xi1>
    %206 = arith.select %205, %176, %110 : vector<8x128xi1>, vector<8x128xf32>
    %c2_i32 = arith.constant 2 : i32
    %207 = arith.index_cast %c2_i32 : i32 to index
    %c0_53 = arith.constant 0 : index
    %c0_54 = arith.constant 0 : index
    %208 = vector.load %arg2[%207, %c0_53, %c0_54] : memref<8x8x384xbf16, #tpu.memory_space<vmem>>, vector<1x8x384xbf16>
    %209 = vector.shape_cast %208 : vector<1x8x384xbf16> to vector<8x384xbf16>
    %210 = arith.extf %209 : vector<8x384xbf16> to vector<8x384xf32>
    %211 = arith.index_cast %c2_i32 : i32 to index
    %c0_55 = arith.constant 0 : index
    %c0_56 = arith.constant 0 : index
    %212 = vector.load %arg3[%211, %c0_55, %c0_56] : memref<8x8x384xbf16, #tpu.memory_space<vmem>>, vector<1x8x384xbf16>
    %213 = vector.shape_cast %212 : vector<1x8x384xbf16> to vector<8x384xbf16>
    %214 = arith.extf %213 : vector<8x384xbf16> to vector<8x384xf32>
    %215 = arith.truncf %203 : vector<8x128xf32> to vector<8x128xbf16>
    %cst_57 = arith.constant dense<0.000000e+00> : vector<8x384xf32>
    %216 = tpu.matmul %215, %4, %cst_57 {dimension_numbers = #tpu.dot_dimension_numbers<[1], [0], [0], [1], [0, 0, 1, 1], [], []>} : vector<8x128xbf16>, vector<128x384xbf16>, vector<8x384xf32> -> vector<8x384xf32>
    %217 = arith.truncf %206 : vector<8x128xf32> to vector<8x128xbf16>
    %cst_58 = arith.constant dense<0.000000e+00> : vector<8x384xf32>
    %218 = tpu.matmul %217, %5, %cst_58 {dimension_numbers = #tpu.dot_dimension_numbers<[1], [0], [0], [1], [0, 0, 1, 1], [], []>} : vector<8x128xbf16>, vector<128x384xbf16>, vector<8x384xf32> -> vector<8x384xf32>
    %219 = vector.extract_strided_slice %210 {offsets = [0, 0], sizes = [8, 128], strides = [1, 1]} : vector<8x384xf32> to vector<8x128xf32>
    %220 = vector.extract_strided_slice %216 {offsets = [0, 0], sizes = [8, 128], strides = [1, 1]} : vector<8x384xf32> to vector<8x128xf32>
    %221 = arith.addf %219, %220 : vector<8x128xf32>
    %222 = arith.negf %221 : vector<8x128xf32>
    %223 = math.exp %222 : vector<8x128xf32>
    %cst_59 = arith.constant 1.000000e+00 : f32
    %224 = vector.broadcast %cst_59 : f32 to vector<8x128xf32>
    %225 = arith.addf %224, %223 : vector<8x128xf32>
    %226 = arith.divf %224, %225 : vector<8x128xf32>
    %227 = vector.extract_strided_slice %210 {offsets = [0, 128], sizes = [8, 128], strides = [1, 1]} : vector<8x384xf32> to vector<8x128xf32>
    %228 = vector.extract_strided_slice %216 {offsets = [0, 128], sizes = [8, 128], strides = [1, 1]} : vector<8x384xf32> to vector<8x128xf32>
    %229 = arith.addf %227, %228 : vector<8x128xf32>
    %230 = arith.negf %229 : vector<8x128xf32>
    %231 = math.exp %230 : vector<8x128xf32>
    %cst_60 = arith.constant 1.000000e+00 : f32
    %232 = vector.broadcast %cst_60 : f32 to vector<8x128xf32>
    %233 = arith.addf %232, %231 : vector<8x128xf32>
    %234 = arith.divf %232, %233 : vector<8x128xf32>
    %235 = vector.extract_strided_slice %210 {offsets = [0, 256], sizes = [8, 128], strides = [1, 1]} : vector<8x384xf32> to vector<8x128xf32>
    %236 = vector.extract_strided_slice %216 {offsets = [0, 256], sizes = [8, 128], strides = [1, 1]} : vector<8x384xf32> to vector<8x128xf32>
    %237 = arith.addf %236, %8 : vector<8x128xf32>
    %238 = arith.mulf %226, %237 : vector<8x128xf32>
    %239 = arith.addf %235, %238 : vector<8x128xf32>
    %240 = math.tanh %239 : vector<8x128xf32>
    %cst_61 = arith.constant 1.000000e+00 : f32
    %241 = vector.broadcast %cst_61 : f32 to vector<8x128xf32>
    %242 = arith.subf %241, %234 : vector<8x128xf32>
    %243 = arith.mulf %242, %240 : vector<8x128xf32>
    %244 = arith.mulf %234, %203 : vector<8x128xf32>
    %245 = arith.addf %243, %244 : vector<8x128xf32>
    %246 = vector.extract_strided_slice %214 {offsets = [0, 0], sizes = [8, 128], strides = [1, 1]} : vector<8x384xf32> to vector<8x128xf32>
    %247 = vector.extract_strided_slice %218 {offsets = [0, 0], sizes = [8, 128], strides = [1, 1]} : vector<8x384xf32> to vector<8x128xf32>
    %248 = arith.addf %246, %247 : vector<8x128xf32>
    %249 = arith.negf %248 : vector<8x128xf32>
    %250 = math.exp %249 : vector<8x128xf32>
    %cst_62 = arith.constant 1.000000e+00 : f32
    %251 = vector.broadcast %cst_62 : f32 to vector<8x128xf32>
    %252 = arith.addf %251, %250 : vector<8x128xf32>
    %253 = arith.divf %251, %252 : vector<8x128xf32>
    %254 = vector.extract_strided_slice %214 {offsets = [0, 128], sizes = [8, 128], strides = [1, 1]} : vector<8x384xf32> to vector<8x128xf32>
    %255 = vector.extract_strided_slice %218 {offsets = [0, 128], sizes = [8, 128], strides = [1, 1]} : vector<8x384xf32> to vector<8x128xf32>
    %256 = arith.addf %254, %255 : vector<8x128xf32>
    %257 = arith.negf %256 : vector<8x128xf32>
    %258 = math.exp %257 : vector<8x128xf32>
    %cst_63 = arith.constant 1.000000e+00 : f32
    %259 = vector.broadcast %cst_63 : f32 to vector<8x128xf32>
    %260 = arith.addf %259, %258 : vector<8x128xf32>
    %261 = arith.divf %259, %260 : vector<8x128xf32>
    %262 = vector.extract_strided_slice %214 {offsets = [0, 256], sizes = [8, 128], strides = [1, 1]} : vector<8x384xf32> to vector<8x128xf32>
    %263 = vector.extract_strided_slice %218 {offsets = [0, 256], sizes = [8, 128], strides = [1, 1]} : vector<8x384xf32> to vector<8x128xf32>
    %264 = arith.addf %263, %11 : vector<8x128xf32>
    %265 = arith.mulf %253, %264 : vector<8x128xf32>
    %266 = arith.addf %262, %265 : vector<8x128xf32>
    %267 = math.tanh %266 : vector<8x128xf32>
    %cst_64 = arith.constant 1.000000e+00 : f32
    %268 = vector.broadcast %cst_64 : f32 to vector<8x128xf32>
    %269 = arith.subf %268, %261 : vector<8x128xf32>
    %270 = arith.mulf %269, %267 : vector<8x128xf32>
    %271 = arith.mulf %261, %206 : vector<8x128xf32>
    %272 = arith.addf %270, %271 : vector<8x128xf32>
    %273 = arith.addi %12, %c2_i32 : i32
    %274 = vector.broadcast %273 : i32 to vector<8x1xi32>
    %275 = arith.cmpi slt, %274, %3 : vector<8x1xi32>
    %c7_i32_65 = arith.constant 7 : i32
    %276 = arith.subi %c7_i32_65, %12 : i32
    %277 = arith.subi %276, %c2_i32 : i32
    %278 = vector.broadcast %277 : i32 to vector<8x1xi32>
    %279 = arith.cmpi slt, %278, %3 : vector<8x1xi32>
    %cst_66 = arith.constant 0.000000e+00 : f32
    %280 = vector.shape_cast %275 : vector<8x1xi1> to vector<8x1xi1>
    %281 = vector.broadcast %280 : vector<8x1xi1> to vector<8x128xi1>
    %282 = vector.broadcast %cst_66 : f32 to vector<8x128xf32>
    %283 = arith.select %281, %245, %282 : vector<8x128xi1>, vector<8x128xf32>
    %284 = arith.index_cast %c2_i32 : i32 to index
    %c0_67 = arith.constant 0 : index
    %c0_68 = arith.constant 0 : index
    %285 = vector.load %arg8[%284, %c0_67, %c0_68] : memref<8x8x128xf32, #tpu.memory_space<vmem>>, vector<1x8x128xf32>
    %286 = vector.shape_cast %285 : vector<1x8x128xf32> to vector<8x128xf32>
    %287 = vector.shape_cast %283 : vector<8x128xf32> to vector<1x8x128xf32>
    tpu.vector_store %arg8[%284, %c0_67, %c0_68], %287 {strides = array<i32>} : memref<8x8x128xf32, #tpu.memory_space<vmem>>, vector<1x8x128xf32>,
    %cst_69 = arith.constant 0.000000e+00 : f32
    %288 = vector.shape_cast %279 : vector<8x1xi1> to vector<8x1xi1>
    %289 = vector.broadcast %288 : vector<8x1xi1> to vector<8x128xi1>
    %290 = vector.broadcast %cst_69 : f32 to vector<8x128xf32>
    %291 = arith.select %289, %272, %290 : vector<8x128xi1>, vector<8x128xf32>
    %c7_i32_70 = arith.constant 7 : i32
    %292 = arith.subi %c7_i32_70, %c2_i32 : i32
    %293 = arith.index_cast %292 : i32 to index
    %c0_71 = arith.constant 0 : index
    %c0_72 = arith.constant 0 : index
    %294 = vector.load %arg9[%293, %c0_71, %c0_72] : memref<8x8x128xf32, #tpu.memory_space<vmem>>, vector<1x8x128xf32>
    %295 = vector.shape_cast %294 : vector<1x8x128xf32> to vector<8x128xf32>
    %296 = vector.shape_cast %291 : vector<8x128xf32> to vector<1x8x128xf32>
    tpu.vector_store %arg9[%293, %c0_71, %c0_72], %296 {strides = array<i32>} : memref<8x8x128xf32, #tpu.memory_space<vmem>>, vector<1x8x128xf32>,
    %297 = vector.shape_cast %275 : vector<8x1xi1> to vector<8x1xi1>
    %298 = vector.broadcast %297 : vector<8x1xi1> to vector<8x128xi1>
    %299 = arith.select %298, %245, %203 : vector<8x128xi1>, vector<8x128xf32>
    %300 = vector.shape_cast %279 : vector<8x1xi1> to vector<8x1xi1>
    %301 = vector.broadcast %300 : vector<8x1xi1> to vector<8x128xi1>
    %302 = arith.select %301, %272, %206 : vector<8x128xi1>, vector<8x128xf32>
    %c3_i32 = arith.constant 3 : i32
    %303 = arith.index_cast %c3_i32 : i32 to index
    %c0_73 = arith.constant 0 : index
    %c0_74 = arith.constant 0 : index
    %304 = vector.load %arg2[%303, %c0_73, %c0_74] : memref<8x8x384xbf16, #tpu.memory_space<vmem>>, vector<1x8x384xbf16>
    %305 = vector.shape_cast %304 : vector<1x8x384xbf16> to vector<8x384xbf16>
    %306 = arith.extf %305 : vector<8x384xbf16> to vector<8x384xf32>
    %307 = arith.index_cast %c3_i32 : i32 to index
    %c0_75 = arith.constant 0 : index
    %c0_76 = arith.constant 0 : index
    %308 = vector.load %arg3[%307, %c0_75, %c0_76] : memref<8x8x384xbf16, #tpu.memory_space<vmem>>, vector<1x8x384xbf16>
    %309 = vector.shape_cast %308 : vector<1x8x384xbf16> to vector<8x384xbf16>
    %310 = arith.extf %309 : vector<8x384xbf16> to vector<8x384xf32>
    %311 = arith.truncf %299 : vector<8x128xf32> to vector<8x128xbf16>
    %cst_77 = arith.constant dense<0.000000e+00> : vector<8x384xf32>
    %312 = tpu.matmul %311, %4, %cst_77 {dimension_numbers = #tpu.dot_dimension_numbers<[1], [0], [0], [1], [0, 0, 1, 1], [], []>} : vector<8x128xbf16>, vector<128x384xbf16>, vector<8x384xf32> -> vector<8x384xf32>
    %313 = arith.truncf %302 : vector<8x128xf32> to vector<8x128xbf16>
    %cst_78 = arith.constant dense<0.000000e+00> : vector<8x384xf32>
    %314 = tpu.matmul %313, %5, %cst_78 {dimension_numbers = #tpu.dot_dimension_numbers<[1], [0], [0], [1], [0, 0, 1, 1], [], []>} : vector<8x128xbf16>, vector<128x384xbf16>, vector<8x384xf32> -> vector<8x384xf32>
    %315 = vector.extract_strided_slice %306 {offsets = [0, 0], sizes = [8, 128], strides = [1, 1]} : vector<8x384xf32> to vector<8x128xf32>
    %316 = vector.extract_strided_slice %312 {offsets = [0, 0], sizes = [8, 128], strides = [1, 1]} : vector<8x384xf32> to vector<8x128xf32>
    %317 = arith.addf %315, %316 : vector<8x128xf32>
    %318 = arith.negf %317 : vector<8x128xf32>
    %319 = math.exp %318 : vector<8x128xf32>
    %cst_79 = arith.constant 1.000000e+00 : f32
    %320 = vector.broadcast %cst_79 : f32 to vector<8x128xf32>
    %321 = arith.addf %320, %319 : vector<8x128xf32>
    %322 = arith.divf %320, %321 : vector<8x128xf32>
    %323 = vector.extract_strided_slice %306 {offsets = [0, 128], sizes = [8, 128], strides = [1, 1]} : vector<8x384xf32> to vector<8x128xf32>
    %324 = vector.extract_strided_slice %312 {offsets = [0, 128], sizes = [8, 128], strides = [1, 1]} : vector<8x384xf32> to vector<8x128xf32>
    %325 = arith.addf %323, %324 : vector<8x128xf32>
    %326 = arith.negf %325 : vector<8x128xf32>
    %327 = math.exp %326 : vector<8x128xf32>
    %cst_80 = arith.constant 1.000000e+00 : f32
    %328 = vector.broadcast %cst_80 : f32 to vector<8x128xf32>
    %329 = arith.addf %328, %327 : vector<8x128xf32>
    %330 = arith.divf %328, %329 : vector<8x128xf32>
    %331 = vector.extract_strided_slice %306 {offsets = [0, 256], sizes = [8, 128], strides = [1, 1]} : vector<8x384xf32> to vector<8x128xf32>
    %332 = vector.extract_strided_slice %312 {offsets = [0, 256], sizes = [8, 128], strides = [1, 1]} : vector<8x384xf32> to vector<8x128xf32>
    %333 = arith.addf %332, %8 : vector<8x128xf32>
    %334 = arith.mulf %322, %333 : vector<8x128xf32>
    %335 = arith.addf %331, %334 : vector<8x128xf32>
    %336 = math.tanh %335 : vector<8x128xf32>
    %cst_81 = arith.constant 1.000000e+00 : f32
    %337 = vector.broadcast %cst_81 : f32 to vector<8x128xf32>
    %338 = arith.subf %337, %330 : vector<8x128xf32>
    %339 = arith.mulf %338, %336 : vector<8x128xf32>
    %340 = arith.mulf %330, %299 : vector<8x128xf32>
    %341 = arith.addf %339, %340 : vector<8x128xf32>
    %342 = vector.extract_strided_slice %310 {offsets = [0, 0], sizes = [8, 128], strides = [1, 1]} : vector<8x384xf32> to vector<8x128xf32>
    %343 = vector.extract_strided_slice %314 {offsets = [0, 0], sizes = [8, 128], strides = [1, 1]} : vector<8x384xf32> to vector<8x128xf32>
    %344 = arith.addf %342, %343 : vector<8x128xf32>
    %345 = arith.negf %344 : vector<8x128xf32>
    %346 = math.exp %345 : vector<8x128xf32>
    %cst_82 = arith.constant 1.000000e+00 : f32
    %347 = vector.broadcast %cst_82 : f32 to vector<8x128xf32>
    %348 = arith.addf %347, %346 : vector<8x128xf32>
    %349 = arith.divf %347, %348 : vector<8x128xf32>
    %350 = vector.extract_strided_slice %310 {offsets = [0, 128], sizes = [8, 128], strides = [1, 1]} : vector<8x384xf32> to vector<8x128xf32>
    %351 = vector.extract_strided_slice %314 {offsets = [0, 128], sizes = [8, 128], strides = [1, 1]} : vector<8x384xf32> to vector<8x128xf32>
    %352 = arith.addf %350, %351 : vector<8x128xf32>
    %353 = arith.negf %352 : vector<8x128xf32>
    %354 = math.exp %353 : vector<8x128xf32>
    %cst_83 = arith.constant 1.000000e+00 : f32
    %355 = vector.broadcast %cst_83 : f32 to vector<8x128xf32>
    %356 = arith.addf %355, %354 : vector<8x128xf32>
    %357 = arith.divf %355, %356 : vector<8x128xf32>
    %358 = vector.extract_strided_slice %310 {offsets = [0, 256], sizes = [8, 128], strides = [1, 1]} : vector<8x384xf32> to vector<8x128xf32>
    %359 = vector.extract_strided_slice %314 {offsets = [0, 256], sizes = [8, 128], strides = [1, 1]} : vector<8x384xf32> to vector<8x128xf32>
    %360 = arith.addf %359, %11 : vector<8x128xf32>
    %361 = arith.mulf %349, %360 : vector<8x128xf32>
    %362 = arith.addf %358, %361 : vector<8x128xf32>
    %363 = math.tanh %362 : vector<8x128xf32>
    %cst_84 = arith.constant 1.000000e+00 : f32
    %364 = vector.broadcast %cst_84 : f32 to vector<8x128xf32>
    %365 = arith.subf %364, %357 : vector<8x128xf32>
    %366 = arith.mulf %365, %363 : vector<8x128xf32>
    %367 = arith.mulf %357, %302 : vector<8x128xf32>
    %368 = arith.addf %366, %367 : vector<8x128xf32>
    %369 = arith.addi %12, %c3_i32 : i32
    %370 = vector.broadcast %369 : i32 to vector<8x1xi32>
    %371 = arith.cmpi slt, %370, %3 : vector<8x1xi32>
    %c7_i32_85 = arith.constant 7 : i32
    %372 = arith.subi %c7_i32_85, %12 : i32
    %373 = arith.subi %372, %c3_i32 : i32
    %374 = vector.broadcast %373 : i32 to vector<8x1xi32>
    %375 = arith.cmpi slt, %374, %3 : vector<8x1xi32>
    %cst_86 = arith.constant 0.000000e+00 : f32
    %376 = vector.shape_cast %371 : vector<8x1xi1> to vector<8x1xi1>
    %377 = vector.broadcast %376 : vector<8x1xi1> to vector<8x128xi1>
    %378 = vector.broadcast %cst_86 : f32 to vector<8x128xf32>
    %379 = arith.select %377, %341, %378 : vector<8x128xi1>, vector<8x128xf32>
    %380 = arith.index_cast %c3_i32 : i32 to index
    %c0_87 = arith.constant 0 : index
    %c0_88 = arith.constant 0 : index
    %381 = vector.load %arg8[%380, %c0_87, %c0_88] : memref<8x8x128xf32, #tpu.memory_space<vmem>>, vector<1x8x128xf32>
    %382 = vector.shape_cast %381 : vector<1x8x128xf32> to vector<8x128xf32>
    %383 = vector.shape_cast %379 : vector<8x128xf32> to vector<1x8x128xf32>
    tpu.vector_store %arg8[%380, %c0_87, %c0_88], %383 {strides = array<i32>} : memref<8x8x128xf32, #tpu.memory_space<vmem>>, vector<1x8x128xf32>,
    %cst_89 = arith.constant 0.000000e+00 : f32
    %384 = vector.shape_cast %375 : vector<8x1xi1> to vector<8x1xi1>
    %385 = vector.broadcast %384 : vector<8x1xi1> to vector<8x128xi1>
    %386 = vector.broadcast %cst_89 : f32 to vector<8x128xf32>
    %387 = arith.select %385, %368, %386 : vector<8x128xi1>, vector<8x128xf32>
    %c7_i32_90 = arith.constant 7 : i32
    %388 = arith.subi %c7_i32_90, %c3_i32 : i32
    %389 = arith.index_cast %388 : i32 to index
    %c0_91 = arith.constant 0 : index
    %c0_92 = arith.constant 0 : index
    %390 = vector.load %arg9[%389, %c0_91, %c0_92] : memref<8x8x128xf32, #tpu.memory_space<vmem>>, vector<1x8x128xf32>
    %391 = vector.shape_cast %390 : vector<1x8x128xf32> to vector<8x128xf32>
    %392 = vector.shape_cast %387 : vector<8x128xf32> to vector<1x8x128xf32>
    tpu.vector_store %arg9[%389, %c0_91, %c0_92], %392 {strides = array<i32>} : memref<8x8x128xf32, #tpu.memory_space<vmem>>, vector<1x8x128xf32>,
    %393 = vector.shape_cast %371 : vector<8x1xi1> to vector<8x1xi1>
    %394 = vector.broadcast %393 : vector<8x1xi1> to vector<8x128xi1>
    %395 = arith.select %394, %341, %299 : vector<8x128xi1>, vector<8x128xf32>
    %396 = vector.shape_cast %375 : vector<8x1xi1> to vector<8x1xi1>
    %397 = vector.broadcast %396 : vector<8x1xi1> to vector<8x128xi1>
    %398 = arith.select %397, %368, %302 : vector<8x128xi1>, vector<8x128xf32>
    %c4_i32 = arith.constant 4 : i32
    %399 = arith.index_cast %c4_i32 : i32 to index
    %c0_93 = arith.constant 0 : index
    %c0_94 = arith.constant 0 : index
    %400 = vector.load %arg2[%399, %c0_93, %c0_94] : memref<8x8x384xbf16, #tpu.memory_space<vmem>>, vector<1x8x384xbf16>
    %401 = vector.shape_cast %400 : vector<1x8x384xbf16> to vector<8x384xbf16>
    %402 = arith.extf %401 : vector<8x384xbf16> to vector<8x384xf32>
    %403 = arith.index_cast %c4_i32 : i32 to index
    %c0_95 = arith.constant 0 : index
    %c0_96 = arith.constant 0 : index
    %404 = vector.load %arg3[%403, %c0_95, %c0_96] : memref<8x8x384xbf16, #tpu.memory_space<vmem>>, vector<1x8x384xbf16>
    %405 = vector.shape_cast %404 : vector<1x8x384xbf16> to vector<8x384xbf16>
    %406 = arith.extf %405 : vector<8x384xbf16> to vector<8x384xf32>
    %407 = arith.truncf %395 : vector<8x128xf32> to vector<8x128xbf16>
    %cst_97 = arith.constant dense<0.000000e+00> : vector<8x384xf32>
    %408 = tpu.matmul %407, %4, %cst_97 {dimension_numbers = #tpu.dot_dimension_numbers<[1], [0], [0], [1], [0, 0, 1, 1], [], []>} : vector<8x128xbf16>, vector<128x384xbf16>, vector<8x384xf32> -> vector<8x384xf32>
    %409 = arith.truncf %398 : vector<8x128xf32> to vector<8x128xbf16>
    %cst_98 = arith.constant dense<0.000000e+00> : vector<8x384xf32>
    %410 = tpu.matmul %409, %5, %cst_98 {dimension_numbers = #tpu.dot_dimension_numbers<[1], [0], [0], [1], [0, 0, 1, 1], [], []>} : vector<8x128xbf16>, vector<128x384xbf16>, vector<8x384xf32> -> vector<8x384xf32>
    %411 = vector.extract_strided_slice %402 {offsets = [0, 0], sizes = [8, 128], strides = [1, 1]} : vector<8x384xf32> to vector<8x128xf32>
    %412 = vector.extract_strided_slice %408 {offsets = [0, 0], sizes = [8, 128], strides = [1, 1]} : vector<8x384xf32> to vector<8x128xf32>
    %413 = arith.addf %411, %412 : vector<8x128xf32>
    %414 = arith.negf %413 : vector<8x128xf32>
    %415 = math.exp %414 : vector<8x128xf32>
    %cst_99 = arith.constant 1.000000e+00 : f32
    %416 = vector.broadcast %cst_99 : f32 to vector<8x128xf32>
    %417 = arith.addf %416, %415 : vector<8x128xf32>
    %418 = arith.divf %416, %417 : vector<8x128xf32>
    %419 = vector.extract_strided_slice %402 {offsets = [0, 128], sizes = [8, 128], strides = [1, 1]} : vector<8x384xf32> to vector<8x128xf32>
    %420 = vector.extract_strided_slice %408 {offsets = [0, 128], sizes = [8, 128], strides = [1, 1]} : vector<8x384xf32> to vector<8x128xf32>
    %421 = arith.addf %419, %420 : vector<8x128xf32>
    %422 = arith.negf %421 : vector<8x128xf32>
    %423 = math.exp %422 : vector<8x128xf32>
    %cst_100 = arith.constant 1.000000e+00 : f32
    %424 = vector.broadcast %cst_100 : f32 to vector<8x128xf32>
    %425 = arith.addf %424, %423 : vector<8x128xf32>
    %426 = arith.divf %424, %425 : vector<8x128xf32>
    %427 = vector.extract_strided_slice %402 {offsets = [0, 256], sizes = [8, 128], strides = [1, 1]} : vector<8x384xf32> to vector<8x128xf32>
    %428 = vector.extract_strided_slice %408 {offsets = [0, 256], sizes = [8, 128], strides = [1, 1]} : vector<8x384xf32> to vector<8x128xf32>
    %429 = arith.addf %428, %8 : vector<8x128xf32>
    %430 = arith.mulf %418, %429 : vector<8x128xf32>
    %431 = arith.addf %427, %430 : vector<8x128xf32>
    %432 = math.tanh %431 : vector<8x128xf32>
    %cst_101 = arith.constant 1.000000e+00 : f32
    %433 = vector.broadcast %cst_101 : f32 to vector<8x128xf32>
    %434 = arith.subf %433, %426 : vector<8x128xf32>
    %435 = arith.mulf %434, %432 : vector<8x128xf32>
    %436 = arith.mulf %426, %395 : vector<8x128xf32>
    %437 = arith.addf %435, %436 : vector<8x128xf32>
    %438 = vector.extract_strided_slice %406 {offsets = [0, 0], sizes = [8, 128], strides = [1, 1]} : vector<8x384xf32> to vector<8x128xf32>
    %439 = vector.extract_strided_slice %410 {offsets = [0, 0], sizes = [8, 128], strides = [1, 1]} : vector<8x384xf32> to vector<8x128xf32>
    %440 = arith.addf %438, %439 : vector<8x128xf32>
    %441 = arith.negf %440 : vector<8x128xf32>
    %442 = math.exp %441 : vector<8x128xf32>
    %cst_102 = arith.constant 1.000000e+00 : f32
    %443 = vector.broadcast %cst_102 : f32 to vector<8x128xf32>
    %444 = arith.addf %443, %442 : vector<8x128xf32>
    %445 = arith.divf %443, %444 : vector<8x128xf32>
    %446 = vector.extract_strided_slice %406 {offsets = [0, 128], sizes = [8, 128], strides = [1, 1]} : vector<8x384xf32> to vector<8x128xf32>
    %447 = vector.extract_strided_slice %410 {offsets = [0, 128], sizes = [8, 128], strides = [1, 1]} : vector<8x384xf32> to vector<8x128xf32>
    %448 = arith.addf %446, %447 : vector<8x128xf32>
    %449 = arith.negf %448 : vector<8x128xf32>
    %450 = math.exp %449 : vector<8x128xf32>
    %cst_103 = arith.constant 1.000000e+00 : f32
    %451 = vector.broadcast %cst_103 : f32 to vector<8x128xf32>
    %452 = arith.addf %451, %450 : vector<8x128xf32>
    %453 = arith.divf %451, %452 : vector<8x128xf32>
    %454 = vector.extract_strided_slice %406 {offsets = [0, 256], sizes = [8, 128], strides = [1, 1]} : vector<8x384xf32> to vector<8x128xf32>
    %455 = vector.extract_strided_slice %410 {offsets = [0, 256], sizes = [8, 128], strides = [1, 1]} : vector<8x384xf32> to vector<8x128xf32>
    %456 = arith.addf %455, %11 : vector<8x128xf32>
    %457 = arith.mulf %445, %456 : vector<8x128xf32>
    %458 = arith.addf %454, %457 : vector<8x128xf32>
    %459 = math.tanh %458 : vector<8x128xf32>
    %cst_104 = arith.constant 1.000000e+00 : f32
    %460 = vector.broadcast %cst_104 : f32 to vector<8x128xf32>
    %461 = arith.subf %460, %453 : vector<8x128xf32>
    %462 = arith.mulf %461, %459 : vector<8x128xf32>
    %463 = arith.mulf %453, %398 : vector<8x128xf32>
    %464 = arith.addf %462, %463 : vector<8x128xf32>
    %465 = arith.addi %12, %c4_i32 : i32
    %466 = vector.broadcast %465 : i32 to vector<8x1xi32>
    %467 = arith.cmpi slt, %466, %3 : vector<8x1xi32>
    %c7_i32_105 = arith.constant 7 : i32
    %468 = arith.subi %c7_i32_105, %12 : i32
    %469 = arith.subi %468, %c4_i32 : i32
    %470 = vector.broadcast %469 : i32 to vector<8x1xi32>
    %471 = arith.cmpi slt, %470, %3 : vector<8x1xi32>
    %cst_106 = arith.constant 0.000000e+00 : f32
    %472 = vector.shape_cast %467 : vector<8x1xi1> to vector<8x1xi1>
    %473 = vector.broadcast %472 : vector<8x1xi1> to vector<8x128xi1>
    %474 = vector.broadcast %cst_106 : f32 to vector<8x128xf32>
    %475 = arith.select %473, %437, %474 : vector<8x128xi1>, vector<8x128xf32>
    %476 = arith.index_cast %c4_i32 : i32 to index
    %c0_107 = arith.constant 0 : index
    %c0_108 = arith.constant 0 : index
    %477 = vector.load %arg8[%476, %c0_107, %c0_108] : memref<8x8x128xf32, #tpu.memory_space<vmem>>, vector<1x8x128xf32>
    %478 = vector.shape_cast %477 : vector<1x8x128xf32> to vector<8x128xf32>
    %479 = vector.shape_cast %475 : vector<8x128xf32> to vector<1x8x128xf32>
    tpu.vector_store %arg8[%476, %c0_107, %c0_108], %479 {strides = array<i32>} : memref<8x8x128xf32, #tpu.memory_space<vmem>>, vector<1x8x128xf32>,
    %cst_109 = arith.constant 0.000000e+00 : f32
    %480 = vector.shape_cast %471 : vector<8x1xi1> to vector<8x1xi1>
    %481 = vector.broadcast %480 : vector<8x1xi1> to vector<8x128xi1>
    %482 = vector.broadcast %cst_109 : f32 to vector<8x128xf32>
    %483 = arith.select %481, %464, %482 : vector<8x128xi1>, vector<8x128xf32>
    %c7_i32_110 = arith.constant 7 : i32
    %484 = arith.subi %c7_i32_110, %c4_i32 : i32
    %485 = arith.index_cast %484 : i32 to index
    %c0_111 = arith.constant 0 : index
    %c0_112 = arith.constant 0 : index
    %486 = vector.load %arg9[%485, %c0_111, %c0_112] : memref<8x8x128xf32, #tpu.memory_space<vmem>>, vector<1x8x128xf32>
    %487 = vector.shape_cast %486 : vector<1x8x128xf32> to vector<8x128xf32>
    %488 = vector.shape_cast %483 : vector<8x128xf32> to vector<1x8x128xf32>
    tpu.vector_store %arg9[%485, %c0_111, %c0_112], %488 {strides = array<i32>} : memref<8x8x128xf32, #tpu.memory_space<vmem>>, vector<1x8x128xf32>,
    %489 = vector.shape_cast %467 : vector<8x1xi1> to vector<8x1xi1>
    %490 = vector.broadcast %489 : vector<8x1xi1> to vector<8x128xi1>
    %491 = arith.select %490, %437, %395 : vector<8x128xi1>, vector<8x128xf32>
    %492 = vector.shape_cast %471 : vector<8x1xi1> to vector<8x1xi1>
    %493 = vector.broadcast %492 : vector<8x1xi1> to vector<8x128xi1>
    %494 = arith.select %493, %464, %398 : vector<8x128xi1>, vector<8x128xf32>
    %c5_i32 = arith.constant 5 : i32
    %495 = arith.index_cast %c5_i32 : i32 to index
    %c0_113 = arith.constant 0 : index
    %c0_114 = arith.constant 0 : index
    %496 = vector.load %arg2[%495, %c0_113, %c0_114] : memref<8x8x384xbf16, #tpu.memory_space<vmem>>, vector<1x8x384xbf16>
    %497 = vector.shape_cast %496 : vector<1x8x384xbf16> to vector<8x384xbf16>
    %498 = arith.extf %497 : vector<8x384xbf16> to vector<8x384xf32>
    %499 = arith.index_cast %c5_i32 : i32 to index
    %c0_115 = arith.constant 0 : index
    %c0_116 = arith.constant 0 : index
    %500 = vector.load %arg3[%499, %c0_115, %c0_116] : memref<8x8x384xbf16, #tpu.memory_space<vmem>>, vector<1x8x384xbf16>
    %501 = vector.shape_cast %500 : vector<1x8x384xbf16> to vector<8x384xbf16>
    %502 = arith.extf %501 : vector<8x384xbf16> to vector<8x384xf32>
    %503 = arith.truncf %491 : vector<8x128xf32> to vector<8x128xbf16>
    %cst_117 = arith.constant dense<0.000000e+00> : vector<8x384xf32>
    %504 = tpu.matmul %503, %4, %cst_117 {dimension_numbers = #tpu.dot_dimension_numbers<[1], [0], [0], [1], [0, 0, 1, 1], [], []>} : vector<8x128xbf16>, vector<128x384xbf16>, vector<8x384xf32> -> vector<8x384xf32>
    %505 = arith.truncf %494 : vector<8x128xf32> to vector<8x128xbf16>
    %cst_118 = arith.constant dense<0.000000e+00> : vector<8x384xf32>
    %506 = tpu.matmul %505, %5, %cst_118 {dimension_numbers = #tpu.dot_dimension_numbers<[1], [0], [0], [1], [0, 0, 1, 1], [], []>} : vector<8x128xbf16>, vector<128x384xbf16>, vector<8x384xf32> -> vector<8x384xf32>
    %507 = vector.extract_strided_slice %498 {offsets = [0, 0], sizes = [8, 128], strides = [1, 1]} : vector<8x384xf32> to vector<8x128xf32>
    %508 = vector.extract_strided_slice %504 {offsets = [0, 0], sizes = [8, 128], strides = [1, 1]} : vector<8x384xf32> to vector<8x128xf32>
    %509 = arith.addf %507, %508 : vector<8x128xf32>
    %510 = arith.negf %509 : vector<8x128xf32>
    %511 = math.exp %510 : vector<8x128xf32>
    %cst_119 = arith.constant 1.000000e+00 : f32
    %512 = vector.broadcast %cst_119 : f32 to vector<8x128xf32>
    %513 = arith.addf %512, %511 : vector<8x128xf32>
    %514 = arith.divf %512, %513 : vector<8x128xf32>
    %515 = vector.extract_strided_slice %498 {offsets = [0, 128], sizes = [8, 128], strides = [1, 1]} : vector<8x384xf32> to vector<8x128xf32>
    %516 = vector.extract_strided_slice %504 {offsets = [0, 128], sizes = [8, 128], strides = [1, 1]} : vector<8x384xf32> to vector<8x128xf32>
    %517 = arith.addf %515, %516 : vector<8x128xf32>
    %518 = arith.negf %517 : vector<8x128xf32>
    %519 = math.exp %518 : vector<8x128xf32>
    %cst_120 = arith.constant 1.000000e+00 : f32
    %520 = vector.broadcast %cst_120 : f32 to vector<8x128xf32>
    %521 = arith.addf %520, %519 : vector<8x128xf32>
    %522 = arith.divf %520, %521 : vector<8x128xf32>
    %523 = vector.extract_strided_slice %498 {offsets = [0, 256], sizes = [8, 128], strides = [1, 1]} : vector<8x384xf32> to vector<8x128xf32>
    %524 = vector.extract_strided_slice %504 {offsets = [0, 256], sizes = [8, 128], strides = [1, 1]} : vector<8x384xf32> to vector<8x128xf32>
    %525 = arith.addf %524, %8 : vector<8x128xf32>
    %526 = arith.mulf %514, %525 : vector<8x128xf32>
    %527 = arith.addf %523, %526 : vector<8x128xf32>
    %528 = math.tanh %527 : vector<8x128xf32>
    %cst_121 = arith.constant 1.000000e+00 : f32
    %529 = vector.broadcast %cst_121 : f32 to vector<8x128xf32>
    %530 = arith.subf %529, %522 : vector<8x128xf32>
    %531 = arith.mulf %530, %528 : vector<8x128xf32>
    %532 = arith.mulf %522, %491 : vector<8x128xf32>
    %533 = arith.addf %531, %532 : vector<8x128xf32>
    %534 = vector.extract_strided_slice %502 {offsets = [0, 0], sizes = [8, 128], strides = [1, 1]} : vector<8x384xf32> to vector<8x128xf32>
    %535 = vector.extract_strided_slice %506 {offsets = [0, 0], sizes = [8, 128], strides = [1, 1]} : vector<8x384xf32> to vector<8x128xf32>
    %536 = arith.addf %534, %535 : vector<8x128xf32>
    %537 = arith.negf %536 : vector<8x128xf32>
    %538 = math.exp %537 : vector<8x128xf32>
    %cst_122 = arith.constant 1.000000e+00 : f32
    %539 = vector.broadcast %cst_122 : f32 to vector<8x128xf32>
    %540 = arith.addf %539, %538 : vector<8x128xf32>
    %541 = arith.divf %539, %540 : vector<8x128xf32>
    %542 = vector.extract_strided_slice %502 {offsets = [0, 128], sizes = [8, 128], strides = [1, 1]} : vector<8x384xf32> to vector<8x128xf32>
    %543 = vector.extract_strided_slice %506 {offsets = [0, 128], sizes = [8, 128], strides = [1, 1]} : vector<8x384xf32> to vector<8x128xf32>
    %544 = arith.addf %542, %543 : vector<8x128xf32>
    %545 = arith.negf %544 : vector<8x128xf32>
    %546 = math.exp %545 : vector<8x128xf32>
    %cst_123 = arith.constant 1.000000e+00 : f32
    %547 = vector.broadcast %cst_123 : f32 to vector<8x128xf32>
    %548 = arith.addf %547, %546 : vector<8x128xf32>
    %549 = arith.divf %547, %548 : vector<8x128xf32>
    %550 = vector.extract_strided_slice %502 {offsets = [0, 256], sizes = [8, 128], strides = [1, 1]} : vector<8x384xf32> to vector<8x128xf32>
    %551 = vector.extract_strided_slice %506 {offsets = [0, 256], sizes = [8, 128], strides = [1, 1]} : vector<8x384xf32> to vector<8x128xf32>
    %552 = arith.addf %551, %11 : vector<8x128xf32>
    %553 = arith.mulf %541, %552 : vector<8x128xf32>
    %554 = arith.addf %550, %553 : vector<8x128xf32>
    %555 = math.tanh %554 : vector<8x128xf32>
    %cst_124 = arith.constant 1.000000e+00 : f32
    %556 = vector.broadcast %cst_124 : f32 to vector<8x128xf32>
    %557 = arith.subf %556, %549 : vector<8x128xf32>
    %558 = arith.mulf %557, %555 : vector<8x128xf32>
    %559 = arith.mulf %549, %494 : vector<8x128xf32>
    %560 = arith.addf %558, %559 : vector<8x128xf32>
    %561 = arith.addi %12, %c5_i32 : i32
    %562 = vector.broadcast %561 : i32 to vector<8x1xi32>
    %563 = arith.cmpi slt, %562, %3 : vector<8x1xi32>
    %c7_i32_125 = arith.constant 7 : i32
    %564 = arith.subi %c7_i32_125, %12 : i32
    %565 = arith.subi %564, %c5_i32 : i32
    %566 = vector.broadcast %565 : i32 to vector<8x1xi32>
    %567 = arith.cmpi slt, %566, %3 : vector<8x1xi32>
    %cst_126 = arith.constant 0.000000e+00 : f32
    %568 = vector.shape_cast %563 : vector<8x1xi1> to vector<8x1xi1>
    %569 = vector.broadcast %568 : vector<8x1xi1> to vector<8x128xi1>
    %570 = vector.broadcast %cst_126 : f32 to vector<8x128xf32>
    %571 = arith.select %569, %533, %570 : vector<8x128xi1>, vector<8x128xf32>
    %572 = arith.index_cast %c5_i32 : i32 to index
    %c0_127 = arith.constant 0 : index
    %c0_128 = arith.constant 0 : index
    %573 = vector.load %arg8[%572, %c0_127, %c0_128] : memref<8x8x128xf32, #tpu.memory_space<vmem>>, vector<1x8x128xf32>
    %574 = vector.shape_cast %573 : vector<1x8x128xf32> to vector<8x128xf32>
    %575 = vector.shape_cast %571 : vector<8x128xf32> to vector<1x8x128xf32>
    tpu.vector_store %arg8[%572, %c0_127, %c0_128], %575 {strides = array<i32>} : memref<8x8x128xf32, #tpu.memory_space<vmem>>, vector<1x8x128xf32>,
    %cst_129 = arith.constant 0.000000e+00 : f32
    %576 = vector.shape_cast %567 : vector<8x1xi1> to vector<8x1xi1>
    %577 = vector.broadcast %576 : vector<8x1xi1> to vector<8x128xi1>
    %578 = vector.broadcast %cst_129 : f32 to vector<8x128xf32>
    %579 = arith.select %577, %560, %578 : vector<8x128xi1>, vector<8x128xf32>
    %c7_i32_130 = arith.constant 7 : i32
    %580 = arith.subi %c7_i32_130, %c5_i32 : i32
    %581 = arith.index_cast %580 : i32 to index
    %c0_131 = arith.constant 0 : index
    %c0_132 = arith.constant 0 : index
    %582 = vector.load %arg9[%581, %c0_131, %c0_132] : memref<8x8x128xf32, #tpu.memory_space<vmem>>, vector<1x8x128xf32>
    %583 = vector.shape_cast %582 : vector<1x8x128xf32> to vector<8x128xf32>
    %584 = vector.shape_cast %579 : vector<8x128xf32> to vector<1x8x128xf32>
    tpu.vector_store %arg9[%581, %c0_131, %c0_132], %584 {strides = array<i32>} : memref<8x8x128xf32, #tpu.memory_space<vmem>>, vector<1x8x128xf32>,
    %585 = vector.shape_cast %563 : vector<8x1xi1> to vector<8x1xi1>
    %586 = vector.broadcast %585 : vector<8x1xi1> to vector<8x128xi1>
    %587 = arith.select %586, %533, %491 : vector<8x128xi1>, vector<8x128xf32>
    %588 = vector.shape_cast %567 : vector<8x1xi1> to vector<8x1xi1>
    %589 = vector.broadcast %588 : vector<8x1xi1> to vector<8x128xi1>
    %590 = arith.select %589, %560, %494 : vector<8x128xi1>, vector<8x128xf32>
    %c6_i32 = arith.constant 6 : i32
    %591 = arith.index_cast %c6_i32 : i32 to index
    %c0_133 = arith.constant 0 : index
    %c0_134 = arith.constant 0 : index
    %592 = vector.load %arg2[%591, %c0_133, %c0_134] : memref<8x8x384xbf16, #tpu.memory_space<vmem>>, vector<1x8x384xbf16>
    %593 = vector.shape_cast %592 : vector<1x8x384xbf16> to vector<8x384xbf16>
    %594 = arith.extf %593 : vector<8x384xbf16> to vector<8x384xf32>
    %595 = arith.index_cast %c6_i32 : i32 to index
    %c0_135 = arith.constant 0 : index
    %c0_136 = arith.constant 0 : index
    %596 = vector.load %arg3[%595, %c0_135, %c0_136] : memref<8x8x384xbf16, #tpu.memory_space<vmem>>, vector<1x8x384xbf16>
    %597 = vector.shape_cast %596 : vector<1x8x384xbf16> to vector<8x384xbf16>
    %598 = arith.extf %597 : vector<8x384xbf16> to vector<8x384xf32>
    %599 = arith.truncf %587 : vector<8x128xf32> to vector<8x128xbf16>
    %cst_137 = arith.constant dense<0.000000e+00> : vector<8x384xf32>
    %600 = tpu.matmul %599, %4, %cst_137 {dimension_numbers = #tpu.dot_dimension_numbers<[1], [0], [0], [1], [0, 0, 1, 1], [], []>} : vector<8x128xbf16>, vector<128x384xbf16>, vector<8x384xf32> -> vector<8x384xf32>
    %601 = arith.truncf %590 : vector<8x128xf32> to vector<8x128xbf16>
    %cst_138 = arith.constant dense<0.000000e+00> : vector<8x384xf32>
    %602 = tpu.matmul %601, %5, %cst_138 {dimension_numbers = #tpu.dot_dimension_numbers<[1], [0], [0], [1], [0, 0, 1, 1], [], []>} : vector<8x128xbf16>, vector<128x384xbf16>, vector<8x384xf32> -> vector<8x384xf32>
    %603 = vector.extract_strided_slice %594 {offsets = [0, 0], sizes = [8, 128], strides = [1, 1]} : vector<8x384xf32> to vector<8x128xf32>
    %604 = vector.extract_strided_slice %600 {offsets = [0, 0], sizes = [8, 128], strides = [1, 1]} : vector<8x384xf32> to vector<8x128xf32>
    %605 = arith.addf %603, %604 : vector<8x128xf32>
    %606 = arith.negf %605 : vector<8x128xf32>
    %607 = math.exp %606 : vector<8x128xf32>
    %cst_139 = arith.constant 1.000000e+00 : f32
    %608 = vector.broadcast %cst_139 : f32 to vector<8x128xf32>
    %609 = arith.addf %608, %607 : vector<8x128xf32>
    %610 = arith.divf %608, %609 : vector<8x128xf32>
    %611 = vector.extract_strided_slice %594 {offsets = [0, 128], sizes = [8, 128], strides = [1, 1]} : vector<8x384xf32> to vector<8x128xf32>
    %612 = vector.extract_strided_slice %600 {offsets = [0, 128], sizes = [8, 128], strides = [1, 1]} : vector<8x384xf32> to vector<8x128xf32>
    %613 = arith.addf %611, %612 : vector<8x128xf32>
    %614 = arith.negf %613 : vector<8x128xf32>
    %615 = math.exp %614 : vector<8x128xf32>
    %cst_140 = arith.constant 1.000000e+00 : f32
    %616 = vector.broadcast %cst_140 : f32 to vector<8x128xf32>
    %617 = arith.addf %616, %615 : vector<8x128xf32>
    %618 = arith.divf %616, %617 : vector<8x128xf32>
    %619 = vector.extract_strided_slice %594 {offsets = [0, 256], sizes = [8, 128], strides = [1, 1]} : vector<8x384xf32> to vector<8x128xf32>
    %620 = vector.extract_strided_slice %600 {offsets = [0, 256], sizes = [8, 128], strides = [1, 1]} : vector<8x384xf32> to vector<8x128xf32>
    %621 = arith.addf %620, %8 : vector<8x128xf32>
    %622 = arith.mulf %610, %621 : vector<8x128xf32>
    %623 = arith.addf %619, %622 : vector<8x128xf32>
    %624 = math.tanh %623 : vector<8x128xf32>
    %cst_141 = arith.constant 1.000000e+00 : f32
    %625 = vector.broadcast %cst_141 : f32 to vector<8x128xf32>
    %626 = arith.subf %625, %618 : vector<8x128xf32>
    %627 = arith.mulf %626, %624 : vector<8x128xf32>
    %628 = arith.mulf %618, %587 : vector<8x128xf32>
    %629 = arith.addf %627, %628 : vector<8x128xf32>
    %630 = vector.extract_strided_slice %598 {offsets = [0, 0], sizes = [8, 128], strides = [1, 1]} : vector<8x384xf32> to vector<8x128xf32>
    %631 = vector.extract_strided_slice %602 {offsets = [0, 0], sizes = [8, 128], strides = [1, 1]} : vector<8x384xf32> to vector<8x128xf32>
    %632 = arith.addf %630, %631 : vector<8x128xf32>
    %633 = arith.negf %632 : vector<8x128xf32>
    %634 = math.exp %633 : vector<8x128xf32>
    %cst_142 = arith.constant 1.000000e+00 : f32
    %635 = vector.broadcast %cst_142 : f32 to vector<8x128xf32>
    %636 = arith.addf %635, %634 : vector<8x128xf32>
    %637 = arith.divf %635, %636 : vector<8x128xf32>
    %638 = vector.extract_strided_slice %598 {offsets = [0, 128], sizes = [8, 128], strides = [1, 1]} : vector<8x384xf32> to vector<8x128xf32>
    %639 = vector.extract_strided_slice %602 {offsets = [0, 128], sizes = [8, 128], strides = [1, 1]} : vector<8x384xf32> to vector<8x128xf32>
    %640 = arith.addf %638, %639 : vector<8x128xf32>
    %641 = arith.negf %640 : vector<8x128xf32>
    %642 = math.exp %641 : vector<8x128xf32>
    %cst_143 = arith.constant 1.000000e+00 : f32
    %643 = vector.broadcast %cst_143 : f32 to vector<8x128xf32>
    %644 = arith.addf %643, %642 : vector<8x128xf32>
    %645 = arith.divf %643, %644 : vector<8x128xf32>
    %646 = vector.extract_strided_slice %598 {offsets = [0, 256], sizes = [8, 128], strides = [1, 1]} : vector<8x384xf32> to vector<8x128xf32>
    %647 = vector.extract_strided_slice %602 {offsets = [0, 256], sizes = [8, 128], strides = [1, 1]} : vector<8x384xf32> to vector<8x128xf32>
    %648 = arith.addf %647, %11 : vector<8x128xf32>
    %649 = arith.mulf %637, %648 : vector<8x128xf32>
    %650 = arith.addf %646, %649 : vector<8x128xf32>
    %651 = math.tanh %650 : vector<8x128xf32>
    %cst_144 = arith.constant 1.000000e+00 : f32
    %652 = vector.broadcast %cst_144 : f32 to vector<8x128xf32>
    %653 = arith.subf %652, %645 : vector<8x128xf32>
    %654 = arith.mulf %653, %651 : vector<8x128xf32>
    %655 = arith.mulf %645, %590 : vector<8x128xf32>
    %656 = arith.addf %654, %655 : vector<8x128xf32>
    %657 = arith.addi %12, %c6_i32 : i32
    %658 = vector.broadcast %657 : i32 to vector<8x1xi32>
    %659 = arith.cmpi slt, %658, %3 : vector<8x1xi32>
    %c7_i32_145 = arith.constant 7 : i32
    %660 = arith.subi %c7_i32_145, %12 : i32
    %661 = arith.subi %660, %c6_i32 : i32
    %662 = vector.broadcast %661 : i32 to vector<8x1xi32>
    %663 = arith.cmpi slt, %662, %3 : vector<8x1xi32>
    %cst_146 = arith.constant 0.000000e+00 : f32
    %664 = vector.shape_cast %659 : vector<8x1xi1> to vector<8x1xi1>
    %665 = vector.broadcast %664 : vector<8x1xi1> to vector<8x128xi1>
    %666 = vector.broadcast %cst_146 : f32 to vector<8x128xf32>
    %667 = arith.select %665, %629, %666 : vector<8x128xi1>, vector<8x128xf32>
    %668 = arith.index_cast %c6_i32 : i32 to index
    %c0_147 = arith.constant 0 : index
    %c0_148 = arith.constant 0 : index
    %669 = vector.load %arg8[%668, %c0_147, %c0_148] : memref<8x8x128xf32, #tpu.memory_space<vmem>>, vector<1x8x128xf32>
    %670 = vector.shape_cast %669 : vector<1x8x128xf32> to vector<8x128xf32>
    %671 = vector.shape_cast %667 : vector<8x128xf32> to vector<1x8x128xf32>
    tpu.vector_store %arg8[%668, %c0_147, %c0_148], %671 {strides = array<i32>} : memref<8x8x128xf32, #tpu.memory_space<vmem>>, vector<1x8x128xf32>,
    %cst_149 = arith.constant 0.000000e+00 : f32
    %672 = vector.shape_cast %663 : vector<8x1xi1> to vector<8x1xi1>
    %673 = vector.broadcast %672 : vector<8x1xi1> to vector<8x128xi1>
    %674 = vector.broadcast %cst_149 : f32 to vector<8x128xf32>
    %675 = arith.select %673, %656, %674 : vector<8x128xi1>, vector<8x128xf32>
    %c7_i32_150 = arith.constant 7 : i32
    %676 = arith.subi %c7_i32_150, %c6_i32 : i32
    %677 = arith.index_cast %676 : i32 to index
    %c0_151 = arith.constant 0 : index
    %c0_152 = arith.constant 0 : index
    %678 = vector.load %arg9[%677, %c0_151, %c0_152] : memref<8x8x128xf32, #tpu.memory_space<vmem>>, vector<1x8x128xf32>
    %679 = vector.shape_cast %678 : vector<1x8x128xf32> to vector<8x128xf32>
    %680 = vector.shape_cast %675 : vector<8x128xf32> to vector<1x8x128xf32>
    tpu.vector_store %arg9[%677, %c0_151, %c0_152], %680 {strides = array<i32>} : memref<8x8x128xf32, #tpu.memory_space<vmem>>, vector<1x8x128xf32>,
    %681 = vector.shape_cast %659 : vector<8x1xi1> to vector<8x1xi1>
    %682 = vector.broadcast %681 : vector<8x1xi1> to vector<8x128xi1>
    %683 = arith.select %682, %629, %587 : vector<8x128xi1>, vector<8x128xf32>
    %684 = vector.shape_cast %663 : vector<8x1xi1> to vector<8x1xi1>
    %685 = vector.broadcast %684 : vector<8x1xi1> to vector<8x128xi1>
    %686 = arith.select %685, %656, %590 : vector<8x128xi1>, vector<8x128xf32>
    %c7_i32_153 = arith.constant 7 : i32
    %687 = arith.index_cast %c7_i32_153 : i32 to index
    %c0_154 = arith.constant 0 : index
    %c0_155 = arith.constant 0 : index
    %688 = vector.load %arg2[%687, %c0_154, %c0_155] : memref<8x8x384xbf16, #tpu.memory_space<vmem>>, vector<1x8x384xbf16>
    %689 = vector.shape_cast %688 : vector<1x8x384xbf16> to vector<8x384xbf16>
    %690 = arith.extf %689 : vector<8x384xbf16> to vector<8x384xf32>
    %691 = arith.index_cast %c7_i32_153 : i32 to index
    %c0_156 = arith.constant 0 : index
    %c0_157 = arith.constant 0 : index
    %692 = vector.load %arg3[%691, %c0_156, %c0_157] : memref<8x8x384xbf16, #tpu.memory_space<vmem>>, vector<1x8x384xbf16>
    %693 = vector.shape_cast %692 : vector<1x8x384xbf16> to vector<8x384xbf16>
    %694 = arith.extf %693 : vector<8x384xbf16> to vector<8x384xf32>
    %695 = arith.truncf %683 : vector<8x128xf32> to vector<8x128xbf16>
    %cst_158 = arith.constant dense<0.000000e+00> : vector<8x384xf32>
    %696 = tpu.matmul %695, %4, %cst_158 {dimension_numbers = #tpu.dot_dimension_numbers<[1], [0], [0], [1], [0, 0, 1, 1], [], []>} : vector<8x128xbf16>, vector<128x384xbf16>, vector<8x384xf32> -> vector<8x384xf32>
    %697 = arith.truncf %686 : vector<8x128xf32> to vector<8x128xbf16>
    %cst_159 = arith.constant dense<0.000000e+00> : vector<8x384xf32>
    %698 = tpu.matmul %697, %5, %cst_159 {dimension_numbers = #tpu.dot_dimension_numbers<[1], [0], [0], [1], [0, 0, 1, 1], [], []>} : vector<8x128xbf16>, vector<128x384xbf16>, vector<8x384xf32> -> vector<8x384xf32>
    %699 = vector.extract_strided_slice %690 {offsets = [0, 0], sizes = [8, 128], strides = [1, 1]} : vector<8x384xf32> to vector<8x128xf32>
    %700 = vector.extract_strided_slice %696 {offsets = [0, 0], sizes = [8, 128], strides = [1, 1]} : vector<8x384xf32> to vector<8x128xf32>
    %701 = arith.addf %699, %700 : vector<8x128xf32>
    %702 = arith.negf %701 : vector<8x128xf32>
    %703 = math.exp %702 : vector<8x128xf32>
    %cst_160 = arith.constant 1.000000e+00 : f32
    %704 = vector.broadcast %cst_160 : f32 to vector<8x128xf32>
    %705 = arith.addf %704, %703 : vector<8x128xf32>
    %706 = arith.divf %704, %705 : vector<8x128xf32>
    %707 = vector.extract_strided_slice %690 {offsets = [0, 128], sizes = [8, 128], strides = [1, 1]} : vector<8x384xf32> to vector<8x128xf32>
    %708 = vector.extract_strided_slice %696 {offsets = [0, 128], sizes = [8, 128], strides = [1, 1]} : vector<8x384xf32> to vector<8x128xf32>
    %709 = arith.addf %707, %708 : vector<8x128xf32>
    %710 = arith.negf %709 : vector<8x128xf32>
    %711 = math.exp %710 : vector<8x128xf32>
    %cst_161 = arith.constant 1.000000e+00 : f32
    %712 = vector.broadcast %cst_161 : f32 to vector<8x128xf32>
    %713 = arith.addf %712, %711 : vector<8x128xf32>
    %714 = arith.divf %712, %713 : vector<8x128xf32>
    %715 = vector.extract_strided_slice %690 {offsets = [0, 256], sizes = [8, 128], strides = [1, 1]} : vector<8x384xf32> to vector<8x128xf32>
    %716 = vector.extract_strided_slice %696 {offsets = [0, 256], sizes = [8, 128], strides = [1, 1]} : vector<8x384xf32> to vector<8x128xf32>
    %717 = arith.addf %716, %8 : vector<8x128xf32>
    %718 = arith.mulf %706, %717 : vector<8x128xf32>
    %719 = arith.addf %715, %718 : vector<8x128xf32>
    %720 = math.tanh %719 : vector<8x128xf32>
    %cst_162 = arith.constant 1.000000e+00 : f32
    %721 = vector.broadcast %cst_162 : f32 to vector<8x128xf32>
    %722 = arith.subf %721, %714 : vector<8x128xf32>
    %723 = arith.mulf %722, %720 : vector<8x128xf32>
    %724 = arith.mulf %714, %683 : vector<8x128xf32>
    %725 = arith.addf %723, %724 : vector<8x128xf32>
    %726 = vector.extract_strided_slice %694 {offsets = [0, 0], sizes = [8, 128], strides = [1, 1]} : vector<8x384xf32> to vector<8x128xf32>
    %727 = vector.extract_strided_slice %698 {offsets = [0, 0], sizes = [8, 128], strides = [1, 1]} : vector<8x384xf32> to vector<8x128xf32>
    %728 = arith.addf %726, %727 : vector<8x128xf32>
    %729 = arith.negf %728 : vector<8x128xf32>
    %730 = math.exp %729 : vector<8x128xf32>
    %cst_163 = arith.constant 1.000000e+00 : f32
    %731 = vector.broadcast %cst_163 : f32 to vector<8x128xf32>
    %732 = arith.addf %731, %730 : vector<8x128xf32>
    %733 = arith.divf %731, %732 : vector<8x128xf32>
    %734 = vector.extract_strided_slice %694 {offsets = [0, 128], sizes = [8, 128], strides = [1, 1]} : vector<8x384xf32> to vector<8x128xf32>
    %735 = vector.extract_strided_slice %698 {offsets = [0, 128], sizes = [8, 128], strides = [1, 1]} : vector<8x384xf32> to vector<8x128xf32>
    %736 = arith.addf %734, %735 : vector<8x128xf32>
    %737 = arith.negf %736 : vector<8x128xf32>
    %738 = math.exp %737 : vector<8x128xf32>
    %cst_164 = arith.constant 1.000000e+00 : f32
    %739 = vector.broadcast %cst_164 : f32 to vector<8x128xf32>
    %740 = arith.addf %739, %738 : vector<8x128xf32>
    %741 = arith.divf %739, %740 : vector<8x128xf32>
    %742 = vector.extract_strided_slice %694 {offsets = [0, 256], sizes = [8, 128], strides = [1, 1]} : vector<8x384xf32> to vector<8x128xf32>
    %743 = vector.extract_strided_slice %698 {offsets = [0, 256], sizes = [8, 128], strides = [1, 1]} : vector<8x384xf32> to vector<8x128xf32>
    %744 = arith.addf %743, %11 : vector<8x128xf32>
    %745 = arith.mulf %733, %744 : vector<8x128xf32>
    %746 = arith.addf %742, %745 : vector<8x128xf32>
    %747 = math.tanh %746 : vector<8x128xf32>
    %cst_165 = arith.constant 1.000000e+00 : f32
    %748 = vector.broadcast %cst_165 : f32 to vector<8x128xf32>
    %749 = arith.subf %748, %741 : vector<8x128xf32>
    %750 = arith.mulf %749, %747 : vector<8x128xf32>
    %751 = arith.mulf %741, %686 : vector<8x128xf32>
    %752 = arith.addf %750, %751 : vector<8x128xf32>
    %753 = arith.addi %12, %c7_i32_153 : i32
    %754 = vector.broadcast %753 : i32 to vector<8x1xi32>
    %755 = arith.cmpi slt, %754, %3 : vector<8x1xi32>
    %c7_i32_166 = arith.constant 7 : i32
    %756 = arith.subi %c7_i32_166, %12 : i32
    %757 = arith.subi %756, %c7_i32_153 : i32
    %758 = vector.broadcast %757 : i32 to vector<8x1xi32>
    %759 = arith.cmpi slt, %758, %3 : vector<8x1xi32>
    %cst_167 = arith.constant 0.000000e+00 : f32
    %760 = vector.shape_cast %755 : vector<8x1xi1> to vector<8x1xi1>
    %761 = vector.broadcast %760 : vector<8x1xi1> to vector<8x128xi1>
    %762 = vector.broadcast %cst_167 : f32 to vector<8x128xf32>
    %763 = arith.select %761, %725, %762 : vector<8x128xi1>, vector<8x128xf32>
    %764 = arith.index_cast %c7_i32_153 : i32 to index
    %c0_168 = arith.constant 0 : index
    %c0_169 = arith.constant 0 : index
    %765 = vector.load %arg8[%764, %c0_168, %c0_169] : memref<8x8x128xf32, #tpu.memory_space<vmem>>, vector<1x8x128xf32>
    %766 = vector.shape_cast %765 : vector<1x8x128xf32> to vector<8x128xf32>
    %767 = vector.shape_cast %763 : vector<8x128xf32> to vector<1x8x128xf32>
    tpu.vector_store %arg8[%764, %c0_168, %c0_169], %767 {strides = array<i32>} : memref<8x8x128xf32, #tpu.memory_space<vmem>>, vector<1x8x128xf32>,
    %cst_170 = arith.constant 0.000000e+00 : f32
    %768 = vector.shape_cast %759 : vector<8x1xi1> to vector<8x1xi1>
    %769 = vector.broadcast %768 : vector<8x1xi1> to vector<8x128xi1>
    %770 = vector.broadcast %cst_170 : f32 to vector<8x128xf32>
    %771 = arith.select %769, %752, %770 : vector<8x128xi1>, vector<8x128xf32>
    %c7_i32_171 = arith.constant 7 : i32
    %772 = arith.subi %c7_i32_171, %c7_i32_153 : i32
    %773 = arith.index_cast %772 : i32 to index
    %c0_172 = arith.constant 0 : index
    %c0_173 = arith.constant 0 : index
    %774 = vector.load %arg9[%773, %c0_172, %c0_173] : memref<8x8x128xf32, #tpu.memory_space<vmem>>, vector<1x8x128xf32>
    %775 = vector.shape_cast %774 : vector<1x8x128xf32> to vector<8x128xf32>
    %776 = vector.shape_cast %771 : vector<8x128xf32> to vector<1x8x128xf32>
    tpu.vector_store %arg9[%773, %c0_172, %c0_173], %776 {strides = array<i32>} : memref<8x8x128xf32, #tpu.memory_space<vmem>>, vector<1x8x128xf32>,
    %777 = vector.shape_cast %755 : vector<8x1xi1> to vector<8x1xi1>
    %778 = vector.broadcast %777 : vector<8x1xi1> to vector<8x128xi1>
    %779 = arith.select %778, %725, %683 : vector<8x128xi1>, vector<8x128xf32>
    %780 = vector.shape_cast %759 : vector<8x1xi1> to vector<8x1xi1>
    %781 = vector.broadcast %780 : vector<8x1xi1> to vector<8x128xi1>
    %782 = arith.select %781, %752, %686 : vector<8x128xi1>, vector<8x128xf32>
    %c8_i32_174 = arith.constant 8 : i32
    %c0_175 = arith.constant 0 : index
    %c0_176 = arith.constant 0 : index
    %783 = vector.load %arg11[%c0_175, %c0_176] : memref<8x128xf32, #tpu.memory_space<vmem>>, vector<8x128xf32>
    tpu.vector_store %arg11[%c0_175, %c0_176], %779 {strides = array<i32>} : memref<8x128xf32, #tpu.memory_space<vmem>>, vector<8x128xf32>,
    %c0_177 = arith.constant 0 : index
    %c0_178 = arith.constant 0 : index
    %784 = vector.load %arg12[%c0_177, %c0_178] : memref<8x128xf32, #tpu.memory_space<vmem>>, vector<8x128xf32>
    tpu.vector_store %arg12[%c0_177, %c0_178], %782 {strides = array<i32>} : memref<8x128xf32, #tpu.memory_space<vmem>>, vector<8x128xf32>,
    %c0_i32_179 = arith.constant 0 : i32
    %785 = arith.cmpi eq, %arg0, %c0_i32_179 : i32
    %786 = arith.extui %785 : i1 to i32
    %c0_i32_180 = arith.constant 0 : i32
    %787 = arith.cmpi ne, %786, %c0_i32_180 : i32
    scf.if %787 {
      %c0_181 = arith.constant 0 : index
      %c0_182 = arith.constant 0 : index
      %788 = vector.load %arg10[%c0_181, %c0_182] : memref<8x256xf32, #tpu.memory_space<vmem>>, vector<8x128xf32>
      tpu.vector_store %arg10[%c0_181, %c0_182], %779 {strides = array<i32>} : memref<8x256xf32, #tpu.memory_space<vmem>>, vector<8x128xf32>,
      %c0_183 = arith.constant 0 : index
      %c128 = arith.constant 128 : index
      %789 = vector.load %arg10[%c0_183, %c128] : memref<8x256xf32, #tpu.memory_space<vmem>>, vector<8x128xf32>
      tpu.vector_store %arg10[%c0_183, %c128], %782 {strides = array<i32>} : memref<8x256xf32, #tpu.memory_space<vmem>>, vector<8x128xf32>,
    } else {
    }
    return
  }
  func.func @transform_0(%arg0: i32) -> (i32, i32) {
    %c0_i32 = arith.constant 0 : i32
    %c0_i32_0 = arith.constant 0 : i32
    %c0_i32_1 = arith.constant 0 : i32
    return %c0_i32, %c0_i32_0 : i32, i32
  }
  func.func @transform_1(%arg0: i32) -> (i32, i32, i32) {
    %c0_i32 = arith.constant 0 : i32
    %c0_i32_0 = arith.constant 0 : i32
    %c0_i32_1 = arith.constant 0 : i32
    return %arg0, %c0_i32, %c0_i32_0 : i32, i32, i32
  }
  func.func @transform_2(%arg0: i32) -> (i32, i32, i32) {
    %c0_i32 = arith.constant 0 : i32
    %c0_i32_0 = arith.constant 0 : i32
    %c0_i32_1 = arith.constant 0 : i32
    return %arg0, %c0_i32, %c0_i32_0 : i32, i32, i32
  }
  func.func @transform_3(%arg0: i32) -> (i32, i32) {
    %c0_i32 = arith.constant 0 : i32
    %c0_i32_0 = arith.constant 0 : i32
    %c0_i32_1 = arith.constant 0 : i32
    return %c0_i32, %c0_i32_0 : i32, i32
  }
  func.func @transform_4(%arg0: i32) -> (i32, i32) {
    %c0_i32 = arith.constant 0 : i32
    %c0_i32_0 = arith.constant 0 : i32
    %c0_i32_1 = arith.constant 0 : i32
    return %c0_i32, %c0_i32_0 : i32, i32
  }
  func.func @transform_5(%arg0: i32) -> (i32, i32) {
    %c0_i32 = arith.constant 0 : i32
    %c0_i32_0 = arith.constant 0 : i32
    %c0_i32_1 = arith.constant 0 : i32
    return %c0_i32, %c0_i32_0 : i32, i32
  }
  func.func @transform_6(%arg0: i32) -> (i32, i32) {
    %c0_i32 = arith.constant 0 : i32
    %c0_i32_0 = arith.constant 0 : i32
    %c0_i32_1 = arith.constant 0 : i32
    return %c0_i32, %c0_i32_0 : i32, i32
  }
  func.func @transform_7(%arg0: i32) -> (i32, i32, i32) {
    %c0_i32 = arith.constant 0 : i32
    %c0_i32_0 = arith.constant 0 : i32
    %c0_i32_1 = arith.constant 0 : i32
    return %arg0, %c0_i32, %c0_i32_0 : i32, i32, i32
  }
  func.func @transform_8(%arg0: i32) -> (i32, i32, i32) {
    %c0_i32 = arith.constant 0 : i32
    %0 = arith.subi %c0_i32, %arg0 : i32
    %c0_i32_0 = arith.constant 0 : i32
    %c0_i32_1 = arith.constant 0 : i32
    %c0_i32_2 = arith.constant 0 : i32
    return %0, %c0_i32_0, %c0_i32_1 : i32, i32, i32
  }
  func.func @transform_9(%arg0: i32) -> (i32, i32) {
    %c0_i32 = arith.constant 0 : i32
    %c0_i32_0 = arith.constant 0 : i32
    %c0_i32_1 = arith.constant 0 : i32
    return %c0_i32, %c0_i32_0 : i32, i32
  }
}

</mosaic_0001>

<llo_original>
// kernel: tpu_custom_call.1
$region0: #{tpu_custom_call.1}
  #allocation0 [shape = 'u32[]', space=smem, size = 0x4, offset = 0x4, fixed_abs, tag = 'smem constant byte address 0x4 - core index']
  #allocation1 [shape = 'u32[144,128]{1,0:T(1,128)}', space=vmem, size = 0x12000, scoped, tag = 'internal scratch']
  #allocation2 [shape = 'f32[8,128]{1,0:T(8,128)}', space=vmem, size = 0x1000, scoped, tag = 'scratch operand']
  #allocation3 [shape = 'f32[8,128]{1,0:T(8,128)}', space=vmem, size = 0x1000, scoped, tag = 'scratch operand']
  %s0 = inlined_call_operand.vmem [shape: s32[8,1], index: 0, kind: input, shape index: {}]
  %s1 = inlined_call_operand.hbm [shape: bf16[8,8,384], index: 1, kind: input, shape index: {}]
  %s2 = inlined_call_operand.hbm [shape: bf16[8,8,384], index: 2, kind: input, shape index: {}]
  %s3 = inlined_call_operand.hbm [shape: bf16[128,384], index: 3, kind: input, shape index: {}]
  %s4 = inlined_call_operand.hbm [shape: bf16[128,384], index: 4, kind: input, shape index: {}]
  %s5 = inlined_call_operand.vmem [shape: f32[1,128], index: 5, kind: input, shape index: {}]
  %s6 = inlined_call_operand.vmem [shape: f32[1,128], index: 6, kind: input, shape index: {}]
  %s7 = inlined_call_operand.hbm [shape: f32[8,8,128], index: 7, kind: output, shape index: {0}]
  %s8 = inlined_call_operand.hbm [shape: f32[8,8,128], index: 8, kind: output, shape index: {1}]
  %s9 = inlined_call_operand.hbm [shape: f32[8,256], index: 9, kind: output, shape index: {2}]
  %10 = xla_tuple %s7, %s8, %s9
  %s11 = sld [smem:[#allocation0]]
  $region78: #{tpu_custom_call.1} parent=0
    _
  %s13 = ssub.s32 1, %s11
  %s14 = scalar_select 0, %s13, %s11
  $region1: #{tpu_custom_call.1} parent=0
    #allocation4 [shape = 'u8[49152]{0}', space=vmem, size = 0xc000, scoped, tag = 'input window, operand 1, single buffered']
    #allocation5 [shape = 's32[1]{0}', space=sflag, size = 0x4, scoped, tag = 'scoped memory for tpu_custom_call.1']
    #allocation6 [shape = 's32[1]{0}', space=sflag, size = 0x4, scoped, tag = 'scoped memory for tpu_custom_call.1']
    #allocation7 [shape = 'u8[49152]{0}', space=vmem, size = 0xc000, scoped, tag = 'input window, operand 2, single buffered']
    #allocation8 [shape = 's32[1]{0}', space=sflag, size = 0x4, scoped, tag = 'scoped memory for tpu_custom_call.1']
    #allocation9 [shape = 'u8[98304]{0}', space=vmem, size = 0x18000, scoped, tag = 'input window, operand 3, single buffered']
    #allocation10 [shape = 'u8[98304]{0}', space=vmem, size = 0x18000, scoped, tag = 'input window, operand 4, single buffered']
    #allocation11 [shape = 's32[1]{0}', space=sflag, size = 0x4, scoped, tag = 'scoped memory for tpu_custom_call.1']
    #allocation12 [shape = 'u8[32768]{0}', space=vmem, size = 0x8000, scoped, tag = 'output window, operand 0, single buffered']
    #allocation13 [shape = 'u8[32768]{0}', space=vmem, size = 0x8000, scoped, tag = 'output window, operand 1, single buffered']
    #allocation14 [shape = 's32[1]{0}', space=sflag, size = 0x4, scoped, tag = 'scoped memory for tpu_custom_call.1']
    #allocation15 [shape = 'u8[8192]{0}', space=vmem, size = 0x2000, scoped, tag = 'output window, operand 2, single buffered']
    %15 = vsyncpa [#allocation5], 0
    %16 = vsyncpa [#allocation8], 0
    %17 = vsyncpa [#allocation11], 0
    %18 = vsyncpa [#allocation6], 0
    %19 = vsyncpa [#allocation14], 0
    // Predicated region
    $region2: #{tpu_custom_call.1} parent=1 // pred_check
      _
    $region3: #{tpu_custom_call.1} parent=1 // pred_check_branch
      %21 = sbr.rel (0) target = $region5
    $region4: #{tpu_custom_call.1} parent=1 // pred_region
      _
    $region5: #{tpu_custom_call.1} parent=1 // pred_fallthru
      _
    // Predicated region
    $region6: #{tpu_custom_call.1} parent=1 // pred_check
      _
    $region7: #{tpu_custom_call.1} parent=1 // pred_check_branch
      %23 = sbr.rel (0) target = $region9
    $region8: #{tpu_custom_call.1} parent=1 // pred_region
      %s25 = ssub.s32 1536, 1536
      %26 = vsyncadd [#allocation5], %s25
      %s27 = sshll.u32 [#allocation4], 4
      %s28 = int_to_ptr.vmem [resolvable:$true] %s27
      %33 = dma.hbm_to_vmem [thread:$0]  %s1, 1536, %s28, [#allocation5], 192, 192, 12
    $region9: #{tpu_custom_call.1} parent=1 // pred_fallthru
      _
    // Predicated region
    $region10: #{tpu_custom_call.1} parent=1 // pred_check
      _
    $region11: #{tpu_custom_call.1} parent=1 // pred_check_branch
      %35 = sbr.rel (0) target = $region13
    $region12: #{tpu_custom_call.1} parent=1 // pred_region
      %s37 = ssub.s32 1536, 1536
      %38 = vsyncadd [#allocation8], %s37
      %s39 = sshll.u32 [#allocation7], 4
      %s40 = int_to_ptr.vmem [resolvable:$true] %s39
      %45 = dma.hbm_to_vmem [thread:$0]  %s2, 1536, %s40, [#allocation8], 192, 192, 12
    $region13: #{tpu_custom_call.1} parent=1 // pred_fallthru
      _
    // Predicated region
    $region14: #{tpu_custom_call.1} parent=1 // pred_check
      _
    $region15: #{tpu_custom_call.1} parent=1 // pred_check_branch
      %47 = sbr.rel (0) target = $region17
    $region16: #{tpu_custom_call.1} parent=1 // pred_region
      %s49 = ssub.s32 3072, 3072
      %50 = vsyncadd [#allocation8], %s49
      %s51 = sshll.u32 [#allocation9], 4
      %s52 = int_to_ptr.vmem [resolvable:$true] %s51
      %57 = dma.hbm_to_vmem [thread:$0]  %s3, 3072, %s52, [#allocation8], 192, 192, 12
    $region17: #{tpu_custom_call.1} parent=1 // pred_fallthru
      _
    // Predicated region
    $region18: #{tpu_custom_call.1} parent=1 // pred_check
      _
    $region19: #{tpu_custom_call.1} parent=1 // pred_check_branch
      %59 = sbr.rel (0) target = $region21
    $region20: #{tpu_custom_call.1} parent=1 // pred_region
      %s61 = ssub.s32 3072, 3072
      %62 = vsyncadd [#allocation11], %s61
      %s63 = sshll.u32 [#allocation10], 4
      %s64 = int_to_ptr.vmem [resolvable:$true] %s63
      %69 = dma.hbm_to_vmem [thread:$0]  %s4, 3072, %s64, [#allocation11], 192, 192, 12
    $region21: #{tpu_custom_call.1} parent=1 // pred_fallthru
      _
    // Predicated region
    $region22: #{tpu_custom_call.1} parent=1 // pred_check
      _
    $region23: #{tpu_custom_call.1} parent=1 // pred_check_branch
      %71 = sbr.rel (0) target = $region25
    $region24: #{tpu_custom_call.1} parent=1 // pred_region
      _
    $region25: #{tpu_custom_call.1} parent=1 // pred_fallthru
      _
    // Predicated region
    $region26: #{tpu_custom_call.1} parent=1 // pred_check
      _
    $region27: #{tpu_custom_call.1} parent=1 // pred_check_branch
      %73 = sbr.rel (0) target = $region29
    $region28: #{tpu_custom_call.1} parent=1 // pred_region
      _
    $region29: #{tpu_custom_call.1} parent=1 // pred_fallthru
      _
    // Predicated region
    $region30: #{tpu_custom_call.1} parent=1 // pred_check
      _
    $region31: #{tpu_custom_call.1} parent=1 // pred_check_branch
      %75 = sbr.rel (0) target = $region33
    $region32: #{tpu_custom_call.1} parent=1 // pred_region
      %76 = dma.done [#allocation5], 1536
    $region33: #{tpu_custom_call.1} parent=1 // pred_fallthru
      _
    // Predicated region
    $region34: #{tpu_custom_call.1} parent=1 // pred_check
      _
    $region35: #{tpu_custom_call.1} parent=1 // pred_check_branch
      %78 = sbr.rel (0) target = $region37
    $region36: #{tpu_custom_call.1} parent=1 // pred_region
      %79 = dma.done [#allocation8], 1536
    $region37: #{tpu_custom_call.1} parent=1 // pred_fallthru
      _
    // Predicated region
    $region38: #{tpu_custom_call.1} parent=1 // pred_check
      _
    $region39: #{tpu_custom_call.1} parent=1 // pred_check_branch
      %81 = sbr.rel (0) target = $region41
    $region40: #{tpu_custom_call.1} parent=1 // pred_region
      %82 = dma.done [#allocation8], 3072
    $region41: #{tpu_custom_call.1} parent=1 // pred_fallthru
      _
    // Predicated region
    $region42: #{tpu_custom_call.1} parent=1 // pred_check
      _
    $region43: #{tpu_custom_call.1} parent=1 // pred_check_branch
      %84 = sbr.rel (0) target = $region45
    $region44: #{tpu_custom_call.1} parent=1 // pred_region
      %85 = dma.done [#allocation11], 3072
    $region45: #{tpu_custom_call.1} parent=1 // pred_fallthru
      _
    %s86 = ssub.s32 0, 0
    %s87 = smul.u32 8, %s86
    %p89 = scmp.eq.s32.totalorder 0, 0
    // Predicated region
    $region46: #{tpu_custom_call.1} parent=1 // pred_check
      %p90 = pneg %p89
    $region47: #{tpu_custom_call.1} parent=1 // pred_check_branch
      %92 = sbr.rel (%p90) target = $region49
    $region48: #{tpu_custom_call.1} parent=1 // pred_region
      %93 = vst [vmem:[#allocation2] sm:$0xff] 0.0
      %94 = vst [vmem:[#allocation3] sm:$0xff] 0.0
    $region49: #{tpu_custom_call.1} parent=1 // pred_fallthru
      _
    %v95 = vld [vmem:[%s0] sm:$0xff]
    %v96 = vld [vmem:[#allocation9] sm:$0xff]
    %v97 = vld [vmem:[#allocation9 + $0x8] sm:$0xf]
    %v98 = vld [vmem:[#allocation9 + $0xc] sm:$0xff]
    %v99 = vld [vmem:[#allocation9 + $0x14] sm:$0xf]
    %v100 = vld [vmem:[#allocation9 + $0x18] sm:$0xff]
    %v101 = vld [vmem:[#allocation9 + $0x20] sm:$0xf]
    %v102 = vld [vmem:[#allocation9 + $0x24] sm:$0xff]
    %v103 = vld [vmem:[#allocation9 + $0x2c] sm:$0xf]
    %v104 = vld [vmem:[#allocation9 + $0x30] sm:$0xff]
    %v105 = vld [vmem:[#allocation9 + $0x38] sm:$0xf]
    %v106 = vld [vmem:[#allocation9 + $0x3c] sm:$0xff]
    %v107 = vld [vmem:[#allocation9 + $0x44] sm:$0xf]
    %v108 = vld [vmem:[#allocation9 + $0x48] sm:$0xff]
    %v109 = vld [vmem:[#allocation9 + $0x50] sm:$0xf]
    %v110 = vld [vmem:[#allocation9 + $0x54] sm:$0xff]
    %v111 = vld [vmem:[#allocation9 + $0x5c] sm:$0xf]
    %v112 = vld [vmem:[#allocation9 + $0x60] sm:$0xff]
    %v113 = vld [vmem:[#allocation9 + $0x68] sm:$0xf]
    %v114 = vld [vmem:[#allocation9 + $0x6c] sm:$0xff]
    %v115 = vld [vmem:[#allocation9 + $0x74] sm:$0xf]
    %v116 = vld [vmem:[#allocation9 + $0x78] sm:$0xff]
    %v117 = vld [vmem:[#allocation9 + $0x80] sm:$0xf]
    %v118 = vld [vmem:[#allocation9 + $0x84] sm:$0xff]
    %v119 = vld [vmem:[#allocation9 + $0x8c] sm:$0xf]
    %v120 = vld [vmem:[#allocation9 + $0x90] sm:$0xff]
    %v121 = vld [vmem:[#allocation9 + $0x98] sm:$0xf]
    %v122 = vld [vmem:[#allocation9 + $0x9c] sm:$0xff]
    %v123 = vld [vmem:[#allocation9 + $0xa4] sm:$0xf]
    %v124 = vld [vmem:[#allocation9 + $0xa8] sm:$0xff]
    %v125 = vld [vmem:[#allocation9 + $0xb0] sm:$0xf]
    %v126 = vld [vmem:[#allocation9 + $0xb4] sm:$0xff]
    %v127 = vld [vmem:[#allocation9 + $0xbc] sm:$0xf]
    %v128 = vld [vmem:[#allocation10] sm:$0xff]
    %v129 = vld [vmem:[#allocation10 + $0x8] sm:$0xf]
    %v130 = vld [vmem:[#allocation10 + $0xc] sm:$0xff]
    %v131 = vld [vmem:[#allocation10 + $0x14] sm:$0xf]
    %v132 = vld [vmem:[#allocation10 + $0x18] sm:$0xff]
    %v133 = vld [vmem:[#allocation10 + $0x20] sm:$0xf]
    %v134 = vld [vmem:[#allocation10 + $0x24] sm:$0xff]
    %v135 = vld [vmem:[#allocation10 + $0x2c] sm:$0xf]
    %v136 = vld [vmem:[#allocation10 + $0x30] sm:$0xff]
    %v137 = vld [vmem:[#allocation10 + $0x38] sm:$0xf]
    %v138 = vld [vmem:[#allocation10 + $0x3c] sm:$0xff]
    %v139 = vld [vmem:[#allocation10 + $0x44] sm:$0xf]
    %v140 = vld [vmem:[#allocation10 + $0x48] sm:$0xff]
    %v141 = vld [vmem:[#allocation10 + $0x50] sm:$0xf]
    %v142 = vld [vmem:[#allocation10 + $0x54] sm:$0xff]
    %v143 = vld [vmem:[#allocation10 + $0x5c] sm:$0xf]
    %v144 = vld [vmem:[#allocation10 + $0x60] sm:$0xff]
    %v145 = vld [vmem:[#allocation10 + $0x68] sm:$0xf]
    %v146 = vld [vmem:[#allocation10 + $0x6c] sm:$0xff]
    %v147 = vld [vmem:[#allocation10 + $0x74] sm:$0xf]
    %v148 = vld [vmem:[#allocation10 + $0x78] sm:$0xff]
    %v149 = vld [vmem:[#allocation10 + $0x80] sm:$0xf]
    %v150 = vld [vmem:[#allocation10 + $0x84] sm:$0xff]
    %v151 = vld [vmem:[#allocation10 + $0x8c] sm:$0xf]
    %v152 = vld [vmem:[#allocation10 + $0x90] sm:$0xff]
    %v153 = vld [vmem:[#allocation10 + $0x98] sm:$0xf]
    %v154 = vld [vmem:[#allocation10 + $0x9c] sm:$0xff]
    %v155 = vld [vmem:[#allocation10 + $0xa4] sm:$0xf]
    %v156 = vld [vmem:[#allocation10 + $0xa8] sm:$0xff]
    %v157 = vld [vmem:[#allocation10 + $0xb0] sm:$0xf]
    %v158 = vld [vmem:[#allocation10 + $0xb4] sm:$0xff]
    %v159 = vld [vmem:[#allocation10 + $0xbc] sm:$0xf]
    %v160 = vld [vmem:[%s5] sm:$0x1]
    %v162 = vlaneseq
    %v163 = vshrl.u32 %v162, 7
    %v164 = vsub.s32 0, %v163
    %v165 = vrot.slane %v160, %v164
    %v167 = vld [vmem:[%s6] sm:$0x1]
    %v169 = vlaneseq
    %v170 = vshrl.u32 %v169, 7
    %v171 = vsub.s32 0, %v170
    %v172 = vrot.slane %v167, %v171
    %s174 = smul.u32 0, 8
    %v175 = vld [vmem:[#allocation2] sm:$0xff]
    %v176 = vld [vmem:[#allocation3] sm:$0xff]
    %v177 = vld [vmem:[#allocation4] sm:$0xff]
    %v178 = vld [vmem:[#allocation4 + $0x8] sm:$0xf]
    %v179 = vunpack.c.l.bf16 %v177
    %v180 = vunpack.c.h.bf16 %v177
    %v181 = vunpack.c.l.bf16 %v178
    %v182 = vld [vmem:[#allocation7] sm:$0xff]
    %v183 = vld [vmem:[#allocation7 + $0x8] sm:$0xf]
    %v184 = vunpack.c.l.bf16 %v182
    %v185 = vunpack.c.h.bf16 %v182
    %v186 = vunpack.c.l.bf16 %v183
    %v187 = vpack.c.bf16 %v175, %v175
    %v220 = vunpack.c.l.b16 %v96
    %v221 = vunpack.c.h.b16 %v96
    %v222 = vunpack.c.l.b16 %v97
    %v223 = vunpack.c.l.b16 %v98
    %v224 = vunpack.c.h.b16 %v98
    %v225 = vunpack.c.l.b16 %v99
    %v226 = vunpack.c.l.b16 %v100
    %v227 = vunpack.c.h.b16 %v100
    %v228 = vunpack.c.l.b16 %v101
    %v229 = vunpack.c.l.b16 %v102
    %v230 = vunpack.c.h.b16 %v102
    %v231 = vunpack.c.l.b16 %v103
    %v232 = vunpack.c.l.b16 %v104
    %v233 = vunpack.c.h.b16 %v104
    %v234 = vunpack.c.l.b16 %v105
    %v235 = vunpack.c.l.b16 %v106
    %v236 = vunpack.c.h.b16 %v106
    %v237 = vunpack.c.l.b16 %v107
    %v238 = vunpack.c.l.b16 %v108
    %v239 = vunpack.c.h.b16 %v108
    %v240 = vunpack.c.l.b16 %v109
    %v241 = vunpack.c.l.b16 %v110
    %v242 = vunpack.c.h.b16 %v110
    %v243 = vunpack.c.l.b16 %v111
    %v244 = vunpack.c.l.b16 %v112
    %v245 = vunpack.c.h.b16 %v112
    %v246 = vunpack.c.l.b16 %v113
    %v247 = vunpack.c.l.b16 %v114
    %v248 = vunpack.c.h.b16 %v114
    %v249 = vunpack.c.l.b16 %v115
    %v250 = vunpack.c.l.b16 %v116
    %v251 = vunpack.c.h.b16 %v116
    %v252 = vunpack.c.l.b16 %v117
    %v253 = vunpack.c.l.b16 %v118
    %v254 = vunpack.c.h.b16 %v118
    %v255 = vunpack.c.l.b16 %v119
    %v256 = vunpack.c.l.b16 %v120
    %v257 = vunpack.c.h.b16 %v120
    %v258 = vunpack.c.l.b16 %v121
    %v259 = vunpack.c.l.b16 %v122
    %v260 = vunpack.c.h.b16 %v122
    %v261 = vunpack.c.l.b16 %v123
    %v262 = vunpack.c.l.b16 %v124
    %v263 = vunpack.c.h.b16 %v124
    %v264 = vunpack.c.l.b16 %v125
    %v265 = vunpack.c.l.b16 %v126
    %v266 = vunpack.c.h.b16 %v126
    %v267 = vunpack.c.l.b16 %v127
    %v268 = vpack.c.b16 %v223, %v220
    %v269 = vpack.c.b16 %v224, %v221
    %v270 = vpack.c.b16 %v225, %v222
    %v271 = vpack.c.b16 %v229, %v226
    %v272 = vpack.c.b16 %v230, %v227
    %v273 = vpack.c.b16 %v231, %v228
    %v274 = vpack.c.b16 %v235, %v232
    %v275 = vpack.c.b16 %v236, %v233
    %v276 = vpack.c.b16 %v237, %v234
    %v277 = vpack.c.b16 %v241, %v238
    %v278 = vpack.c.b16 %v242, %v239
    %v279 = vpack.c.b16 %v243, %v240
    %v280 = vpack.c.b16 %v247, %v244
    %v281 = vpack.c.b16 %v248, %v245
    %v282 = vpack.c.b16 %v249, %v246
    %v283 = vpack.c.b16 %v253, %v250
    %v284 = vpack.c.b16 %v254, %v251
    %v285 = vpack.c.b16 %v255, %v252
    %v286 = vpack.c.b16 %v259, %v256
    %v287 = vpack.c.b16 %v260, %v257
    %v288 = vpack.c.b16 %v261, %v258
    %v289 = vpack.c.b16 %v265, %v262
    %v290 = vpack.c.b16 %v266, %v263
    %v291 = vpack.c.b16 %v267, %v264
    %316 = vmatprep.subr.bf16.mxu0 %v269
    %317 = vmatpush1.bf16.msra.mxu0 %v268
    %318 = vmatprep.subr.bf16.mxu0 %v272
    %319 = vmatpush1.bf16.msra.mxu0 %v271
    %320 = vmatprep.subr.bf16.mxu0 %v275
    %321 = vmatpush1.bf16.msra.mxu0 %v274
    %322 = vmatprep.subr.bf16.mxu0 %v278
    %323 = vmatpush1.bf16.msra.mxu0 %v277
    %324 = vmatprep.subr.bf16.mxu0 %v281
    %325 = vmatpush1.bf16.msra.mxu0 %v280
    %326 = vmatprep.subr.bf16.mxu0 %v284
    %327 = vmatpush1.bf16.msra.mxu0 %v283
    %328 = vmatprep.subr.bf16.mxu0 %v287
    %329 = vmatpush1.bf16.msra.mxu0 %v286
    %330 = vmatprep.subr.bf16.mxu0 %v290
    %331 = vmatpush1.bf16.msra.mxu0 %v289
    %332 = vmatprep.subr.bf16.mxu0 0
    %333 = vmatpush1.bf16.msra.mxu0 0
    %334 = vmatprep.subr.bf16.mxu0 0
    %335 = vmatpush1.bf16.msra.mxu0 0
    %336 = vmatprep.subr.bf16.mxu0 0
    %337 = vmatpush1.bf16.msra.mxu0 0
    %338 = vmatprep.subr.bf16.mxu0 0
    %339 = vmatpush1.bf16.msra.mxu0 0
    %340 = vmatprep.subr.bf16.mxu0 0
    %341 = vmatpush1.bf16.msra.mxu0 0
    %342 = vmatprep.subr.bf16.mxu0 0
    %343 = vmatpush1.bf16.msra.mxu0 0
    %344 = vmatprep.subr.bf16.mxu0 0
    %345 = vmatpush1.bf16.msra.mxu0 0
    %346 = vmatprep.subr.bf16.mxu0 0
    %347 = vmatpush1.bf16.msra.mxu0 0
    %348 = vmatprep.mubr.bf16.mxu0 0
    %349 = vmatmul.mubr.bf16.gmra.mrb[0].mxu0 %v187
    %v350 = vpop.f32.mrb[0].mxu0
    %v351 = vadd.f32 0.0, %v350
    %v352 = vpop.f32.mrb[0].mxu0
    %v353 = vadd.f32 0.0, %v352
    %v354 = vpop.f32.mrb[0].mxu0
    %v355 = vpop.f32.mrb[0].mxu0
    %356 = vdwg.mxu0
    %357 = vmatprep.subr.bf16.mxu0 0
    %358 = vmatpush1.bf16.msra.mxu0 %v270
    %359 = vmatprep.subr.bf16.mxu0 0
    %360 = vmatpush1.bf16.msra.mxu0 %v273
    %361 = vmatprep.subr.bf16.mxu0 0
    %362 = vmatpush1.bf16.msra.mxu0 %v276
    %363 = vmatprep.subr.bf16.mxu0 0
    %364 = vmatpush1.bf16.msra.mxu0 %v279
    %365 = vmatprep.subr.bf16.mxu0 0
    %366 = vmatpush1.bf16.msra.mxu0 %v282
    %367 = vmatprep.subr.bf16.mxu0 0
    %368 = vmatpush1.bf16.msra.mxu0 %v285
    %369 = vmatprep.subr.bf16.mxu0 0
    %370 = vmatpush1.bf16.msra.mxu0 %v288
    %371 = vmatprep.subr.bf16.mxu0 0
    %372 = vmatpush1.bf16.msra.mxu0 %v291
    %373 = vmatprep.subr.bf16.mxu0 0
    %374 = vmatpush1.bf16.msra.mxu0 0
    %375 = vmatprep.subr.bf16.mxu0 0
    %376 = vmatpush1.bf16.msra.mxu0 0
    %377 = vmatprep.subr.bf16.mxu0 0
    %378 = vmatpush1.bf16.msra.mxu0 0
    %379 = vmatprep.subr.bf16.mxu0 0
    %380 = vmatpush1.bf16.msra.mxu0 0
    %381 = vmatprep.subr.bf16.mxu0 0
    %382 = vmatpush1.bf16.msra.mxu0 0
    %383 = vmatprep.subr.bf16.mxu0 0
    %384 = vmatpush1.bf16.msra.mxu0 0
    %385 = vmatprep.subr.bf16.mxu0 0
    %386 = vmatpush1.bf16.msra.mxu0 0
    %387 = vmatprep.subr.bf16.mxu0 0
    %388 = vmatpush1.bf16.msra.mxu0 0
    %389 = vmatprep.mubr.bf16.mxu0 0
    %390 = vmatmul.mubr.bf16.gmra.mrb[0].mxu0 %v187
    %v391 = vpop.f32.mrb[0].mxu0
    %v392 = vadd.f32 0.0, %v391
    %v393 = vpop.f32.mrb[0].mxu0
    %v394 = vpop.f32.mrb[0].mxu0
    %v395 = vpop.f32.mrb[0].mxu0
    %396 = vdwg.mxu0
    %v397 = vpack.c.bf16 %v176, %v176
    %v430 = vunpack.c.l.b16 %v128
    %v431 = vunpack.c.h.b16 %v128
    %v432 = vunpack.c.l.b16 %v129
    %v433 = vunpack.c.l.b16 %v130
    %v434 = vunpack.c.h.b16 %v130
    %v435 = vunpack.c.l.b16 %v131
    %v436 = vunpack.c.l.b16 %v132
    %v437 = vunpack.c.h.b16 %v132
    %v438 = vunpack.c.l.b16 %v133
    %v439 = vunpack.c.l.b16 %v134
    %v440 = vunpack.c.h.b16 %v134
    %v441 = vunpack.c.l.b16 %v135
    %v442 = vunpack.c.l.b16 %v136
    %v443 = vunpack.c.h.b16 %v136
    %v444 = vunpack.c.l.b16 %v137
    %v445 = vunpack.c.l.b16 %v138
    %v446 = vunpack.c.h.b16 %v138
    %v447 = vunpack.c.l.b16 %v139
    %v448 = vunpack.c.l.b16 %v140
    %v449 = vunpack.c.h.b16 %v140
    %v450 = vunpack.c.l.b16 %v141
    %v451 = vunpack.c.l.b16 %v142
    %v452 = vunpack.c.h.b16 %v142
    %v453 = vunpack.c.l.b16 %v143
    %v454 = vunpack.c.l.b16 %v144
    %v455 = vunpack.c.h.b16 %v144
    %v456 = vunpack.c.l.b16 %v145
    %v457 = vunpack.c.l.b16 %v146
    %v458 = vunpack.c.h.b16 %v146
    %v459 = vunpack.c.l.b16 %v147
    %v460 = vunpack.c.l.b16 %v148
    %v461 = vunpack.c.h.b16 %v148
    %v462 = vunpack.c.l.b16 %v149
    %v463 = vunpack.c.l.b16 %v150
    %v464 = vunpack.c.h.b16 %v150
    %v465 = vunpack.c.l.b16 %v151
    %v466 = vunpack.c.l.b16 %v152
    %v467 = vunpack.c.h.b16 %v152
    %v468 = vunpack.c.l.b16 %v153
    %v469 = vunpack.c.l.b16 %v154
    %v470 = vunpack.c.h.b16 %v154
    %v471 = vunpack.c.l.b16 %v155
    %v472 = vunpack.c.l.b16 %v156
    %v473 = vunpack.c.h.b16 %v156
    %v474 = vunpack.c.l.b16 %v157
    %v475 = vunpack.c.l.b16 %v158
    %v476 = vunpack.c.h.b16 %v158
    %v477 = vunpack.c.l.b16 %v159
    %v478 = vpack.c.b16 %v433, %v430
    %v479 = vpack.c.b16 %v434, %v431
    %v480 = vpack.c.b16 %v435, %v432
    %v481 = vpack.c.b16 %v439, %v436
    %v482 = vpack.c.b16 %v440, %v437
    %v483 = vpack.c.b16 %v441, %v438
    %v484 = vpack.c.b16 %v445, %v442
    %v485 = vpack.c.b16 %v446, %v443
    %v486 = vpack.c.b16 %v447, %v444
    %v487 = vpack.c.b16 %v451, %v448
    %v488 = vpack.c.b16 %v452, %v449
    %v489 = vpack.c.b16 %v453, %v450
    %v490 = vpack.c.b16 %v457, %v454
    %v491 = vpack.c.b16 %v458, %v455
    %v492 = vpack.c.b16 %v459, %v456
    %v493 = vpack.c.b16 %v463, %v460
    %v494 = vpack.c.b16 %v464, %v461
    %v495 = vpack.c.b16 %v465, %v462
    %v496 = vpack.c.b16 %v469, %v466
    %v497 = vpack.c.b16 %v470, %v467
    %v498 = vpack.c.b16 %v471, %v468
    %v499 = vpack.c.b16 %v475, %v472
    %v500 = vpack.c.b16 %v476, %v473
    %v501 = vpack.c.b16 %v477, %v474
    %526 = vmatprep.subr.bf16.mxu0 %v479
    %527 = vmatpush1.bf16.msra.mxu0 %v478
    %528 = vmatprep.subr.bf16.mxu0 %v482
    %529 = vmatpush1.bf16.msra.mxu0 %v481
    %530 = vmatprep.subr.bf16.mxu0 %v485
    %531 = vmatpush1.bf16.msra.mxu0 %v484
    %532 = vmatprep.subr.bf16.mxu0 %v488
    %533 = vmatpush1.bf16.msra.mxu0 %v487
    %534 = vmatprep.subr.bf16.mxu0 %v491
    %535 = vmatpush1.bf16.msra.mxu0 %v490
    %536 = vmatprep.subr.bf16.mxu0 %v494
    %537 = vmatpush1.bf16.msra.mxu0 %v493
    %538 = vmatprep.subr.bf16.mxu0 %v497
    %539 = vmatpush1.bf16.msra.mxu0 %v496
    %540 = vmatprep.subr.bf16.mxu0 %v500
    %541 = vmatpush1.bf16.msra.mxu0 %v499
    %542 = vmatprep.subr.bf16.mxu0 0
    %543 = vmatpush1.bf16.msra.mxu0 0
    %544 = vmatprep.subr.bf16.mxu0 0
    %545 = vmatpush1.bf16.msra.mxu0 0
    %546 = vmatprep.subr.bf16.mxu0 0
    %547 = vmatpush1.bf16.msra.mxu0 0
    %548 = vmatprep.subr.bf16.mxu0 0
    %549 = vmatpush1.bf16.msra.mxu0 0
    %550 = vmatprep.subr.bf16.mxu0 0
    %551 = vmatpush1.bf16.msra.mxu0 0
    %552 = vmatprep.subr.bf16.mxu0 0
    %553 = vmatpush1.bf16.msra.mxu0 0
    %554 = vmatprep.subr.bf16.mxu0 0
    %555 = vmatpush1.bf16.msra.mxu0 0
    %556 = vmatprep.subr.bf16.mxu0 0
    %557 = vmatpush1.bf16.msra.mxu0 0
    %558 = vmatprep.mubr.bf16.mxu0 0
    %559 = vmatmul.mubr.bf16.gmra.mrb[0].mxu0 %v397
    %v560 = vpop.f32.mrb[0].mxu0
    %v561 = vadd.f32 0.0, %v560
    %v562 = vpop.f32.mrb[0].mxu0
    %v563 = vadd.f32 0.0, %v562
    %v564 = vpop.f32.mrb[0].mxu0
    %v565 = vpop.f32.mrb[0].mxu0
    %566 = vdwg.mxu0
    %567 = vmatprep.subr.bf16.mxu0 0
    %568 = vmatpush1.bf16.msra.mxu0 %v480
    %569 = vmatprep.subr.bf16.mxu0 0
    %570 = vmatpush1.bf16.msra.mxu0 %v483
    %571 = vmatprep.subr.bf16.mxu0 0
    %572 = vmatpush1.bf16.msra.mxu0 %v486
    %573 = vmatprep.subr.bf16.mxu0 0
    %574 = vmatpush1.bf16.msra.mxu0 %v489
    %575 = vmatprep.subr.bf16.mxu0 0
    %576 = vmatpush1.bf16.msra.mxu0 %v492
    %577 = vmatprep.subr.bf16.mxu0 0
    %578 = vmatpush1.bf16.msra.mxu0 %v495
    %579 = vmatprep.subr.bf16.mxu0 0
    %580 = vmatpush1.bf16.msra.mxu0 %v498
    %581 = vmatprep.subr.bf16.mxu0 0
    %582 = vmatpush1.bf16.msra.mxu0 %v501
    %583 = vmatprep.subr.bf16.mxu0 0
    %584 = vmatpush1.bf16.msra.mxu0 0
    %585 = vmatprep.subr.bf16.mxu0 0
    %586 = vmatpush1.bf16.msra.mxu0 0
    %587 = vmatprep.subr.bf16.mxu0 0
    %588 = vmatpush1.bf16.msra.mxu0 0
    %589 = vmatprep.subr.bf16.mxu0 0
    %590 = vmatpush1.bf16.msra.mxu0 0
    %591 = vmatprep.subr.bf16.mxu0 0
    %592 = vmatpush1.bf16.msra.mxu0 0
    %593 = vmatprep.subr.bf16.mxu0 0
    %594 = vmatpush1.bf16.msra.mxu0 0
    %595 = vmatprep.subr.bf16.mxu0 0
    %596 = vmatpush1.bf16.msra.mxu0 0
    %597 = vmatprep.subr.bf16.mxu0 0
    %598 = vmatpush1.bf16.msra.mxu0 0
    %599 = vmatprep.mubr.bf16.mxu0 0
    %600 = vmatmul.mubr.bf16.gmra.mrb[0].mxu0 %v397
    %v601 = vpop.f32.mrb[0].mxu0
    %v602 = vadd.f32 0.0, %v601
    %v603 = vpop.f32.mrb[0].mxu0
    %v604 = vpop.f32.mrb[0].mxu0
    %v605 = vpop.f32.mrb[0].mxu0
    %606 = vdwg.mxu0
    %v607 = vadd.f32 %v179, %v351
    %v608 = vxor.u32 %v607, 2147483648
    %v609 = vmul.f32 %v608, 1.442695
    %v610 = vpow.pop %v609
    %v611 = vadd.f32 %v610, 1.0
    %v612 = vrcp.pop %v611
    %v613 = vmul.f32 1.0, %v612
    %v614 = vadd.f32 %v180, %v353
    %v615 = vxor.u32 %v614, 2147483648
    %v616 = vmul.f32 %v615, 1.442695
    %v617 = vpow.pop %v616
    %v618 = vadd.f32 %v617, 1.0
    %v619 = vrcp.pop %v618
    %v620 = vmul.f32 1.0, %v619
    %v621 = vadd.f32 %v392, %v165
    %v622 = vmul.f32 %v613, %v621
    %v623 = vadd.f32 %v181, %v622
    %v624 = vtanh.pop %v623
    %v625 = vsub.f32 1.0, %v620
    %v626 = vmul.f32 %v625, %v624
    %v627 = vmul.f32 %v620, %v175
    %v628 = vadd.f32 %v626, %v627
    %v629 = vadd.f32 %v184, %v561
    %v630 = vxor.u32 %v629, 2147483648
    %v631 = vmul.f32 %v630, 1.442695
    %v632 = vpow.pop %v631
    %v633 = vadd.f32 %v632, 1.0
    %v634 = vrcp.pop %v633
    %v635 = vmul.f32 1.0, %v634
    %v636 = vadd.f32 %v185, %v563
    %v637 = vxor.u32 %v636, 2147483648
    %v638 = vmul.f32 %v637, 1.442695
    %v639 = vpow.pop %v638
    %v640 = vadd.f32 %v639, 1.0
    %v641 = vrcp.pop %v640
    %v642 = vmul.f32 1.0, %v641
    %v643 = vadd.f32 %v602, %v172
    %v644 = vmul.f32 %v635, %v643
    %v645 = vadd.f32 %v186, %v644
    %v646 = vtanh.pop %v645
    %v647 = vsub.f32 1.0, %v642
    %v648 = vmul.f32 %v647, %v646
    %v649 = vmul.f32 %v642, %v176
    %v650 = vadd.f32 %v648, %v649
    %v651 = vstv %s174
    %vm652 = vcmp.lt.s32.totalorder %v651, %v95
    %s653 = ssub.s32 7, %s174
    %v654 = vstv %s653
    %vm655 = vcmp.lt.s32.totalorder %v654, %v95
    %v656 = vsel %vm652, 1, 0
    %657 = vset.pattern.permute.xlu0 0
    %658 = vperm.xlu0 %657, %v656
    %v659 = vpop.permute.xlu0 %658
    %vm660 = vcmp.eq.s32.totalorder %v659, 1
    %v661 = vsel %vm660, %v628, 0.0
    %662 = vst [vmem:[#allocation12] sm:$0xff] %v661
    %v663 = vsel %vm655, 1, 0
    %664 = vset.pattern.permute.xlu0 0
    %665 = vperm.xlu0 %664, %v663
    %v666 = vpop.permute.xlu0 %665
    %vm667 = vcmp.eq.s32.totalorder %v666, 1
    %v668 = vsel %vm667, %v650, 0.0
    %s669 = scalar_lea.vmem [#allocation13], 56
    %670 = vst [vmem:[%s669] sm:$0xff] %v668
    %v671 = vsel %vm660, %v628, %v175
    %v672 = vsel %vm667, %v650, %v176
    %s673 = scalar_lea.vmem [#allocation4], 12
    %v674 = vld [vmem:[%s673] sm:$0xff]
    %v675 = vld [vmem:[%s673 + $0x8] sm:$0xf]
    %v676 = vunpack.c.l.bf16 %v674
    %v677 = vunpack.c.h.bf16 %v674
    %v678 = vunpack.c.l.bf16 %v675
    %s679 = scalar_lea.vmem [#allocation7], 12
    %v680 = vld [vmem:[%s679] sm:$0xff]
    %v681 = vld [vmem:[%s679 + $0x8] sm:$0xf]
    %v682 = vunpack.c.l.bf16 %v680
    %v683 = vunpack.c.h.bf16 %v680
    %v684 = vunpack.c.l.bf16 %v681
    %v685 = vpack.c.bf16 %v671, %v671
    %686 = vmatprep.subr.bf16.mxu0 %v269
    %687 = vmatpush1.bf16.msra.mxu0 %v268
    %688 = vmatprep.subr.bf16.mxu0 %v272
    %689 = vmatpush1.bf16.msra.mxu0 %v271
    %690 = vmatprep.subr.bf16.mxu0 %v275
    %691 = vmatpush1.bf16.msra.mxu0 %v274
    %692 = vmatprep.subr.bf16.mxu0 %v278
    %693 = vmatpush1.bf16.msra.mxu0 %v277
    %694 = vmatprep.subr.bf16.mxu0 %v281
    %695 = vmatpush1.bf16.msra.mxu0 %v280
    %696 = vmatprep.subr.bf16.mxu0 %v284
    %697 = vmatpush1.bf16.msra.mxu0 %v283
    %698 = vmatprep.subr.bf16.mxu0 %v287
    %699 = vmatpush1.bf16.msra.mxu0 %v286
    %700 = vmatprep.subr.bf16.mxu0 %v290
    %701 = vmatpush1.bf16.msra.mxu0 %v289
    %702 = vmatprep.subr.bf16.mxu0 0
    %703 = vmatpush1.bf16.msra.mxu0 0
    %704 = vmatprep.subr.bf16.mxu0 0
    %705 = vmatpush1.bf16.msra.mxu0 0
    %706 = vmatprep.subr.bf16.mxu0 0
    %707 = vmatpush1.bf16.msra.mxu0 0
    %708 = vmatprep.subr.bf16.mxu0 0
    %709 = vmatpush1.bf16.msra.mxu0 0
    %710 = vmatprep.subr.bf16.mxu0 0
    %711 = vmatpush1.bf16.msra.mxu0 0
    %712 = vmatprep.subr.bf16.mxu0 0
    %713 = vmatpush1.bf16.msra.mxu0 0
    %714 = vmatprep.subr.bf16.mxu0 0
    %715 = vmatpush1.bf16.msra.mxu0 0
    %716 = vmatprep.subr.bf16.mxu0 0
    %717 = vmatpush1.bf16.msra.mxu0 0
    %718 = vmatprep.mubr.bf16.mxu0 0
    %719 = vmatmul.mubr.bf16.gmra.mrb[0].mxu0 %v685
    %v720 = vpop.f32.mrb[0].mxu0
    %v721 = vadd.f32 0.0, %v720
    %v722 = vpop.f32.mrb[0].mxu0
    %v723 = vadd.f32 0.0, %v722
    %v724 = vpop.f32.mrb[0].mxu0
    %v725 = vpop.f32.mrb[0].mxu0
    %726 = vdwg.mxu0
    %727 = vmatprep.subr.bf16.mxu0 0
    %728 = vmatpush1.bf16.msra.mxu0 %v270
    %729 = vmatprep.subr.bf16.mxu0 0
    %730 = vmatpush1.bf16.msra.mxu0 %v273
    %731 = vmatprep.subr.bf16.mxu0 0
    %732 = vmatpush1.bf16.msra.mxu0 %v276
    %733 = vmatprep.subr.bf16.mxu0 0
    %734 = vmatpush1.bf16.msra.mxu0 %v279
    %735 = vmatprep.subr.bf16.mxu0 0
    %736 = vmatpush1.bf16.msra.mxu0 %v282
    %737 = vmatprep.subr.bf16.mxu0 0
    %738 = vmatpush1.bf16.msra.mxu0 %v285
    %739 = vmatprep.subr.bf16.mxu0 0
    %740 = vmatpush1.bf16.msra.mxu0 %v288
    %741 = vmatprep.subr.bf16.mxu0 0
    %742 = vmatpush1.bf16.msra.mxu0 %v291
    %743 = vmatprep.subr.bf16.mxu0 0
    %744 = vmatpush1.bf16.msra.mxu0 0
    %745 = vmatprep.subr.bf16.mxu0 0
    %746 = vmatpush1.bf16.msra.mxu0 0
    %747 = vmatprep.subr.bf16.mxu0 0
    %748 = vmatpush1.bf16.msra.mxu0 0
    %749 = vmatprep.subr.bf16.mxu0 0
    %750 = vmatpush1.bf16.msra.mxu0 0
    %751 = vmatprep.subr.bf16.mxu0 0
    %752 = vmatpush1.bf16.msra.mxu0 0
    %753 = vmatprep.subr.bf16.mxu0 0
    %754 = vmatpush1.bf16.msra.mxu0 0
    %755 = vmatprep.subr.bf16.mxu0 0
    %756 = vmatpush1.bf16.msra.mxu0 0
    %757 = vmatprep.subr.bf16.mxu0 0
    %758 = vmatpush1.bf16.msra.mxu0 0
    %759 = vmatprep.mubr.bf16.mxu0 0
    %760 = vmatmul.mubr.bf16.gmra.mrb[0].mxu0 %v685
    %v761 = vpop.f32.mrb[0].mxu0
    %v762 = vadd.f32 0.0, %v761
    %v763 = vpop.f32.mrb[0].mxu0
    %v764 = vpop.f32.mrb[0].mxu0
    %v765 = vpop.f32.mrb[0].mxu0
    %766 = vdwg.mxu0
    %v767 = vpack.c.bf16 %v672, %v672
    %768 = vmatprep.subr.bf16.mxu0 %v479
    %769 = vmatpush1.bf16.msra.mxu0 %v478
    %770 = vmatprep.subr.bf16.mxu0 %v482
    %771 = vmatpush1.bf16.msra.mxu0 %v481
    %772 = vmatprep.subr.bf16.mxu0 %v485
    %773 = vmatpush1.bf16.msra.mxu0 %v484
    %774 = vmatprep.subr.bf16.mxu0 %v488
    %775 = vmatpush1.bf16.msra.mxu0 %v487
    %776 = vmatprep.subr.bf16.mxu0 %v491
    %777 = vmatpush1.bf16.msra.mxu0 %v490
    %778 = vmatprep.subr.bf16.mxu0 %v494
    %779 = vmatpush1.bf16.msra.mxu0 %v493
    %780 = vmatprep.subr.bf16.mxu0 %v497
    %781 = vmatpush1.bf16.msra.mxu0 %v496
    %782 = vmatprep.subr.bf16.mxu0 %v500
    %783 = vmatpush1.bf16.msra.mxu0 %v499
    %784 = vmatprep.subr.bf16.mxu0 0
    %785 = vmatpush1.bf16.msra.mxu0 0
    %786 = vmatprep.subr.bf16.mxu0 0
    %787 = vmatpush1.bf16.msra.mxu0 0
    %788 = vmatprep.subr.bf16.mxu0 0
    %789 = vmatpush1.bf16.msra.mxu0 0
    %790 = vmatprep.subr.bf16.mxu0 0
    %791 = vmatpush1.bf16.msra.mxu0 0
    %792 = vmatprep.subr.bf16.mxu0 0
    %793 = vmatpush1.bf16.msra.mxu0 0
    %794 = vmatprep.subr.bf16.mxu0 0
    %795 = vmatpush1.bf16.msra.mxu0 0
    %796 = vmatprep.subr.bf16.mxu0 0
    %797 = vmatpush1.bf16.msra.mxu0 0
    %798 = vmatprep.subr.bf16.mxu0 0
    %799 = vmatpush1.bf16.msra.mxu0 0
    %800 = vmatprep.mubr.bf16.mxu0 0
    %801 = vmatmul.mubr.bf16.gmra.mrb[0].mxu0 %v767
    %v802 = vpop.f32.mrb[0].mxu0
    %v803 = vadd.f32 0.0, %v802
    %v804 = vpop.f32.mrb[0].mxu0
    %v805 = vadd.f32 0.0, %v804
    %v806 = vpop.f32.mrb[0].mxu0
    %v807 = vpop.f32.mrb[0].mxu0
    %808 = vdwg.mxu0
    %809 = vmatprep.subr.bf16.mxu0 0
    %810 = vmatpush1.bf16.msra.mxu0 %v480
    %811 = vmatprep.subr.bf16.mxu0 0
    %812 = vmatpush1.bf16.msra.mxu0 %v483
    %813 = vmatprep.subr.bf16.mxu0 0
    %814 = vmatpush1.bf16.msra.mxu0 %v486
    %815 = vmatprep.subr.bf16.mxu0 0
    %816 = vmatpush1.bf16.msra.mxu0 %v489
    %817 = vmatprep.subr.bf16.mxu0 0
    %818 = vmatpush1.bf16.msra.mxu0 %v492
    %819 = vmatprep.subr.bf16.mxu0 0
    %820 = vmatpush1.bf16.msra.mxu0 %v495
    %821 = vmatprep.subr.bf16.mxu0 0
    %822 = vmatpush1.bf16.msra.mxu0 %v498
    %823 = vmatprep.subr.bf16.mxu0 0
    %824 = vmatpush1.bf16.msra.mxu0 %v501
    %825 = vmatprep.subr.bf16.mxu0 0
    %826 = vmatpush1.bf16.msra.mxu0 0
    %827 = vmatprep.subr.bf16.mxu0 0
    %828 = vmatpush1.bf16.msra.mxu0 0
    %829 = vmatprep.subr.bf16.mxu0 0
    %830 = vmatpush1.bf16.msra.mxu0 0
    %831 = vmatprep.subr.bf16.mxu0 0
    %832 = vmatpush1.bf16.msra.mxu0 0
    %833 = vmatprep.subr.bf16.mxu0 0
    %834 = vmatpush1.bf16.msra.mxu0 0
    %835 = vmatprep.subr.bf16.mxu0 0
    %836 = vmatpush1.bf16.msra.mxu0 0
    %837 = vmatprep.subr.bf16.mxu0 0
    %838 = vmatpush1.bf16.msra.mxu0 0
    %839 = vmatprep.subr.bf16.mxu0 0
    %840 = vmatpush1.bf16.msra.mxu0 0
    %841 = vmatprep.mubr.bf16.mxu0 0
    %842 = vmatmul.mubr.bf16.gmra.mrb[0].mxu0 %v767
    %v843 = vpop.f32.mrb[0].mxu0
    %v844 = vadd.f32 0.0, %v843
    %v845 = vpop.f32.mrb[0].mxu0
    %v846 = vpop.f32.mrb[0].mxu0
    %v847 = vpop.f32.mrb[0].mxu0
    %848 = vdwg.mxu0
    %v849 = vadd.f32 %v676, %v721
    %v850 = vxor.u32 %v849, 2147483648
    %v851 = vmul.f32 %v850, 1.442695
    %v852 = vpow.pop %v851
    %v853 = vadd.f32 %v852, 1.0
    %v854 = vrcp.pop %v853
    %v855 = vmul.f32 1.0, %v854
    %v856 = vadd.f32 %v677, %v723
    %v857 = vxor.u32 %v856, 2147483648
    %v858 = vmul.f32 %v857, 1.442695
    %v859 = vpow.pop %v858
    %v860 = vadd.f32 %v859, 1.0
    %v861 = vrcp.pop %v860
    %v862 = vmul.f32 1.0, %v861
    %v863 = vadd.f32 %v762, %v165
    %v864 = vmul.f32 %v855, %v863
    %v865 = vadd.f32 %v678, %v864
    %v866 = vtanh.pop %v865
    %v867 = vsub.f32 1.0, %v862
    %v868 = vmul.f32 %v867, %v866
    %v869 = vmul.f32 %v862, %v671
    %v870 = vadd.f32 %v868, %v869
    %v871 = vadd.f32 %v682, %v803
    %v872 = vxor.u32 %v871, 2147483648
    %v873 = vmul.f32 %v872, 1.442695
    %v874 = vpow.pop %v873
    %v875 = vadd.f32 %v874, 1.0
    %v876 = vrcp.pop %v875
    %v877 = vmul.f32 1.0, %v876
    %v878 = vadd.f32 %v683, %v805
    %v879 = vxor.u32 %v878, 2147483648
    %v880 = vmul.f32 %v879, 1.442695
    %v881 = vpow.pop %v880
    %v882 = vadd.f32 %v881, 1.0
    %v883 = vrcp.pop %v882
    %v884 = vmul.f32 1.0, %v883
    %v885 = vadd.f32 %v844, %v172
    %v886 = vmul.f32 %v877, %v885
    %v887 = vadd.f32 %v684, %v886
    %v888 = vtanh.pop %v887
    %v889 = vsub.f32 1.0, %v884
    %v890 = vmul.f32 %v889, %v888
    %v891 = vmul.f32 %v884, %v672
    %v892 = vadd.f32 %v890, %v891
    %s893 = sadd.s32 %s174, 1
    %v894 = vstv %s893
    %vm895 = vcmp.lt.s32.totalorder %v894, %v95
    %s896 = ssub.s32 6, %s174
    %v897 = vstv %s896
    %vm898 = vcmp.lt.s32.totalorder %v897, %v95
    %v899 = vsel %vm895, 1, 0
    %900 = vset.pattern.permute.xlu0 0
    %901 = vperm.xlu0 %900, %v899
    %v902 = vpop.permute.xlu0 %901
    %vm903 = vcmp.eq.s32.totalorder %v902, 1
    %v904 = vsel %vm903, %v870, 0.0
    %s905 = scalar_lea.vmem [#allocation12], 8
    %906 = vst [vmem:[%s905] sm:$0xff] %v904
    %v907 = vsel %vm898, 1, 0
    %908 = vset.pattern.permute.xlu0 0
    %909 = vperm.xlu0 %908, %v907
    %v910 = vpop.permute.xlu0 %909
    %vm911 = vcmp.eq.s32.totalorder %v910, 1
    %v912 = vsel %vm911, %v892, 0.0
    %s913 = scalar_lea.vmem [#allocation13], 48
    %914 = vst [vmem:[%s913] sm:$0xff] %v912
    %v915 = vsel %vm903, %v870, %v671
    %v916 = vsel %vm911, %v892, %v672
    %s917 = scalar_lea.vmem [#allocation4], 24
    %v918 = vld [vmem:[%s917] sm:$0xff]
    %v919 = vld [vmem:[%s917 + $0x8] sm:$0xf]
    %v920 = vunpack.c.l.bf16 %v918
    %v921 = vunpack.c.h.bf16 %v918
    %v922 = vunpack.c.l.bf16 %v919
    %s923 = scalar_lea.vmem [#allocation7], 24
    %v924 = vld [vmem:[%s923] sm:$0xff]
    %v925 = vld [vmem:[%s923 + $0x8] sm:$0xf]
    %v926 = vunpack.c.l.bf16 %v924
    %v927 = vunpack.c.h.bf16 %v924
    %v928 = vunpack.c.l.bf16 %v925
    %v929 = vpack.c.bf16 %v915, %v915
    %930 = vmatprep.subr.bf16.mxu0 %v269
    %931 = vmatpush1.bf16.msra.mxu0 %v268
    %932 = vmatprep.subr.bf16.mxu0 %v272
    %933 = vmatpush1.bf16.msra.mxu0 %v271
    %934 = vmatprep.subr.bf16.mxu0 %v275
    %935 = vmatpush1.bf16.msra.mxu0 %v274
    %936 = vmatprep.subr.bf16.mxu0 %v278
    %937 = vmatpush1.bf16.msra.mxu0 %v277
    %938 = vmatprep.subr.bf16.mxu0 %v281
    %939 = vmatpush1.bf16.msra.mxu0 %v280
    %940 = vmatprep.subr.bf16.mxu0 %v284
    %941 = vmatpush1.bf16.msra.mxu0 %v283
    %942 = vmatprep.subr.bf16.mxu0 %v287
    %943 = vmatpush1.bf16.msra.mxu0 %v286
    %944 = vmatprep.subr.bf16.mxu0 %v290
    %945 = vmatpush1.bf16.msra.mxu0 %v289
    %946 = vmatprep.subr.bf16.mxu0 0
    %947 = vmatpush1.bf16.msra.mxu0 0
    %948 = vmatprep.subr.bf16.mxu0 0
    %949 = vmatpush1.bf16.msra.mxu0 0
    %950 = vmatprep.subr.bf16.mxu0 0
    %951 = vmatpush1.bf16.msra.mxu0 0
    %952 = vmatprep.subr.bf16.mxu0 0
    %953 = vmatpush1.bf16.msra.mxu0 0
    %954 = vmatprep.subr.bf16.mxu0 0
    %955 = vmatpush1.bf16.msra.mxu0 0
    %956 = vmatprep.subr.bf16.mxu0 0
    %957 = vmatpush1.bf16.msra.mxu0 0
    %958 = vmatprep.subr.bf16.mxu0 0
    %959 = vmatpush1.bf16.msra.mxu0 0
    %960 = vmatprep.subr.bf16.mxu0 0
    %961 = vmatpush1.bf16.msra.mxu0 0
    %962 = vmatprep.mubr.bf16.mxu0 0
    %963 = vmatmul.mubr.bf16.gmra.mrb[0].mxu0 %v929
    %v964 = vpop.f32.mrb[0].mxu0
    %v965 = vadd.f32 0.0, %v964
    %v966 = vpop.f32.mrb[0].mxu0
    %v967 = vadd.f32 0.0, %v966
    %v968 = vpop.f32.mrb[0].mxu0
    %v969 = vpop.f32.mrb[0].mxu0
    %970 = vdwg.mxu0
    %971 = vmatprep.subr.bf16.mxu0 0
    %972 = vmatpush1.bf16.msra.mxu0 %v270
    %973 = vmatprep.subr.bf16.mxu0 0
    %974 = vmatpush1.bf16.msra.mxu0 %v273
    %975 = vmatprep.subr.bf16.mxu0 0
    %976 = vmatpush1.bf16.msra.mxu0 %v276
    %977 = vmatprep.subr.bf16.mxu0 0
    %978 = vmatpush1.bf16.msra.mxu0 %v279
    %979 = vmatprep.subr.bf16.mxu0 0
    %980 = vmatpush1.bf16.msra.mxu0 %v282
    %981 = vmatprep.subr.bf16.mxu0 0
    %982 = vmatpush1.bf16.msra.mxu0 %v285
    %983 = vmatprep.subr.bf16.mxu0 0
    %984 = vmatpush1.bf16.msra.mxu0 %v288
    %985 = vmatprep.subr.bf16.mxu0 0
    %986 = vmatpush1.bf16.msra.mxu0 %v291
    %987 = vmatprep.subr.bf16.mxu0 0
    %988 = vmatpush1.bf16.msra.mxu0 0
    %989 = vmatprep.subr.bf16.mxu0 0
    %990 = vmatpush1.bf16.msra.mxu0 0
    %991 = vmatprep.subr.bf16.mxu0 0
    %992 = vmatpush1.bf16.msra.mxu0 0
    %993 = vmatprep.subr.bf16.mxu0 0
    %994 = vmatpush1.bf16.msra.mxu0 0
    %995 = vmatprep.subr.bf16.mxu0 0
    %996 = vmatpush1.bf16.msra.mxu0 0
    %997 = vmatprep.subr.bf16.mxu0 0
    %998 = vmatpush1.bf16.msra.mxu0 0
    %999 = vmatprep.subr.bf16.mxu0 0
    %1000 = vmatpush1.bf16.msra.mxu0 0
    %1001 = vmatprep.subr.bf16.mxu0 0
    %1002 = vmatpush1.bf16.msra.mxu0 0
    %1003 = vmatprep.mubr.bf16.mxu0 0
    %1004 = vmatmul.mubr.bf16.gmra.mrb[0].mxu0 %v929
    %v1005 = vpop.f32.mrb[0].mxu0
    %v1006 = vadd.f32 0.0, %v1005
    %v1007 = vpop.f32.mrb[0].mxu0
    %v1008 = vpop.f32.mrb[0].mxu0
    %v1009 = vpop.f32.mrb[0].mxu0
    %1010 = vdwg.mxu0
    %v1011 = vpack.c.bf16 %v916, %v916
    %1012 = vmatprep.subr.bf16.mxu0 %v479
    %1013 = vmatpush1.bf16.msra.mxu0 %v478
    %1014 = vmatprep.subr.bf16.mxu0 %v482
    %1015 = vmatpush1.bf16.msra.mxu0 %v481
    %1016 = vmatprep.subr.bf16.mxu0 %v485
    %1017 = vmatpush1.bf16.msra.mxu0 %v484
    %1018 = vmatprep.subr.bf16.mxu0 %v488
    %1019 = vmatpush1.bf16.msra.mxu0 %v487
    %1020 = vmatprep.subr.bf16.mxu0 %v491
    %1021 = vmatpush1.bf16.msra.mxu0 %v490
    %1022 = vmatprep.subr.bf16.mxu0 %v494
    %1023 = vmatpush1.bf16.msra.mxu0 %v493
    %1024 = vmatprep.subr.bf16.mxu0 %v497
    %1025 = vmatpush1.bf16.msra.mxu0 %v496
    %1026 = vmatprep.subr.bf16.mxu0 %v500
    %1027 = vmatpush1.bf16.msra.mxu0 %v499
    %1028 = vmatprep.subr.bf16.mxu0 0
    %1029 = vmatpush1.bf16.msra.mxu0 0
    %1030 = vmatprep.subr.bf16.mxu0 0
    %1031 = vmatpush1.bf16.msra.mxu0 0
    %1032 = vmatprep.subr.bf16.mxu0 0
    %1033 = vmatpush1.bf16.msra.mxu0 0
    %1034 = vmatprep.subr.bf16.mxu0 0
    %1035 = vmatpush1.bf16.msra.mxu0 0
    %1036 = vmatprep.subr.bf16.mxu0 0
    %1037 = vmatpush1.bf16.msra.mxu0 0
    %1038 = vmatprep.subr.bf16.mxu0 0
    %1039 = vmatpush1.bf16.msra.mxu0 0
    %1040 = vmatprep.subr.bf16.mxu0 0
    %1041 = vmatpush1.bf16.msra.mxu0 0
    %1042 = vmatprep.subr.bf16.mxu0 0
    %1043 = vmatpush1.bf16.msra.mxu0 0
    %1044 = vmatprep.mubr.bf16.mxu0 0
    %1045 = vmatmul.mubr.bf16.gmra.mrb[0].mxu0 %v1011
    %v1046 = vpop.f32.mrb[0].mxu0
    %v1047 = vadd.f32 0.0, %v1046
    %v1048 = vpop.f32.mrb[0].mxu0
    %v1049 = vadd.f32 0.0, %v1048
    %v1050 = vpop.f32.mrb[0].mxu0
    %v1051 = vpop.f32.mrb[0].mxu0
    %1052 = vdwg.mxu0
    %1053 = vmatprep.subr.bf16.mxu0 0
    %1054 = vmatpush1.bf16.msra.mxu0 %v480
    %1055 = vmatprep.subr.bf16.mxu0 0
    %1056 = vmatpush1.bf16.msra.mxu0 %v483
    %1057 = vmatprep.subr.bf16.mxu0 0
    %1058 = vmatpush1.bf16.msra.mxu0 %v486
    %1059 = vmatprep.subr.bf16.mxu0 0
    %1060 = vmatpush1.bf16.msra.mxu0 %v489
    %1061 = vmatprep.subr.bf16.mxu0 0
    %1062 = vmatpush1.bf16.msra.mxu0 %v492
    %1063 = vmatprep.subr.bf16.mxu0 0
    %1064 = vmatpush1.bf16.msra.mxu0 %v495
    %1065 = vmatprep.subr.bf16.mxu0 0
    %1066 = vmatpush1.bf16.msra.mxu0 %v498
    %1067 = vmatprep.subr.bf16.mxu0 0
    %1068 = vmatpush1.bf16.msra.mxu0 %v501
    %1069 = vmatprep.subr.bf16.mxu0 0
    %1070 = vmatpush1.bf16.msra.mxu0 0
    %1071 = vmatprep.subr.bf16.mxu0 0
    %1072 = vmatpush1.bf16.msra.mxu0 0
    %1073 = vmatprep.subr.bf16.mxu0 0
    %1074 = vmatpush1.bf16.msra.mxu0 0
    %1075 = vmatprep.subr.bf16.mxu0 0
    %1076 = vmatpush1.bf16.msra.mxu0 0
    %1077 = vmatprep.subr.bf16.mxu0 0
    %1078 = vmatpush1.bf16.msra.mxu0 0
    %1079 = vmatprep.subr.bf16.mxu0 0
    %1080 = vmatpush1.bf16.msra.mxu0 0
    %1081 = vmatprep.subr.bf16.mxu0 0
    %1082 = vmatpush1.bf16.msra.mxu0 0
    %1083 = vmatprep.subr.bf16.mxu0 0
    %1084 = vmatpush1.bf16.msra.mxu0 0
    %1085 = vmatprep.mubr.bf16.mxu0 0
    %1086 = vmatmul.mubr.bf16.gmra.mrb[0].mxu0 %v1011
    %v1087 = vpop.f32.mrb[0].mxu0
    %v1088 = vadd.f32 0.0, %v1087
    %v1089 = vpop.f32.mrb[0].mxu0
    %v1090 = vpop.f32.mrb[0].mxu0
    %v1091 = vpop.f32.mrb[0].mxu0
    %1092 = vdwg.mxu0
    %v1093 = vadd.f32 %v920, %v965
    %v1094 = vxor.u32 %v1093, 2147483648
    %v1095 = vmul.f32 %v1094, 1.442695
    %v1096 = vpow.pop %v1095
    %v1097 = vadd.f32 %v1096, 1.0
    %v1098 = vrcp.pop %v1097
    %v1099 = vmul.f32 1.0, %v1098
    %v1100 = vadd.f32 %v921, %v967
    %v1101 = vxor.u32 %v1100, 2147483648
    %v1102 = vmul.f32 %v1101, 1.442695
    %v1103 = vpow.pop %v1102
    %v1104 = vadd.f32 %v1103, 1.0
    %v1105 = vrcp.pop %v1104
    %v1106 = vmul.f32 1.0, %v1105
    %v1107 = vadd.f32 %v1006, %v165
    %v1108 = vmul.f32 %v1099, %v1107
    %v1109 = vadd.f32 %v922, %v1108
    %v1110 = vtanh.pop %v1109
    %v1111 = vsub.f32 1.0, %v1106
    %v1112 = vmul.f32 %v1111, %v1110
    %v1113 = vmul.f32 %v1106, %v915
    %v1114 = vadd.f32 %v1112, %v1113
    %v1115 = vadd.f32 %v926, %v1047
    %v1116 = vxor.u32 %v1115, 2147483648
    %v1117 = vmul.f32 %v1116, 1.442695
    %v1118 = vpow.pop %v1117
    %v1119 = vadd.f32 %v1118, 1.0
    %v1120 = vrcp.pop %v1119
    %v1121 = vmul.f32 1.0, %v1120
    %v1122 = vadd.f32 %v927, %v1049
    %v1123 = vxor.u32 %v1122, 2147483648
    %v1124 = vmul.f32 %v1123, 1.442695
    %v1125 = vpow.pop %v1124
    %v1126 = vadd.f32 %v1125, 1.0
    %v1127 = vrcp.pop %v1126
    %v1128 = vmul.f32 1.0, %v1127
    %v1129 = vadd.f32 %v1088, %v172
    %v1130 = vmul.f32 %v1121, %v1129
    %v1131 = vadd.f32 %v928, %v1130
    %v1132 = vtanh.pop %v1131
    %v1133 = vsub.f32 1.0, %v1128
    %v1134 = vmul.f32 %v1133, %v1132
    %v1135 = vmul.f32 %v1128, %v916
    %v1136 = vadd.f32 %v1134, %v1135
    %s1137 = sadd.s32 %s174, 2
    %v1138 = vstv %s1137
    %vm1139 = vcmp.lt.s32.totalorder %v1138, %v95
    %s1140 = ssub.s32 5, %s174
    %v1141 = vstv %s1140
    %vm1142 = vcmp.lt.s32.totalorder %v1141, %v95
    %v1143 = vsel %vm1139, 1, 0
    %1144 = vset.pattern.permute.xlu0 0
    %1145 = vperm.xlu0 %1144, %v1143
    %v1146 = vpop.permute.xlu0 %1145
    %vm1147 = vcmp.eq.s32.totalorder %v1146, 1
    %v1148 = vsel %vm1147, %v1114, 0.0
    %s1149 = scalar_lea.vmem [#allocation12], 16
    %1150 = vst [vmem:[%s1149] sm:$0xff] %v1148
    %v1151 = vsel %vm1142, 1, 0
    %1152 = vset.pattern.permute.xlu0 0
    %1153 = vperm.xlu0 %1152, %v1151
    %v1154 = vpop.permute.xlu0 %1153
    %vm1155 = vcmp.eq.s32.totalorder %v1154, 1
    %v1156 = vsel %vm1155, %v1136, 0.0
    %s1157 = scalar_lea.vmem [#allocation13], 40
    %1158 = vst [vmem:[%s1157] sm:$0xff] %v1156
    %v1159 = vsel %vm1147, %v1114, %v915
    %v1160 = vsel %vm1155, %v1136, %v916
    %s1161 = scalar_lea.vmem [#allocation4], 36
    %v1162 = vld [vmem:[%s1161] sm:$0xff]
    %v1163 = vld [vmem:[%s1161 + $0x8] sm:$0xf]
    %v1164 = vunpack.c.l.bf16 %v1162
    %v1165 = vunpack.c.h.bf16 %v1162
    %v1166 = vunpack.c.l.bf16 %v1163
    %s1167 = scalar_lea.vmem [#allocation7], 36
    %v1168 = vld [vmem:[%s1167] sm:$0xff]
    %v1169 = vld [vmem:[%s1167 + $0x8] sm:$0xf]
    %v1170 = vunpack.c.l.bf16 %v1168
    %v1171 = vunpack.c.h.bf16 %v1168
    %v1172 = vunpack.c.l.bf16 %v1169
    %v1173 = vpack.c.bf16 %v1159, %v1159
    %1174 = vmatprep.subr.bf16.mxu0 %v269
    %1175 = vmatpush1.bf16.msra.mxu0 %v268
    %1176 = vmatprep.subr.bf16.mxu0 %v272
    %1177 = vmatpush1.bf16.msra.mxu0 %v271
    %1178 = vmatprep.subr.bf16.mxu0 %v275
    %1179 = vmatpush1.bf16.msra.mxu0 %v274
    %1180 = vmatprep.subr.bf16.mxu0 %v278
    %1181 = vmatpush1.bf16.msra.mxu0 %v277
    %1182 = vmatprep.subr.bf16.mxu0 %v281
    %1183 = vmatpush1.bf16.msra.mxu0 %v280
    %1184 = vmatprep.subr.bf16.mxu0 %v284
    %1185 = vmatpush1.bf16.msra.mxu0 %v283
    %1186 = vmatprep.subr.bf16.mxu0 %v287
    %1187 = vmatpush1.bf16.msra.mxu0 %v286
    %1188 = vmatprep.subr.bf16.mxu0 %v290
    %1189 = vmatpush1.bf16.msra.mxu0 %v289
    %1190 = vmatprep.subr.bf16.mxu0 0
    %1191 = vmatpush1.bf16.msra.mxu0 0
    %1192 = vmatprep.subr.bf16.mxu0 0
    %1193 = vmatpush1.bf16.msra.mxu0 0
    %1194 = vmatprep.subr.bf16.mxu0 0
    %1195 = vmatpush1.bf16.msra.mxu0 0
    %1196 = vmatprep.subr.bf16.mxu0 0
    %1197 = vmatpush1.bf16.msra.mxu0 0
    %1198 = vmatprep.subr.bf16.mxu0 0
    %1199 = vmatpush1.bf16.msra.mxu0 0
    %1200 = vmatprep.subr.bf16.mxu0 0
    %1201 = vmatpush1.bf16.msra.mxu0 0
    %1202 = vmatprep.subr.bf16.mxu0 0
    %1203 = vmatpush1.bf16.msra.mxu0 0
    %1204 = vmatprep.subr.bf16.mxu0 0
    %1205 = vmatpush1.bf16.msra.mxu0 0
    %1206 = vmatprep.mubr.bf16.mxu0 0
    %1207 = vmatmul.mubr.bf16.gmra.mrb[0].mxu0 %v1173
    %v1208 = vpop.f32.mrb[0].mxu0
    %v1209 = vadd.f32 0.0, %v1208
    %v1210 = vpop.f32.mrb[0].mxu0
    %v1211 = vadd.f32 0.0, %v1210
    %v1212 = vpop.f32.mrb[0].mxu0
    %v1213 = vpop.f32.mrb[0].mxu0
    %1214 = vdwg.mxu0
    %1215 = vmatprep.subr.bf16.mxu0 0
    %1216 = vmatpush1.bf16.msra.mxu0 %v270
    %1217 = vmatprep.subr.bf16.mxu0 0
    %1218 = vmatpush1.bf16.msra.mxu0 %v273
    %1219 = vmatprep.subr.bf16.mxu0 0
    %1220 = vmatpush1.bf16.msra.mxu0 %v276
    %1221 = vmatprep.subr.bf16.mxu0 0
    %1222 = vmatpush1.bf16.msra.mxu0 %v279
    %1223 = vmatprep.subr.bf16.mxu0 0
    %1224 = vmatpush1.bf16.msra.mxu0 %v282
    %1225 = vmatprep.subr.bf16.mxu0 0
    %1226 = vmatpush1.bf16.msra.mxu0 %v285
    %1227 = vmatprep.subr.bf16.mxu0 0
    %1228 = vmatpush1.bf16.msra.mxu0 %v288
    %1229 = vmatprep.subr.bf16.mxu0 0
    %1230 = vmatpush1.bf16.msra.mxu0 %v291
    %1231 = vmatprep.subr.bf16.mxu0 0
    %1232 = vmatpush1.bf16.msra.mxu0 0
    %1233 = vmatprep.subr.bf16.mxu0 0
    %1234 = vmatpush1.bf16.msra.mxu0 0
    %1235 = vmatprep.subr.bf16.mxu0 0
    %1236 = vmatpush1.bf16.msra.mxu0 0
    %1237 = vmatprep.subr.bf16.mxu0 0
    %1238 = vmatpush1.bf16.msra.mxu0 0
    %1239 = vmatprep.subr.bf16.mxu0 0
    %1240 = vmatpush1.bf16.msra.mxu0 0
    %1241 = vmatprep.subr.bf16.mxu0 0
    %1242 = vmatpush1.bf16.msra.mxu0 0
    %1243 = vmatprep.subr.bf16.mxu0 0
    %1244 = vmatpush1.bf16.msra.mxu0 0
    %1245 = vmatprep.subr.bf16.mxu0 0
    %1246 = vmatpush1.bf16.msra.mxu0 0
    %1247 = vmatprep.mubr.bf16.mxu0 0
    %1248 = vmatmul.mubr.bf16.gmra.mrb[0].mxu0 %v1173
    %v1249 = vpop.f32.mrb[0].mxu0
    %v1250 = vadd.f32 0.0, %v1249
    %v1251 = vpop.f32.mrb[0].mxu0
    %v1252 = vpop.f32.mrb[0].mxu0
    %v1253 = vpop.f32.mrb[0].mxu0
    %1254 = vdwg.mxu0
    %v1255 = vpack.c.bf16 %v1160, %v1160
    %1256 = vmatprep.subr.bf16.mxu0 %v479
    %1257 = vmatpush1.bf16.msra.mxu0 %v478
    %1258 = vmatprep.subr.bf16.mxu0 %v482
    %1259 = vmatpush1.bf16.msra.mxu0 %v481
    %1260 = vmatprep.subr.bf16.mxu0 %v485
    %1261 = vmatpush1.bf16.msra.mxu0 %v484
    %1262 = vmatprep.subr.bf16.mxu0 %v488
    %1263 = vmatpush1.bf16.msra.mxu0 %v487
    %1264 = vmatprep.subr.bf16.mxu0 %v491
    %1265 = vmatpush1.bf16.msra.mxu0 %v490
    %1266 = vmatprep.subr.bf16.mxu0 %v494
    %1267 = vmatpush1.bf16.msra.mxu0 %v493
    %1268 = vmatprep.subr.bf16.mxu0 %v497
    %1269 = vmatpush1.bf16.msra.mxu0 %v496
    %1270 = vmatprep.subr.bf16.mxu0 %v500
    %1271 = vmatpush1.bf16.msra.mxu0 %v499
    %1272 = vmatprep.subr.bf16.mxu0 0
    %1273 = vmatpush1.bf16.msra.mxu0 0
    %1274 = vmatprep.subr.bf16.mxu0 0
    %1275 = vmatpush1.bf16.msra.mxu0 0
    %1276 = vmatprep.subr.bf16.mxu0 0
    %1277 = vmatpush1.bf16.msra.mxu0 0
    %1278 = vmatprep.subr.bf16.mxu0 0
    %1279 = vmatpush1.bf16.msra.mxu0 0
    %1280 = vmatprep.subr.bf16.mxu0 0
    %1281 = vmatpush1.bf16.msra.mxu0 0
    %1282 = vmatprep.subr.bf16.mxu0 0
    %1283 = vmatpush1.bf16.msra.mxu0 0
    %1284 = vmatprep.subr.bf16.mxu0 0
    %1285 = vmatpush1.bf16.msra.mxu0 0
    %1286 = vmatprep.subr.bf16.mxu0 0
    %1287 = vmatpush1.bf16.msra.mxu0 0
    %1288 = vmatprep.mubr.bf16.mxu0 0
    %1289 = vmatmul.mubr.bf16.gmra.mrb[0].mxu0 %v1255
    %v1290 = vpop.f32.mrb[0].mxu0
    %v1291 = vadd.f32 0.0, %v1290
    %v1292 = vpop.f32.mrb[0].mxu0
    %v1293 = vadd.f32 0.0, %v1292
    %v1294 = vpop.f32.mrb[0].mxu0
    %v1295 = vpop.f32.mrb[0].mxu0
    %1296 = vdwg.mxu0
    %1297 = vmatprep.subr.bf16.mxu0 0
    %1298 = vmatpush1.bf16.msra.mxu0 %v480
    %1299 = vmatprep.subr.bf16.mxu0 0
    %1300 = vmatpush1.bf16.msra.mxu0 %v483
    %1301 = vmatprep.subr.bf16.mxu0 0
    %1302 = vmatpush1.bf16.msra.mxu0 %v486
    %1303 = vmatprep.subr.bf16.mxu0 0
    %1304 = vmatpush1.bf16.msra.mxu0 %v489
    %1305 = vmatprep.subr.bf16.mxu0 0
    %1306 = vmatpush1.bf16.msra.mxu0 %v492
    %1307 = vmatprep.subr.bf16.mxu0 0
    %1308 = vmatpush1.bf16.msra.mxu0 %v495
    %1309 = vmatprep.subr.bf16.mxu0 0
    %1310 = vmatpush1.bf16.msra.mxu0 %v498
    %1311 = vmatprep.subr.bf16.mxu0 0
    %1312 = vmatpush1.bf16.msra.mxu0 %v501
    %1313 = vmatprep.subr.bf16.mxu0 0
    %1314 = vmatpush1.bf16.msra.mxu0 0
    %1315 = vmatprep.subr.bf16.mxu0 0
    %1316 = vmatpush1.bf16.msra.mxu0 0
    %1317 = vmatprep.subr.bf16.mxu0 0
    %1318 = vmatpush1.bf16.msra.mxu0 0
    %1319 = vmatprep.subr.bf16.mxu0 0
    %1320 = vmatpush1.bf16.msra.mxu0 0
    %1321 = vmatprep.subr.bf16.mxu0 0
    %1322 = vmatpush1.bf16.msra.mxu0 0
    %1323 = vmatprep.subr.bf16.mxu0 0
    %1324 = vmatpush1.bf16.msra.mxu0 0
    %1325 = vmatprep.subr.bf16.mxu0 0
    %1326 = vmatpush1.bf16.msra.mxu0 0
    %1327 = vmatprep.subr.bf16.mxu0 0
    %1328 = vmatpush1.bf16.msra.mxu0 0
    %1329 = vmatprep.mubr.bf16.mxu0 0
    %1330 = vmatmul.mubr.bf16.gmra.mrb[0].mxu0 %v1255
    %v1331 = vpop.f32.mrb[0].mxu0
    %v1332 = vadd.f32 0.0, %v1331
    %v1333 = vpop.f32.mrb[0].mxu0
    %v1334 = vpop.f32.mrb[0].mxu0
    %v1335 = vpop.f32.mrb[0].mxu0
    %1336 = vdwg.mxu0
    %v1337 = vadd.f32 %v1164, %v1209
    %v1338 = vxor.u32 %v1337, 2147483648
    %v1339 = vmul.f32 %v1338, 1.442695
    %v1340 = vpow.pop %v1339
    %v1341 = vadd.f32 %v1340, 1.0
    %v1342 = vrcp.pop %v1341
    %v1343 = vmul.f32 1.0, %v1342
    %v1344 = vadd.f32 %v1165, %v1211
    %v1345 = vxor.u32 %v1344, 2147483648
    %v1346 = vmul.f32 %v1345, 1.442695
    %v1347 = vpow.pop %v1346
    %v1348 = vadd.f32 %v1347, 1.0
    %v1349 = vrcp.pop %v1348
    %v1350 = vmul.f32 1.0, %v1349
    %v1351 = vadd.f32 %v1250, %v165
    %v1352 = vmul.f32 %v1343, %v1351
    %v1353 = vadd.f32 %v1166, %v1352
    %v1354 = vtanh.pop %v1353
    %v1355 = vsub.f32 1.0, %v1350
    %v1356 = vmul.f32 %v1355, %v1354
    %v1357 = vmul.f32 %v1350, %v1159
    %v1358 = vadd.f32 %v1356, %v1357
    %v1359 = vadd.f32 %v1170, %v1291
    %v1360 = vxor.u32 %v1359, 2147483648
    %v1361 = vmul.f32 %v1360, 1.442695
    %v1362 = vpow.pop %v1361
    %v1363 = vadd.f32 %v1362, 1.0
    %v1364 = vrcp.pop %v1363
    %v1365 = vmul.f32 1.0, %v1364
    %v1366 = vadd.f32 %v1171, %v1293
    %v1367 = vxor.u32 %v1366, 2147483648
    %v1368 = vmul.f32 %v1367, 1.442695
    %v1369 = vpow.pop %v1368
    %v1370 = vadd.f32 %v1369, 1.0
    %v1371 = vrcp.pop %v1370
    %v1372 = vmul.f32 1.0, %v1371
    %v1373 = vadd.f32 %v1332, %v172
    %v1374 = vmul.f32 %v1365, %v1373
    %v1375 = vadd.f32 %v1172, %v1374
    %v1376 = vtanh.pop %v1375
    %v1377 = vsub.f32 1.0, %v1372
    %v1378 = vmul.f32 %v1377, %v1376
    %v1379 = vmul.f32 %v1372, %v1160
    %v1380 = vadd.f32 %v1378, %v1379
    %s1381 = sadd.s32 %s174, 3
    %v1382 = vstv %s1381
    %vm1383 = vcmp.lt.s32.totalorder %v1382, %v95
    %s1384 = ssub.s32 4, %s174
    %v1385 = vstv %s1384
    %vm1386 = vcmp.lt.s32.totalorder %v1385, %v95
    %v1387 = vsel %vm1383, 1, 0
    %1388 = vset.pattern.permute.xlu0 0
    %1389 = vperm.xlu0 %1388, %v1387
    %v1390 = vpop.permute.xlu0 %1389
    %vm1391 = vcmp.eq.s32.totalorder %v1390, 1
    %v1392 = vsel %vm1391, %v1358, 0.0
    %s1393 = scalar_lea.vmem [#allocation12], 24
    %1394 = vst [vmem:[%s1393] sm:$0xff] %v1392
    %v1395 = vsel %vm1386, 1, 0
    %1396 = vset.pattern.permute.xlu0 0
    %1397 = vperm.xlu0 %1396, %v1395
    %v1398 = vpop.permute.xlu0 %1397
    %vm1399 = vcmp.eq.s32.totalorder %v1398, 1
    %v1400 = vsel %vm1399, %v1380, 0.0
    %s1401 = scalar_lea.vmem [#allocation13], 32
    %1402 = vst [vmem:[%s1401] sm:$0xff] %v1400
    %v1403 = vsel %vm1391, %v1358, %v1159
    %v1404 = vsel %vm1399, %v1380, %v1160
    %s1405 = scalar_lea.vmem [#allocation4], 48
    %v1406 = vld [vmem:[%s1405] sm:$0xff]
    %v1407 = vld [vmem:[%s1405 + $0x8] sm:$0xf]
    %v1408 = vunpack.c.l.bf16 %v1406
    %v1409 = vunpack.c.h.bf16 %v1406
    %v1410 = vunpack.c.l.bf16 %v1407
    %s1411 = scalar_lea.vmem [#allocation7], 48
    %v1412 = vld [vmem:[%s1411] sm:$0xff]
    %v1413 = vld [vmem:[%s1411 + $0x8] sm:$0xf]
    %v1414 = vunpack.c.l.bf16 %v1412
    %v1415 = vunpack.c.h.bf16 %v1412
    %v1416 = vunpack.c.l.bf16 %v1413
    %v1417 = vpack.c.bf16 %v1403, %v1403
    %1418 = vmatprep.subr.bf16.mxu0 %v269
    %1419 = vmatpush1.bf16.msra.mxu0 %v268
    %1420 = vmatprep.subr.bf16.mxu0 %v272
    %1421 = vmatpush1.bf16.msra.mxu0 %v271
    %1422 = vmatprep.subr.bf16.mxu0 %v275
    %1423 = vmatpush1.bf16.msra.mxu0 %v274
    %1424 = vmatprep.subr.bf16.mxu0 %v278
    %1425 = vmatpush1.bf16.msra.mxu0 %v277
    %1426 = vmatprep.subr.bf16.mxu0 %v281
    %1427 = vmatpush1.bf16.msra.mxu0 %v280
    %1428 = vmatprep.subr.bf16.mxu0 %v284
    %1429 = vmatpush1.bf16.msra.mxu0 %v283
    %1430 = vmatprep.subr.bf16.mxu0 %v287
    %1431 = vmatpush1.bf16.msra.mxu0 %v286
    %1432 = vmatprep.subr.bf16.mxu0 %v290
    %1433 = vmatpush1.bf16.msra.mxu0 %v289
    %1434 = vmatprep.subr.bf16.mxu0 0
    %1435 = vmatpush1.bf16.msra.mxu0 0
    %1436 = vmatprep.subr.bf16.mxu0 0
    %1437 = vmatpush1.bf16.msra.mxu0 0
    %1438 = vmatprep.subr.bf16.mxu0 0
    %1439 = vmatpush1.bf16.msra.mxu0 0
    %1440 = vmatprep.subr.bf16.mxu0 0
    %1441 = vmatpush1.bf16.msra.mxu0 0
    %1442 = vmatprep.subr.bf16.mxu0 0
    %1443 = vmatpush1.bf16.msra.mxu0 0
    %1444 = vmatprep.subr.bf16.mxu0 0
    %1445 = vmatpush1.bf16.msra.mxu0 0
    %1446 = vmatprep.subr.bf16.mxu0 0
    %1447 = vmatpush1.bf16.msra.mxu0 0
    %1448 = vmatprep.subr.bf16.mxu0 0
    %1449 = vmatpush1.bf16.msra.mxu0 0
    %1450 = vmatprep.mubr.bf16.mxu0 0
    %1451 = vmatmul.mubr.bf16.gmra.mrb[0].mxu0 %v1417
    %v1452 = vpop.f32.mrb[0].mxu0
    %v1453 = vadd.f32 0.0, %v1452
    %v1454 = vpop.f32.mrb[0].mxu0
    %v1455 = vadd.f32 0.0, %v1454
    %v1456 = vpop.f32.mrb[0].mxu0
    %v1457 = vpop.f32.mrb[0].mxu0
    %1458 = vdwg.mxu0
    %1459 = vmatprep.subr.bf16.mxu0 0
    %1460 = vmatpush1.bf16.msra.mxu0 %v270
    %1461 = vmatprep.subr.bf16.mxu0 0
    %1462 = vmatpush1.bf16.msra.mxu0 %v273
    %1463 = vmatprep.subr.bf16.mxu0 0
    %1464 = vmatpush1.bf16.msra.mxu0 %v276
    %1465 = vmatprep.subr.bf16.mxu0 0
    %1466 = vmatpush1.bf16.msra.mxu0 %v279
    %1467 = vmatprep.subr.bf16.mxu0 0
    %1468 = vmatpush1.bf16.msra.mxu0 %v282
    %1469 = vmatprep.subr.bf16.mxu0 0
    %1470 = vmatpush1.bf16.msra.mxu0 %v285
    %1471 = vmatprep.subr.bf16.mxu0 0
    %1472 = vmatpush1.bf16.msra.mxu0 %v288
    %1473 = vmatprep.subr.bf16.mxu0 0
    %1474 = vmatpush1.bf16.msra.mxu0 %v291
    %1475 = vmatprep.subr.bf16.mxu0 0
    %1476 = vmatpush1.bf16.msra.mxu0 0
    %1477 = vmatprep.subr.bf16.mxu0 0
    %1478 = vmatpush1.bf16.msra.mxu0 0
    %1479 = vmatprep.subr.bf16.mxu0 0
    %1480 = vmatpush1.bf16.msra.mxu0 0
    %1481 = vmatprep.subr.bf16.mxu0 0
    %1482 = vmatpush1.bf16.msra.mxu0 0
    %1483 = vmatprep.subr.bf16.mxu0 0
    %1484 = vmatpush1.bf16.msra.mxu0 0
    %1485 = vmatprep.subr.bf16.mxu0 0
    %1486 = vmatpush1.bf16.msra.mxu0 0
    %1487 = vmatprep.subr.bf16.mxu0 0
    %1488 = vmatpush1.bf16.msra.mxu0 0
    %1489 = vmatprep.subr.bf16.mxu0 0
    %1490 = vmatpush1.bf16.msra.mxu0 0
    %1491 = vmatprep.mubr.bf16.mxu0 0
    %1492 = vmatmul.mubr.bf16.gmra.mrb[0].mxu0 %v1417
    %v1493 = vpop.f32.mrb[0].mxu0
    %v1494 = vadd.f32 0.0, %v1493
    %v1495 = vpop.f32.mrb[0].mxu0
    %v1496 = vpop.f32.mrb[0].mxu0
    %v1497 = vpop.f32.mrb[0].mxu0
    %1498 = vdwg.mxu0
    %v1499 = vpack.c.bf16 %v1404, %v1404
    %1500 = vmatprep.subr.bf16.mxu0 %v479
    %1501 = vmatpush1.bf16.msra.mxu0 %v478
    %1502 = vmatprep.subr.bf16.mxu0 %v482
    %1503 = vmatpush1.bf16.msra.mxu0 %v481
    %1504 = vmatprep.subr.bf16.mxu0 %v485
    %1505 = vmatpush1.bf16.msra.mxu0 %v484
    %1506 = vmatprep.subr.bf16.mxu0 %v488
    %1507 = vmatpush1.bf16.msra.mxu0 %v487
    %1508 = vmatprep.subr.bf16.mxu0 %v491
    %1509 = vmatpush1.bf16.msra.mxu0 %v490
    %1510 = vmatprep.subr.bf16.mxu0 %v494
    %1511 = vmatpush1.bf16.msra.mxu0 %v493
    %1512 = vmatprep.subr.bf16.mxu0 %v497
    %1513 = vmatpush1.bf16.msra.mxu0 %v496
    %1514 = vmatprep.subr.bf16.mxu0 %v500
    %1515 = vmatpush1.bf16.msra.mxu0 %v499
    %1516 = vmatprep.subr.bf16.mxu0 0
    %1517 = vmatpush1.bf16.msra.mxu0 0
    %1518 = vmatprep.subr.bf16.mxu0 0
    %1519 = vmatpush1.bf16.msra.mxu0 0
    %1520 = vmatprep.subr.bf16.mxu0 0
    %1521 = vmatpush1.bf16.msra.mxu0 0
    %1522 = vmatprep.subr.bf16.mxu0 0
    %1523 = vmatpush1.bf16.msra.mxu0 0
    %1524 = vmatprep.subr.bf16.mxu0 0
    %1525 = vmatpush1.bf16.msra.mxu0 0
    %1526 = vmatprep.subr.bf16.mxu0 0
    %1527 = vmatpush1.bf16.msra.mxu0 0
    %1528 = vmatprep.subr.bf16.mxu0 0
    %1529 = vmatpush1.bf16.msra.mxu0 0
    %1530 = vmatprep.subr.bf16.mxu0 0
    %1531 = vmatpush1.bf16.msra.mxu0 0
    %1532 = vmatprep.mubr.bf16.mxu0 0
    %1533 = vmatmul.mubr.bf16.gmra.mrb[0].mxu0 %v1499
    %v1534 = vpop.f32.mrb[0].mxu0
    %v1535 = vadd.f32 0.0, %v1534
    %v1536 = vpop.f32.mrb[0].mxu0
    %v1537 = vadd.f32 0.0, %v1536
    %v1538 = vpop.f32.mrb[0].mxu0
    %v1539 = vpop.f32.mrb[0].mxu0
    %1540 = vdwg.mxu0
    %1541 = vmatprep.subr.bf16.mxu0 0
    %1542 = vmatpush1.bf16.msra.mxu0 %v480
    %1543 = vmatprep.subr.bf16.mxu0 0
    %1544 = vmatpush1.bf16.msra.mxu0 %v483
    %1545 = vmatprep.subr.bf16.mxu0 0
    %1546 = vmatpush1.bf16.msra.mxu0 %v486
    %1547 = vmatprep.subr.bf16.mxu0 0
    %1548 = vmatpush1.bf16.msra.mxu0 %v489
    %1549 = vmatprep.subr.bf16.mxu0 0
    %1550 = vmatpush1.bf16.msra.mxu0 %v492
    %1551 = vmatprep.subr.bf16.mxu0 0
    %1552 = vmatpush1.bf16.msra.mxu0 %v495
    %1553 = vmatprep.subr.bf16.mxu0 0
    %1554 = vmatpush1.bf16.msra.mxu0 %v498
    %1555 = vmatprep.subr.bf16.mxu0 0
    %1556 = vmatpush1.bf16.msra.mxu0 %v501
    %1557 = vmatprep.subr.bf16.mxu0 0
    %1558 = vmatpush1.bf16.msra.mxu0 0
    %1559 = vmatprep.subr.bf16.mxu0 0
    %1560 = vmatpush1.bf16.msra.mxu0 0
    %1561 = vmatprep.subr.bf16.mxu0 0
    %1562 = vmatpush1.bf16.msra.mxu0 0
    %1563 = vmatprep.subr.bf16.mxu0 0
    %1564 = vmatpush1.bf16.msra.mxu0 0
    %1565 = vmatprep.subr.bf16.mxu0 0
    %1566 = vmatpush1.bf16.msra.mxu0 0
    %1567 = vmatprep.subr.bf16.mxu0 0
    %1568 = vmatpush1.bf16.msra.mxu0 0
    %1569 = vmatprep.subr.bf16.mxu0 0
    %1570 = vmatpush1.bf16.msra.mxu0 0
    %1571 = vmatprep.subr.bf16.mxu0 0
    %1572 = vmatpush1.bf16.msra.mxu0 0
    %1573 = vmatprep.mubr.bf16.mxu0 0
    %1574 = vmatmul.mubr.bf16.gmra.mrb[0].mxu0 %v1499
    %v1575 = vpop.f32.mrb[0].mxu0
    %v1576 = vadd.f32 0.0, %v1575
    %v1577 = vpop.f32.mrb[0].mxu0
    %v1578 = vpop.f32.mrb[0].mxu0
    %v1579 = vpop.f32.mrb[0].mxu0
    %1580 = vdwg.mxu0
    %v1581 = vadd.f32 %v1408, %v1453
    %v1582 = vxor.u32 %v1581, 2147483648
    %v1583 = vmul.f32 %v1582, 1.442695
    %v1584 = vpow.pop %v1583
    %v1585 = vadd.f32 %v1584, 1.0
    %v1586 = vrcp.pop %v1585
    %v1587 = vmul.f32 1.0, %v1586
    %v1588 = vadd.f32 %v1409, %v1455
    %v1589 = vxor.u32 %v1588, 2147483648
    %v1590 = vmul.f32 %v1589, 1.442695
    %v1591 = vpow.pop %v1590
    %v1592 = vadd.f32 %v1591, 1.0
    %v1593 = vrcp.pop %v1592
    %v1594 = vmul.f32 1.0, %v1593
    %v1595 = vadd.f32 %v1494, %v165
    %v1596 = vmul.f32 %v1587, %v1595
    %v1597 = vadd.f32 %v1410, %v1596
    %v1598 = vtanh.pop %v1597
    %v1599 = vsub.f32 1.0, %v1594
    %v1600 = vmul.f32 %v1599, %v1598
    %v1601 = vmul.f32 %v1594, %v1403
    %v1602 = vadd.f32 %v1600, %v1601
    %v1603 = vadd.f32 %v1414, %v1535
    %v1604 = vxor.u32 %v1603, 2147483648
    %v1605 = vmul.f32 %v1604, 1.442695
    %v1606 = vpow.pop %v1605
    %v1607 = vadd.f32 %v1606, 1.0
    %v1608 = vrcp.pop %v1607
    %v1609 = vmul.f32 1.0, %v1608
    %v1610 = vadd.f32 %v1415, %v1537
    %v1611 = vxor.u32 %v1610, 2147483648
    %v1612 = vmul.f32 %v1611, 1.442695
    %v1613 = vpow.pop %v1612
    %v1614 = vadd.f32 %v1613, 1.0
    %v1615 = vrcp.pop %v1614
    %v1616 = vmul.f32 1.0, %v1615
    %v1617 = vadd.f32 %v1576, %v172
    %v1618 = vmul.f32 %v1609, %v1617
    %v1619 = vadd.f32 %v1416, %v1618
    %v1620 = vtanh.pop %v1619
    %v1621 = vsub.f32 1.0, %v1616
    %v1622 = vmul.f32 %v1621, %v1620
    %v1623 = vmul.f32 %v1616, %v1404
    %v1624 = vadd.f32 %v1622, %v1623
    %s1625 = sadd.s32 %s174, 4
    %v1626 = vstv %s1625
    %vm1627 = vcmp.lt.s32.totalorder %v1626, %v95
    %s1628 = ssub.s32 3, %s174
    %v1629 = vstv %s1628
    %vm1630 = vcmp.lt.s32.totalorder %v1629, %v95
    %v1631 = vsel %vm1627, 1, 0
    %1632 = vset.pattern.permute.xlu0 0
    %1633 = vperm.xlu0 %1632, %v1631
    %v1634 = vpop.permute.xlu0 %1633
    %vm1635 = vcmp.eq.s32.totalorder %v1634, 1
    %v1636 = vsel %vm1635, %v1602, 0.0
    %s1637 = scalar_lea.vmem [#allocation12], 32
    %1638 = vst [vmem:[%s1637] sm:$0xff] %v1636
    %v1639 = vsel %vm1630, 1, 0
    %1640 = vset.pattern.permute.xlu0 0
    %1641 = vperm.xlu0 %1640, %v1639
    %v1642 = vpop.permute.xlu0 %1641
    %vm1643 = vcmp.eq.s32.totalorder %v1642, 1
    %v1644 = vsel %vm1643, %v1624, 0.0
    %s1645 = scalar_lea.vmem [#allocation13], 24
    %1646 = vst [vmem:[%s1645] sm:$0xff] %v1644
    %v1647 = vsel %vm1635, %v1602, %v1403
    %v1648 = vsel %vm1643, %v1624, %v1404
    %s1649 = scalar_lea.vmem [#allocation4], 60
    %v1650 = vld [vmem:[%s1649] sm:$0xff]
    %v1651 = vld [vmem:[%s1649 + $0x8] sm:$0xf]
    %v1652 = vunpack.c.l.bf16 %v1650
    %v1653 = vunpack.c.h.bf16 %v1650
    %v1654 = vunpack.c.l.bf16 %v1651
    %s1655 = scalar_lea.vmem [#allocation7], 60
    %v1656 = vld [vmem:[%s1655] sm:$0xff]
    %v1657 = vld [vmem:[%s1655 + $0x8] sm:$0xf]
    %v1658 = vunpack.c.l.bf16 %v1656
    %v1659 = vunpack.c.h.bf16 %v1656
    %v1660 = vunpack.c.l.bf16 %v1657
    %v1661 = vpack.c.bf16 %v1647, %v1647
    %1662 = vmatprep.subr.bf16.mxu0 %v269
    %1663 = vmatpush1.bf16.msra.mxu0 %v268
    %1664 = vmatprep.subr.bf16.mxu0 %v272
    %1665 = vmatpush1.bf16.msra.mxu0 %v271
    %1666 = vmatprep.subr.bf16.mxu0 %v275
    %1667 = vmatpush1.bf16.msra.mxu0 %v274
    %1668 = vmatprep.subr.bf16.mxu0 %v278
    %1669 = vmatpush1.bf16.msra.mxu0 %v277
    %1670 = vmatprep.subr.bf16.mxu0 %v281
    %1671 = vmatpush1.bf16.msra.mxu0 %v280
    %1672 = vmatprep.subr.bf16.mxu0 %v284
    %1673 = vmatpush1.bf16.msra.mxu0 %v283
    %1674 = vmatprep.subr.bf16.mxu0 %v287
    %1675 = vmatpush1.bf16.msra.mxu0 %v286
    %1676 = vmatprep.subr.bf16.mxu0 %v290
    %1677 = vmatpush1.bf16.msra.mxu0 %v289
    %1678 = vmatprep.subr.bf16.mxu0 0
    %1679 = vmatpush1.bf16.msra.mxu0 0
    %1680 = vmatprep.subr.bf16.mxu0 0
    %1681 = vmatpush1.bf16.msra.mxu0 0
    %1682 = vmatprep.subr.bf16.mxu0 0
    %1683 = vmatpush1.bf16.msra.mxu0 0
    %1684 = vmatprep.subr.bf16.mxu0 0
    %1685 = vmatpush1.bf16.msra.mxu0 0
    %1686 = vmatprep.subr.bf16.mxu0 0
    %1687 = vmatpush1.bf16.msra.mxu0 0
    %1688 = vmatprep.subr.bf16.mxu0 0
    %1689 = vmatpush1.bf16.msra.mxu0 0
    %1690 = vmatprep.subr.bf16.mxu0 0
    %1691 = vmatpush1.bf16.msra.mxu0 0
    %1692 = vmatprep.subr.bf16.mxu0 0
    %1693 = vmatpush1.bf16.msra.mxu0 0
    %1694 = vmatprep.mubr.bf16.mxu0 0
    %1695 = vmatmul.mubr.bf16.gmra.mrb[0].mxu0 %v1661
    %v1696 = vpop.f32.mrb[0].mxu0
    %v1697 = vadd.f32 0.0, %v1696
    %v1698 = vpop.f32.mrb[0].mxu0
    %v1699 = vadd.f32 0.0, %v1698
    %v1700 = vpop.f32.mrb[0].mxu0
    %v1701 = vpop.f32.mrb[0].mxu0
    %1702 = vdwg.mxu0
    %1703 = vmatprep.subr.bf16.mxu0 0
    %1704 = vmatpush1.bf16.msra.mxu0 %v270
    %1705 = vmatprep.subr.bf16.mxu0 0
    %1706 = vmatpush1.bf16.msra.mxu0 %v273
    %1707 = vmatprep.subr.bf16.mxu0 0
    %1708 = vmatpush1.bf16.msra.mxu0 %v276
    %1709 = vmatprep.subr.bf16.mxu0 0
    %1710 = vmatpush1.bf16.msra.mxu0 %v279
    %1711 = vmatprep.subr.bf16.mxu0 0
    %1712 = vmatpush1.bf16.msra.mxu0 %v282
    %1713 = vmatprep.subr.bf16.mxu0 0
    %1714 = vmatpush1.bf16.msra.mxu0 %v285
    %1715 = vmatprep.subr.bf16.mxu0 0
    %1716 = vmatpush1.bf16.msra.mxu0 %v288
    %1717 = vmatprep.subr.bf16.mxu0 0
    %1718 = vmatpush1.bf16.msra.mxu0 %v291
    %1719 = vmatprep.subr.bf16.mxu0 0
    %1720 = vmatpush1.bf16.msra.mxu0 0
    %1721 = vmatprep.subr.bf16.mxu0 0
    %1722 = vmatpush1.bf16.msra.mxu0 0
    %1723 = vmatprep.subr.bf16.mxu0 0
    %1724 = vmatpush1.bf16.msra.mxu0 0
    %1725 = vmatprep.subr.bf16.mxu0 0
    %1726 = vmatpush1.bf16.msra.mxu0 0
    %1727 = vmatprep.subr.bf16.mxu0 0
    %1728 = vmatpush1.bf16.msra.mxu0 0
    %1729 = vmatprep.subr.bf16.mxu0 0
    %1730 = vmatpush1.bf16.msra.mxu0 0
    %1731 = vmatprep.subr.bf16.mxu0 0
    %1732 = vmatpush1.bf16.msra.mxu0 0
    %1733 = vmatprep.subr.bf16.mxu0 0
    %1734 = vmatpush1.bf16.msra.mxu0 0
    %1735 = vmatprep.mubr.bf16.mxu0 0
    %1736 = vmatmul.mubr.bf16.gmra.mrb[0].mxu0 %v1661
    %v1737 = vpop.f32.mrb[0].mxu0
    %v1738 = vadd.f32 0.0, %v1737
    %v1739 = vpop.f32.mrb[0].mxu0
    %v1740 = vpop.f32.mrb[0].mxu0
    %v1741 = vpop.f32.mrb[0].mxu0
    %1742 = vdwg.mxu0
    %v1743 = vpack.c.bf16 %v1648, %v1648
    %1744 = vmatprep.subr.bf16.mxu0 %v479
    %1745 = vmatpush1.bf16.msra.mxu0 %v478
    %1746 = vmatprep.subr.bf16.mxu0 %v482
    %1747 = vmatpush1.bf16.msra.mxu0 %v481
    %1748 = vmatprep.subr.bf16.mxu0 %v485
    %1749 = vmatpush1.bf16.msra.mxu0 %v484
    %1750 = vmatprep.subr.bf16.mxu0 %v488
    %1751 = vmatpush1.bf16.msra.mxu0 %v487
    %1752 = vmatprep.subr.bf16.mxu0 %v491
    %1753 = vmatpush1.bf16.msra.mxu0 %v490
    %1754 = vmatprep.subr.bf16.mxu0 %v494
    %1755 = vmatpush1.bf16.msra.mxu0 %v493
    %1756 = vmatprep.subr.bf16.mxu0 %v497
    %1757 = vmatpush1.bf16.msra.mxu0 %v496
    %1758 = vmatprep.subr.bf16.mxu0 %v500
    %1759 = vmatpush1.bf16.msra.mxu0 %v499
    %1760 = vmatprep.subr.bf16.mxu0 0
    %1761 = vmatpush1.bf16.msra.mxu0 0
    %1762 = vmatprep.subr.bf16.mxu0 0
    %1763 = vmatpush1.bf16.msra.mxu0 0
    %1764 = vmatprep.subr.bf16.mxu0 0
    %1765 = vmatpush1.bf16.msra.mxu0 0
    %1766 = vmatprep.subr.bf16.mxu0 0
    %1767 = vmatpush1.bf16.msra.mxu0 0
    %1768 = vmatprep.subr.bf16.mxu0 0
    %1769 = vmatpush1.bf16.msra.mxu0 0
    %1770 = vmatprep.subr.bf16.mxu0 0
    %1771 = vmatpush1.bf16.msra.mxu0 0
    %1772 = vmatprep.subr.bf16.mxu0 0
    %1773 = vmatpush1.bf16.msra.mxu0 0
    %1774 = vmatprep.subr.bf16.mxu0 0
    %1775 = vmatpush1.bf16.msra.mxu0 0
    %1776 = vmatprep.mubr.bf16.mxu0 0
    %1777 = vmatmul.mubr.bf16.gmra.mrb[0].mxu0 %v1743
    %v1778 = vpop.f32.mrb[0].mxu0
    %v1779 = vadd.f32 0.0, %v1778
    %v1780 = vpop.f32.mrb[0].mxu0
    %v1781 = vadd.f32 0.0, %v1780
    %v1782 = vpop.f32.mrb[0].mxu0
    %v1783 = vpop.f32.mrb[0].mxu0
    %1784 = vdwg.mxu0
    %1785 = vmatprep.subr.bf16.mxu0 0
    %1786 = vmatpush1.bf16.msra.mxu0 %v480
    %1787 = vmatprep.subr.bf16.mxu0 0
    %1788 = vmatpush1.bf16.msra.mxu0 %v483
    %1789 = vmatprep.subr.bf16.mxu0 0
    %1790 = vmatpush1.bf16.msra.mxu0 %v486
    %1791 = vmatprep.subr.bf16.mxu0 0
    %1792 = vmatpush1.bf16.msra.mxu0 %v489
    %1793 = vmatprep.subr.bf16.mxu0 0
    %1794 = vmatpush1.bf16.msra.mxu0 %v492
    %1795 = vmatprep.subr.bf16.mxu0 0
    %1796 = vmatpush1.bf16.msra.mxu0 %v495
    %1797 = vmatprep.subr.bf16.mxu0 0
    %1798 = vmatpush1.bf16.msra.mxu0 %v498
    %1799 = vmatprep.subr.bf16.mxu0 0
    %1800 = vmatpush1.bf16.msra.mxu0 %v501
    %1801 = vmatprep.subr.bf16.mxu0 0
    %1802 = vmatpush1.bf16.msra.mxu0 0
    %1803 = vmatprep.subr.bf16.mxu0 0
    %1804 = vmatpush1.bf16.msra.mxu0 0
    %1805 = vmatprep.subr.bf16.mxu0 0
    %1806 = vmatpush1.bf16.msra.mxu0 0
    %1807 = vmatprep.subr.bf16.mxu0 0
    %1808 = vmatpush1.bf16.msra.mxu0 0
    %1809 = vmatprep.subr.bf16.mxu0 0
    %1810 = vmatpush1.bf16.msra.mxu0 0
    %1811 = vmatprep.subr.bf16.mxu0 0
    %1812 = vmatpush1.bf16.msra.mxu0 0
    %1813 = vmatprep.subr.bf16.mxu0 0
    %1814 = vmatpush1.bf16.msra.mxu0 0
    %1815 = vmatprep.subr.bf16.mxu0 0
    %1816 = vmatpush1.bf16.msra.mxu0 0
    %1817 = vmatprep.mubr.bf16.mxu0 0
    %1818 = vmatmul.mubr.bf16.gmra.mrb[0].mxu0 %v1743
    %v1819 = vpop.f32.mrb[0].mxu0
    %v1820 = vadd.f32 0.0, %v1819
    %v1821 = vpop.f32.mrb[0].mxu0
    %v1822 = vpop.f32.mrb[0].mxu0
    %v1823 = vpop.f32.mrb[0].mxu0
    %1824 = vdwg.mxu0
    %v1825 = vadd.f32 %v1652, %v1697
    %v1826 = vxor.u32 %v1825, 2147483648
    %v1827 = vmul.f32 %v1826, 1.442695
    %v1828 = vpow.pop %v1827
    %v1829 = vadd.f32 %v1828, 1.0
    %v1830 = vrcp.pop %v1829
    %v1831 = vmul.f32 1.0, %v1830
    %v1832 = vadd.f32 %v1653, %v1699
    %v1833 = vxor.u32 %v1832, 2147483648
    %v1834 = vmul.f32 %v1833, 1.442695
    %v1835 = vpow.pop %v1834
    %v1836 = vadd.f32 %v1835, 1.0
    %v1837 = vrcp.pop %v1836
    %v1838 = vmul.f32 1.0, %v1837
    %v1839 = vadd.f32 %v1738, %v165
    %v1840 = vmul.f32 %v1831, %v1839
    %v1841 = vadd.f32 %v1654, %v1840
    %v1842 = vtanh.pop %v1841
    %v1843 = vsub.f32 1.0, %v1838
    %v1844 = vmul.f32 %v1843, %v1842
    %v1845 = vmul.f32 %v1838, %v1647
    %v1846 = vadd.f32 %v1844, %v1845
    %v1847 = vadd.f32 %v1658, %v1779
    %v1848 = vxor.u32 %v1847, 2147483648
    %v1849 = vmul.f32 %v1848, 1.442695
    %v1850 = vpow.pop %v1849
    %v1851 = vadd.f32 %v1850, 1.0
    %v1852 = vrcp.pop %v1851
    %v1853 = vmul.f32 1.0, %v1852
    %v1854 = vadd.f32 %v1659, %v1781
    %v1855 = vxor.u32 %v1854, 2147483648
    %v1856 = vmul.f32 %v1855, 1.442695
    %v1857 = vpow.pop %v1856
    %v1858 = vadd.f32 %v1857, 1.0
    %v1859 = vrcp.pop %v1858
    %v1860 = vmul.f32 1.0, %v1859
    %v1861 = vadd.f32 %v1820, %v172
    %v1862 = vmul.f32 %v1853, %v1861
    %v1863 = vadd.f32 %v1660, %v1862
    %v1864 = vtanh.pop %v1863
    %v1865 = vsub.f32 1.0, %v1860
    %v1866 = vmul.f32 %v1865, %v1864
    %v1867 = vmul.f32 %v1860, %v1648
    %v1868 = vadd.f32 %v1866, %v1867
    %s1869 = sadd.s32 %s174, 5
    %v1870 = vstv %s1869
    %vm1871 = vcmp.lt.s32.totalorder %v1870, %v95
    %s1872 = ssub.s32 2, %s174
    %v1873 = vstv %s1872
    %vm1874 = vcmp.lt.s32.totalorder %v1873, %v95
    %v1875 = vsel %vm1871, 1, 0
    %1876 = vset.pattern.permute.xlu0 0
    %1877 = vperm.xlu0 %1876, %v1875
    %v1878 = vpop.permute.xlu0 %1877
    %vm1879 = vcmp.eq.s32.totalorder %v1878, 1
    %v1880 = vsel %vm1879, %v1846, 0.0
    %s1881 = scalar_lea.vmem [#allocation12], 40
    %1882 = vst [vmem:[%s1881] sm:$0xff] %v1880
    %v1883 = vsel %vm1874, 1, 0
    %1884 = vset.pattern.permute.xlu0 0
    %1885 = vperm.xlu0 %1884, %v1883
    %v1886 = vpop.permute.xlu0 %1885
    %vm1887 = vcmp.eq.s32.totalorder %v1886, 1
    %v1888 = vsel %vm1887, %v1868, 0.0
    %s1889 = scalar_lea.vmem [#allocation13], 16
    %1890 = vst [vmem:[%s1889] sm:$0xff] %v1888
    %v1891 = vsel %vm1879, %v1846, %v1647
    %v1892 = vsel %vm1887, %v1868, %v1648
    %s1893 = scalar_lea.vmem [#allocation4], 72
    %v1894 = vld [vmem:[%s1893] sm:$0xff]
    %v1895 = vld [vmem:[%s1893 + $0x8] sm:$0xf]
    %v1896 = vunpack.c.l.bf16 %v1894
    %v1897 = vunpack.c.h.bf16 %v1894
    %v1898 = vunpack.c.l.bf16 %v1895
    %s1899 = scalar_lea.vmem [#allocation7], 72
    %v1900 = vld [vmem:[%s1899] sm:$0xff]
    %v1901 = vld [vmem:[%s1899 + $0x8] sm:$0xf]
    %v1902 = vunpack.c.l.bf16 %v1900
    %v1903 = vunpack.c.h.bf16 %v1900
    %v1904 = vunpack.c.l.bf16 %v1901
    %v1905 = vpack.c.bf16 %v1891, %v1891
    %1906 = vmatprep.subr.bf16.mxu0 %v269
    %1907 = vmatpush1.bf16.msra.mxu0 %v268
    %1908 = vmatprep.subr.bf16.mxu0 %v272
    %1909 = vmatpush1.bf16.msra.mxu0 %v271
    %1910 = vmatprep.subr.bf16.mxu0 %v275
    %1911 = vmatpush1.bf16.msra.mxu0 %v274
    %1912 = vmatprep.subr.bf16.mxu0 %v278
    %1913 = vmatpush1.bf16.msra.mxu0 %v277
    %1914 = vmatprep.subr.bf16.mxu0 %v281
    %1915 = vmatpush1.bf16.msra.mxu0 %v280
    %1916 = vmatprep.subr.bf16.mxu0 %v284
    %1917 = vmatpush1.bf16.msra.mxu0 %v283
    %1918 = vmatprep.subr.bf16.mxu0 %v287
    %1919 = vmatpush1.bf16.msra.mxu0 %v286
    %1920 = vmatprep.subr.bf16.mxu0 %v290
    %1921 = vmatpush1.bf16.msra.mxu0 %v289
    %1922 = vmatprep.subr.bf16.mxu0 0
    %1923 = vmatpush1.bf16.msra.mxu0 0
    %1924 = vmatprep.subr.bf16.mxu0 0
    %1925 = vmatpush1.bf16.msra.mxu0 0
    %1926 = vmatprep.subr.bf16.mxu0 0
    %1927 = vmatpush1.bf16.msra.mxu0 0
    %1928 = vmatprep.subr.bf16.mxu0 0
    %1929 = vmatpush1.bf16.msra.mxu0 0
    %1930 = vmatprep.subr.bf16.mxu0 0
    %1931 = vmatpush1.bf16.msra.mxu0 0
    %1932 = vmatprep.subr.bf16.mxu0 0
    %1933 = vmatpush1.bf16.msra.mxu0 0
    %1934 = vmatprep.subr.bf16.mxu0 0
    %1935 = vmatpush1.bf16.msra.mxu0 0
    %1936 = vmatprep.subr.bf16.mxu0 0
    %1937 = vmatpush1.bf16.msra.mxu0 0
    %1938 = vmatprep.mubr.bf16.mxu0 0
    %1939 = vmatmul.mubr.bf16.gmra.mrb[0].mxu0 %v1905
    %v1940 = vpop.f32.mrb[0].mxu0
    %v1941 = vadd.f32 0.0, %v1940
    %v1942 = vpop.f32.mrb[0].mxu0
    %v1943 = vadd.f32 0.0, %v1942
    %v1944 = vpop.f32.mrb[0].mxu0
    %v1945 = vpop.f32.mrb[0].mxu0
    %1946 = vdwg.mxu0
    %1947 = vmatprep.subr.bf16.mxu0 0
    %1948 = vmatpush1.bf16.msra.mxu0 %v270
    %1949 = vmatprep.subr.bf16.mxu0 0
    %1950 = vmatpush1.bf16.msra.mxu0 %v273
    %1951 = vmatprep.subr.bf16.mxu0 0
    %1952 = vmatpush1.bf16.msra.mxu0 %v276
    %1953 = vmatprep.subr.bf16.mxu0 0
    %1954 = vmatpush1.bf16.msra.mxu0 %v279
    %1955 = vmatprep.subr.bf16.mxu0 0
    %1956 = vmatpush1.bf16.msra.mxu0 %v282
    %1957 = vmatprep.subr.bf16.mxu0 0
    %1958 = vmatpush1.bf16.msra.mxu0 %v285
    %1959 = vmatprep.subr.bf16.mxu0 0
    %1960 = vmatpush1.bf16.msra.mxu0 %v288
    %1961 = vmatprep.subr.bf16.mxu0 0
    %1962 = vmatpush1.bf16.msra.mxu0 %v291
    %1963 = vmatprep.subr.bf16.mxu0 0
    %1964 = vmatpush1.bf16.msra.mxu0 0
    %1965 = vmatprep.subr.bf16.mxu0 0
    %1966 = vmatpush1.bf16.msra.mxu0 0
    %1967 = vmatprep.subr.bf16.mxu0 0
    %1968 = vmatpush1.bf16.msra.mxu0 0
    %1969 = vmatprep.subr.bf16.mxu0 0
    %1970 = vmatpush1.bf16.msra.mxu0 0
    %1971 = vmatprep.subr.bf16.mxu0 0
    %1972 = vmatpush1.bf16.msra.mxu0 0
    %1973 = vmatprep.subr.bf16.mxu0 0
    %1974 = vmatpush1.bf16.msra.mxu0 0
    %1975 = vmatprep.subr.bf16.mxu0 0
    %1976 = vmatpush1.bf16.msra.mxu0 0
    %1977 = vmatprep.subr.bf16.mxu0 0
    %1978 = vmatpush1.bf16.msra.mxu0 0
    %1979 = vmatprep.mubr.bf16.mxu0 0
    %1980 = vmatmul.mubr.bf16.gmra.mrb[0].mxu0 %v1905
    %v1981 = vpop.f32.mrb[0].mxu0
    %v1982 = vadd.f32 0.0, %v1981
    %v1983 = vpop.f32.mrb[0].mxu0
    %v1984 = vpop.f32.mrb[0].mxu0
    %v1985 = vpop.f32.mrb[0].mxu0
    %1986 = vdwg.mxu0
    %v1987 = vpack.c.bf16 %v1892, %v1892
    %1988 = vmatprep.subr.bf16.mxu0 %v479
    %1989 = vmatpush1.bf16.msra.mxu0 %v478
    %1990 = vmatprep.subr.bf16.mxu0 %v482
    %1991 = vmatpush1.bf16.msra.mxu0 %v481
    %1992 = vmatprep.subr.bf16.mxu0 %v485
    %1993 = vmatpush1.bf16.msra.mxu0 %v484
    %1994 = vmatprep.subr.bf16.mxu0 %v488
    %1995 = vmatpush1.bf16.msra.mxu0 %v487
    %1996 = vmatprep.subr.bf16.mxu0 %v491
    %1997 = vmatpush1.bf16.msra.mxu0 %v490
    %1998 = vmatprep.subr.bf16.mxu0 %v494
    %1999 = vmatpush1.bf16.msra.mxu0 %v493
    %2000 = vmatprep.subr.bf16.mxu0 %v497
    %2001 = vmatpush1.bf16.msra.mxu0 %v496
    %2002 = vmatprep.subr.bf16.mxu0 %v500
    %2003 = vmatpush1.bf16.msra.mxu0 %v499
    %2004 = vmatprep.subr.bf16.mxu0 0
    %2005 = vmatpush1.bf16.msra.mxu0 0
    %2006 = vmatprep.subr.bf16.mxu0 0
    %2007 = vmatpush1.bf16.msra.mxu0 0
    %2008 = vmatprep.subr.bf16.mxu0 0
    %2009 = vmatpush1.bf16.msra.mxu0 0
    %2010 = vmatprep.subr.bf16.mxu0 0
    %2011 = vmatpush1.bf16.msra.mxu0 0
    %2012 = vmatprep.subr.bf16.mxu0 0
    %2013 = vmatpush1.bf16.msra.mxu0 0
    %2014 = vmatprep.subr.bf16.mxu0 0
    %2015 = vmatpush1.bf16.msra.mxu0 0
    %2016 = vmatprep.subr.bf16.mxu0 0
    %2017 = vmatpush1.bf16.msra.mxu0 0
    %2018 = vmatprep.subr.bf16.mxu0 0
    %2019 = vmatpush1.bf16.msra.mxu0 0
    %2020 = vmatprep.mubr.bf16.mxu0 0
    %2021 = vmatmul.mubr.bf16.gmra.mrb[0].mxu0 %v1987
    %v2022 = vpop.f32.mrb[0].mxu0
    %v2023 = vadd.f32 0.0, %v2022
    %v2024 = vpop.f32.mrb[0].mxu0
    %v2025 = vadd.f32 0.0, %v2024
    %v2026 = vpop.f32.mrb[0].mxu0
    %v2027 = vpop.f32.mrb[0].mxu0
    %2028 = vdwg.mxu0
    %2029 = vmatprep.subr.bf16.mxu0 0
    %2030 = vmatpush1.bf16.msra.mxu0 %v480
    %2031 = vmatprep.subr.bf16.mxu0 0
    %2032 = vmatpush1.bf16.msra.mxu0 %v483
    %2033 = vmatprep.subr.bf16.mxu0 0
    %2034 = vmatpush1.bf16.msra.mxu0 %v486
    %2035 = vmatprep.subr.bf16.mxu0 0
    %2036 = vmatpush1.bf16.msra.mxu0 %v489
    %2037 = vmatprep.subr.bf16.mxu0 0
    %2038 = vmatpush1.bf16.msra.mxu0 %v492
    %2039 = vmatprep.subr.bf16.mxu0 0
    %2040 = vmatpush1.bf16.msra.mxu0 %v495
    %2041 = vmatprep.subr.bf16.mxu0 0
    %2042 = vmatpush1.bf16.msra.mxu0 %v498
    %2043 = vmatprep.subr.bf16.mxu0 0
    %2044 = vmatpush1.bf16.msra.mxu0 %v501
    %2045 = vmatprep.subr.bf16.mxu0 0
    %2046 = vmatpush1.bf16.msra.mxu0 0
    %2047 = vmatprep.subr.bf16.mxu0 0
    %2048 = vmatpush1.bf16.msra.mxu0 0
    %2049 = vmatprep.subr.bf16.mxu0 0
    %2050 = vmatpush1.bf16.msra.mxu0 0
    %2051 = vmatprep.subr.bf16.mxu0 0
    %2052 = vmatpush1.bf16.msra.mxu0 0
    %2053 = vmatprep.subr.bf16.mxu0 0
    %2054 = vmatpush1.bf16.msra.mxu0 0
    %2055 = vmatprep.subr.bf16.mxu0 0
    %2056 = vmatpush1.bf16.msra.mxu0 0
    %2057 = vmatprep.subr.bf16.mxu0 0
    %2058 = vmatpush1.bf16.msra.mxu0 0
    %2059 = vmatprep.subr.bf16.mxu0 0
    %2060 = vmatpush1.bf16.msra.mxu0 0
    %2061 = vmatprep.mubr.bf16.mxu0 0
    %2062 = vmatmul.mubr.bf16.gmra.mrb[0].mxu0 %v1987
    %v2063 = vpop.f32.mrb[0].mxu0
    %v2064 = vadd.f32 0.0, %v2063
    %v2065 = vpop.f32.mrb[0].mxu0
    %v2066 = vpop.f32.mrb[0].mxu0
    %v2067 = vpop.f32.mrb[0].mxu0
    %2068 = vdwg.mxu0
    %v2069 = vadd.f32 %v1896, %v1941
    %v2070 = vxor.u32 %v2069, 2147483648
    %v2071 = vmul.f32 %v2070, 1.442695
    %v2072 = vpow.pop %v2071
    %v2073 = vadd.f32 %v2072, 1.0
    %v2074 = vrcp.pop %v2073
    %v2075 = vmul.f32 1.0, %v2074
    %v2076 = vadd.f32 %v1897, %v1943
    %v2077 = vxor.u32 %v2076, 2147483648
    %v2078 = vmul.f32 %v2077, 1.442695
    %v2079 = vpow.pop %v2078
    %v2080 = vadd.f32 %v2079, 1.0
    %v2081 = vrcp.pop %v2080
    %v2082 = vmul.f32 1.0, %v2081
    %v2083 = vadd.f32 %v1982, %v165
    %v2084 = vmul.f32 %v2075, %v2083
    %v2085 = vadd.f32 %v1898, %v2084
    %v2086 = vtanh.pop %v2085
    %v2087 = vsub.f32 1.0, %v2082
    %v2088 = vmul.f32 %v2087, %v2086
    %v2089 = vmul.f32 %v2082, %v1891
    %v2090 = vadd.f32 %v2088, %v2089
    %v2091 = vadd.f32 %v1902, %v2023
    %v2092 = vxor.u32 %v2091, 2147483648
    %v2093 = vmul.f32 %v2092, 1.442695
    %v2094 = vpow.pop %v2093
    %v2095 = vadd.f32 %v2094, 1.0
    %v2096 = vrcp.pop %v2095
    %v2097 = vmul.f32 1.0, %v2096
    %v2098 = vadd.f32 %v1903, %v2025
    %v2099 = vxor.u32 %v2098, 2147483648
    %v2100 = vmul.f32 %v2099, 1.442695
    %v2101 = vpow.pop %v2100
    %v2102 = vadd.f32 %v2101, 1.0
    %v2103 = vrcp.pop %v2102
    %v2104 = vmul.f32 1.0, %v2103
    %v2105 = vadd.f32 %v2064, %v172
    %v2106 = vmul.f32 %v2097, %v2105
    %v2107 = vadd.f32 %v1904, %v2106
    %v2108 = vtanh.pop %v2107
    %v2109 = vsub.f32 1.0, %v2104
    %v2110 = vmul.f32 %v2109, %v2108
    %v2111 = vmul.f32 %v2104, %v1892
    %v2112 = vadd.f32 %v2110, %v2111
    %s2113 = sadd.s32 %s174, 6
    %v2114 = vstv %s2113
    %vm2115 = vcmp.lt.s32.totalorder %v2114, %v95
    %s2116 = ssub.s32 1, %s174
    %v2117 = vstv %s2116
    %vm2118 = vcmp.lt.s32.totalorder %v2117, %v95
    %v2119 = vsel %vm2115, 1, 0
    %2120 = vset.pattern.permute.xlu0 0
    %2121 = vperm.xlu0 %2120, %v2119
    %v2122 = vpop.permute.xlu0 %2121
    %vm2123 = vcmp.eq.s32.totalorder %v2122, 1
    %v2124 = vsel %vm2123, %v2090, 0.0
    %s2125 = scalar_lea.vmem [#allocation12], 48
    %2126 = vst [vmem:[%s2125] sm:$0xff] %v2124
    %v2127 = vsel %vm2118, 1, 0
    %2128 = vset.pattern.permute.xlu0 0
    %2129 = vperm.xlu0 %2128, %v2127
    %v2130 = vpop.permute.xlu0 %2129
    %vm2131 = vcmp.eq.s32.totalorder %v2130, 1
    %v2132 = vsel %vm2131, %v2112, 0.0
    %s2133 = scalar_lea.vmem [#allocation13], 8
    %2134 = vst [vmem:[%s2133] sm:$0xff] %v2132
    %v2135 = vsel %vm2123, %v2090, %v1891
    %v2136 = vsel %vm2131, %v2112, %v1892
    %s2137 = scalar_lea.vmem [#allocation4], 84
    %v2138 = vld [vmem:[%s2137] sm:$0xff]
    %v2139 = vld [vmem:[%s2137 + $0x8] sm:$0xf]
    %v2140 = vunpack.c.l.bf16 %v2138
    %v2141 = vunpack.c.h.bf16 %v2138
    %v2142 = vunpack.c.l.bf16 %v2139
    %s2143 = scalar_lea.vmem [#allocation7], 84
    %v2144 = vld [vmem:[%s2143] sm:$0xff]
    %v2145 = vld [vmem:[%s2143 + $0x8] sm:$0xf]
    %v2146 = vunpack.c.l.bf16 %v2144
    %v2147 = vunpack.c.h.bf16 %v2144
    %v2148 = vunpack.c.l.bf16 %v2145
    %v2149 = vpack.c.bf16 %v2135, %v2135
    %2150 = vmatprep.subr.bf16.mxu0 %v269
    %2151 = vmatpush1.bf16.msra.mxu0 %v268
    %2152 = vmatprep.subr.bf16.mxu0 %v272
    %2153 = vmatpush1.bf16.msra.mxu0 %v271
    %2154 = vmatprep.subr.bf16.mxu0 %v275
    %2155 = vmatpush1.bf16.msra.mxu0 %v274
    %2156 = vmatprep.subr.bf16.mxu0 %v278
    %2157 = vmatpush1.bf16.msra.mxu0 %v277
    %2158 = vmatprep.subr.bf16.mxu0 %v281
    %2159 = vmatpush1.bf16.msra.mxu0 %v280
    %2160 = vmatprep.subr.bf16.mxu0 %v284
    %2161 = vmatpush1.bf16.msra.mxu0 %v283
    %2162 = vmatprep.subr.bf16.mxu0 %v287
    %2163 = vmatpush1.bf16.msra.mxu0 %v286
    %2164 = vmatprep.subr.bf16.mxu0 %v290
    %2165 = vmatpush1.bf16.msra.mxu0 %v289
    %2166 = vmatprep.subr.bf16.mxu0 0
    %2167 = vmatpush1.bf16.msra.mxu0 0
    %2168 = vmatprep.subr.bf16.mxu0 0
    %2169 = vmatpush1.bf16.msra.mxu0 0
    %2170 = vmatprep.subr.bf16.mxu0 0
    %2171 = vmatpush1.bf16.msra.mxu0 0
    %2172 = vmatprep.subr.bf16.mxu0 0
    %2173 = vmatpush1.bf16.msra.mxu0 0
    %2174 = vmatprep.subr.bf16.mxu0 0
    %2175 = vmatpush1.bf16.msra.mxu0 0
    %2176 = vmatprep.subr.bf16.mxu0 0
    %2177 = vmatpush1.bf16.msra.mxu0 0
    %2178 = vmatprep.subr.bf16.mxu0 0
    %2179 = vmatpush1.bf16.msra.mxu0 0
    %2180 = vmatprep.subr.bf16.mxu0 0
    %2181 = vmatpush1.bf16.msra.mxu0 0
    %2182 = vmatprep.mubr.bf16.mxu0 0
    %2183 = vmatmul.mubr.bf16.gmra.mrb[0].mxu0 %v2149
    %v2184 = vpop.f32.mrb[0].mxu0
    %v2185 = vadd.f32 0.0, %v2184
    %v2186 = vpop.f32.mrb[0].mxu0
    %v2187 = vadd.f32 0.0, %v2186
    %v2188 = vpop.f32.mrb[0].mxu0
    %v2189 = vpop.f32.mrb[0].mxu0
    %2190 = vdwg.mxu0
    %2191 = vmatprep.subr.bf16.mxu0 0
    %2192 = vmatpush1.bf16.msra.mxu0 %v270
    %2193 = vmatprep.subr.bf16.mxu0 0
    %2194 = vmatpush1.bf16.msra.mxu0 %v273
    %2195 = vmatprep.subr.bf16.mxu0 0
    %2196 = vmatpush1.bf16.msra.mxu0 %v276
    %2197 = vmatprep.subr.bf16.mxu0 0
    %2198 = vmatpush1.bf16.msra.mxu0 %v279
    %2199 = vmatprep.subr.bf16.mxu0 0
    %2200 = vmatpush1.bf16.msra.mxu0 %v282
    %2201 = vmatprep.subr.bf16.mxu0 0
    %2202 = vmatpush1.bf16.msra.mxu0 %v285
    %2203 = vmatprep.subr.bf16.mxu0 0
    %2204 = vmatpush1.bf16.msra.mxu0 %v288
    %2205 = vmatprep.subr.bf16.mxu0 0
    %2206 = vmatpush1.bf16.msra.mxu0 %v291
    %2207 = vmatprep.subr.bf16.mxu0 0
    %2208 = vmatpush1.bf16.msra.mxu0 0
    %2209 = vmatprep.subr.bf16.mxu0 0
    %2210 = vmatpush1.bf16.msra.mxu0 0
    %2211 = vmatprep.subr.bf16.mxu0 0
    %2212 = vmatpush1.bf16.msra.mxu0 0
    %2213 = vmatprep.subr.bf16.mxu0 0
    %2214 = vmatpush1.bf16.msra.mxu0 0
    %2215 = vmatprep.subr.bf16.mxu0 0
    %2216 = vmatpush1.bf16.msra.mxu0 0
    %2217 = vmatprep.subr.bf16.mxu0 0
    %2218 = vmatpush1.bf16.msra.mxu0 0
    %2219 = vmatprep.subr.bf16.mxu0 0
    %2220 = vmatpush1.bf16.msra.mxu0 0
    %2221 = vmatprep.subr.bf16.mxu0 0
    %2222 = vmatpush1.bf16.msra.mxu0 0
    %2223 = vmatprep.mubr.bf16.mxu0 0
    %2224 = vmatmul.mubr.bf16.gmra.mrb[0].mxu0 %v2149
    %v2225 = vpop.f32.mrb[0].mxu0
    %v2226 = vadd.f32 0.0, %v2225
    %v2227 = vpop.f32.mrb[0].mxu0
    %v2228 = vpop.f32.mrb[0].mxu0
    %v2229 = vpop.f32.mrb[0].mxu0
    %2230 = vdwg.mxu0
    %v2231 = vpack.c.bf16 %v2136, %v2136
    %2232 = vmatprep.subr.bf16.mxu0 %v479
    %2233 = vmatpush1.bf16.msra.mxu0 %v478
    %2234 = vmatprep.subr.bf16.mxu0 %v482
    %2235 = vmatpush1.bf16.msra.mxu0 %v481
    %2236 = vmatprep.subr.bf16.mxu0 %v485
    %2237 = vmatpush1.bf16.msra.mxu0 %v484
    %2238 = vmatprep.subr.bf16.mxu0 %v488
    %2239 = vmatpush1.bf16.msra.mxu0 %v487
    %2240 = vmatprep.subr.bf16.mxu0 %v491
    %2241 = vmatpush1.bf16.msra.mxu0 %v490
    %2242 = vmatprep.subr.bf16.mxu0 %v494
    %2243 = vmatpush1.bf16.msra.mxu0 %v493
    %2244 = vmatprep.subr.bf16.mxu0 %v497
    %2245 = vmatpush1.bf16.msra.mxu0 %v496
    %2246 = vmatprep.subr.bf16.mxu0 %v500
    %2247 = vmatpush1.bf16.msra.mxu0 %v499
    %2248 = vmatprep.subr.bf16.mxu0 0
    %2249 = vmatpush1.bf16.msra.mxu0 0
    %2250 = vmatprep.subr.bf16.mxu0 0
    %2251 = vmatpush1.bf16.msra.mxu0 0
    %2252 = vmatprep.subr.bf16.mxu0 0
    %2253 = vmatpush1.bf16.msra.mxu0 0
    %2254 = vmatprep.subr.bf16.mxu0 0
    %2255 = vmatpush1.bf16.msra.mxu0 0
    %2256 = vmatprep.subr.bf16.mxu0 0
    %2257 = vmatpush1.bf16.msra.mxu0 0
    %2258 = vmatprep.subr.bf16.mxu0 0
    %2259 = vmatpush1.bf16.msra.mxu0 0
    %2260 = vmatprep.subr.bf16.mxu0 0
    %2261 = vmatpush1.bf16.msra.mxu0 0
    %2262 = vmatprep.subr.bf16.mxu0 0
    %2263 = vmatpush1.bf16.msra.mxu0 0
    %2264 = vmatprep.mubr.bf16.mxu0 0
    %2265 = vmatmul.mubr.bf16.gmra.mrb[0].mxu0 %v2231
    %v2266 = vpop.f32.mrb[0].mxu0
    %v2267 = vadd.f32 0.0, %v2266
    %v2268 = vpop.f32.mrb[0].mxu0
    %v2269 = vadd.f32 0.0, %v2268
    %v2270 = vpop.f32.mrb[0].mxu0
    %v2271 = vpop.f32.mrb[0].mxu0
    %2272 = vdwg.mxu0
    %2273 = vmatprep.subr.bf16.mxu0 0
    %2274 = vmatpush1.bf16.msra.mxu0 %v480
    %2275 = vmatprep.subr.bf16.mxu0 0
    %2276 = vmatpush1.bf16.msra.mxu0 %v483
    %2277 = vmatprep.subr.bf16.mxu0 0
    %2278 = vmatpush1.bf16.msra.mxu0 %v486
    %2279 = vmatprep.subr.bf16.mxu0 0
    %2280 = vmatpush1.bf16.msra.mxu0 %v489
    %2281 = vmatprep.subr.bf16.mxu0 0
    %2282 = vmatpush1.bf16.msra.mxu0 %v492
    %2283 = vmatprep.subr.bf16.mxu0 0
    %2284 = vmatpush1.bf16.msra.mxu0 %v495
    %2285 = vmatprep.subr.bf16.mxu0 0
    %2286 = vmatpush1.bf16.msra.mxu0 %v498
    %2287 = vmatprep.subr.bf16.mxu0 0
    %2288 = vmatpush1.bf16.msra.mxu0 %v501
    %2289 = vmatprep.subr.bf16.mxu0 0
    %2290 = vmatpush1.bf16.msra.mxu0 0
    %2291 = vmatprep.subr.bf16.mxu0 0
    %2292 = vmatpush1.bf16.msra.mxu0 0
    %2293 = vmatprep.subr.bf16.mxu0 0
    %2294 = vmatpush1.bf16.msra.mxu0 0
    %2295 = vmatprep.subr.bf16.mxu0 0
    %2296 = vmatpush1.bf16.msra.mxu0 0
    %2297 = vmatprep.subr.bf16.mxu0 0
    %2298 = vmatpush1.bf16.msra.mxu0 0
    %2299 = vmatprep.subr.bf16.mxu0 0
    %2300 = vmatpush1.bf16.msra.mxu0 0
    %2301 = vmatprep.subr.bf16.mxu0 0
    %2302 = vmatpush1.bf16.msra.mxu0 0
    %2303 = vmatprep.subr.bf16.mxu0 0
    %2304 = vmatpush1.bf16.msra.mxu0 0
    %2305 = vmatprep.mubr.bf16.mxu0 0
    %2306 = vmatmul.mubr.bf16.gmra.mrb[0].mxu0 %v2231
    %v2307 = vpop.f32.mrb[0].mxu0
    %v2308 = vadd.f32 0.0, %v2307
    %v2309 = vpop.f32.mrb[0].mxu0
    %v2310 = vpop.f32.mrb[0].mxu0
    %v2311 = vpop.f32.mrb[0].mxu0
    %2312 = vdwg.mxu0
    %v2313 = vadd.f32 %v2140, %v2185
    %v2314 = vxor.u32 %v2313, 2147483648
    %v2315 = vmul.f32 %v2314, 1.442695
    %v2316 = vpow.pop %v2315
    %v2317 = vadd.f32 %v2316, 1.0
    %v2318 = vrcp.pop %v2317
    %v2319 = vmul.f32 1.0, %v2318
    %v2320 = vadd.f32 %v2141, %v2187
    %v2321 = vxor.u32 %v2320, 2147483648
    %v2322 = vmul.f32 %v2321, 1.442695
    %v2323 = vpow.pop %v2322
    %v2324 = vadd.f32 %v2323, 1.0
    %v2325 = vrcp.pop %v2324
    %v2326 = vmul.f32 1.0, %v2325
    %v2327 = vadd.f32 %v2226, %v165
    %v2328 = vmul.f32 %v2319, %v2327
    %v2329 = vadd.f32 %v2142, %v2328
    %v2330 = vtanh.pop %v2329
    %v2331 = vsub.f32 1.0, %v2326
    %v2332 = vmul.f32 %v2331, %v2330
    %v2333 = vmul.f32 %v2326, %v2135
    %v2334 = vadd.f32 %v2332, %v2333
    %v2335 = vadd.f32 %v2146, %v2267
    %v2336 = vxor.u32 %v2335, 2147483648
    %v2337 = vmul.f32 %v2336, 1.442695
    %v2338 = vpow.pop %v2337
    %v2339 = vadd.f32 %v2338, 1.0
    %v2340 = vrcp.pop %v2339
    %v2341 = vmul.f32 1.0, %v2340
    %v2342 = vadd.f32 %v2147, %v2269
    %v2343 = vxor.u32 %v2342, 2147483648
    %v2344 = vmul.f32 %v2343, 1.442695
    %v2345 = vpow.pop %v2344
    %v2346 = vadd.f32 %v2345, 1.0
    %v2347 = vrcp.pop %v2346
    %v2348 = vmul.f32 1.0, %v2347
    %v2349 = vadd.f32 %v2308, %v172
    %v2350 = vmul.f32 %v2341, %v2349
    %v2351 = vadd.f32 %v2148, %v2350
    %v2352 = vtanh.pop %v2351
    %v2353 = vsub.f32 1.0, %v2348
    %v2354 = vmul.f32 %v2353, %v2352
    %v2355 = vmul.f32 %v2348, %v2136
    %v2356 = vadd.f32 %v2354, %v2355
    %s2357 = sadd.s32 %s174, 7
    %v2358 = vstv %s2357
    %vm2359 = vcmp.lt.s32.totalorder %v2358, %v95
    %s2360 = ssub.s32 0, %s174
    %v2361 = vstv %s2360
    %vm2362 = vcmp.lt.s32.totalorder %v2361, %v95
    %v2363 = vsel %vm2359, 1, 0
    %2364 = vset.pattern.permute.xlu0 0
    %2365 = vperm.xlu0 %2364, %v2363
    %v2366 = vpop.permute.xlu0 %2365
    %vm2367 = vcmp.eq.s32.totalorder %v2366, 1
    %v2368 = vsel %vm2367, %v2334, 0.0
    %s2369 = scalar_lea.vmem [#allocation12], 56
    %2370 = vst [vmem:[%s2369] sm:$0xff] %v2368
    %v2371 = vsel %vm2362, 1, 0
    %2372 = vset.pattern.permute.xlu0 0
    %2373 = vperm.xlu0 %2372, %v2371
    %v2374 = vpop.permute.xlu0 %2373
    %vm2375 = vcmp.eq.s32.totalorder %v2374, 1
    %v2376 = vsel %vm2375, %v2356, 0.0
    %2377 = vst [vmem:[#allocation13] sm:$0xff] %v2376
    %v2378 = vsel %vm2367, %v2334, %v2135
    %v2379 = vsel %vm2375, %v2356, %v2136
    %2380 = vst [vmem:[#allocation2] sm:$0xff] %v2378
    %2381 = vst [vmem:[#allocation3] sm:$0xff] %v2379
    // Predicated region
    $region50: #{tpu_custom_call.1} parent=1 // pred_check
      %p2382 = pneg %p89
    $region51: #{tpu_custom_call.1} parent=1 // pred_check_branch
      %2384 = sbr.rel (%p2382) target = $region53
    $region52: #{tpu_custom_call.1} parent=1 // pred_region
      %2385 = vst [vmem:[#allocation15] sm:$0xff] %v2378
      %2386 = vst [vmem:[#allocation15 + $0x8] sm:$0xff] %v2379
    $region53: #{tpu_custom_call.1} parent=1 // pred_fallthru
      _
    // Predicated region
    $region54: #{tpu_custom_call.1} parent=1 // pred_check
      _
    $region55: #{tpu_custom_call.1} parent=1 // pred_check_branch
      %2388 = sbr.rel (0) target = $region57
    $region56: #{tpu_custom_call.1} parent=1 // pred_region
      %s2390 = ssub.s32 1024, 1024
      %2391 = vsyncadd [#allocation6], %s2390
      %s2392 = sshll.u32 [#allocation12], 4
      %s2393 = int_to_ptr.vmem [resolvable:$true] %s2392
      %2398 = dma.vmem_to_hbm [thread:$0]  %s2393, 1024, %s7, [#allocation6], 128, 128, 8
    $region57: #{tpu_custom_call.1} parent=1 // pred_fallthru
      _
    // Predicated region
    $region58: #{tpu_custom_call.1} parent=1 // pred_check
      _
    $region59: #{tpu_custom_call.1} parent=1 // pred_check_branch
      %2400 = sbr.rel (0) target = $region61
    $region60: #{tpu_custom_call.1} parent=1 // pred_region
      %s2401 = ssub.s32 0, 0
      %s2402 = smul.u32 8, %s2401
      %s2404 = ssub.s32 1024, 1024
      %2405 = vsyncadd [#allocation14], %s2404
      %s2406 = smul.addr %s2402, 128
      %s2407 = scalar_lea.hbm %s8, %s2406
      %s2408 = sshll.u32 [#allocation13], 4
      %s2409 = int_to_ptr.vmem [resolvable:$true] %s2408
      %2414 = dma.vmem_to_hbm [thread:$0]  %s2409, 1024, %s2407, [#allocation14], 128, 128, 8
    $region61: #{tpu_custom_call.1} parent=1 // pred_fallthru
      _
    // Predicated region
    $region62: #{tpu_custom_call.1} parent=1 // pred_check
      _
    $region63: #{tpu_custom_call.1} parent=1 // pred_check_branch
      %2416 = sbr.rel (0) target = $region65
    $region64: #{tpu_custom_call.1} parent=1 // pred_region
      %s2418 = ssub.s32 256, 256
      %2419 = vsyncadd [#allocation14], %s2418
      %s2421 = sshll.u32 [#allocation15], 4
      %s2422 = int_to_ptr.vmem [resolvable:$true] %s2421
      %2424 = dma.vmem_to_hbm [thread:$0]  %s2422, 256, %s9, [#allocation14]
    $region65: #{tpu_custom_call.1} parent=1 // pred_fallthru
      _
    // Predicated region
    $region66: #{tpu_custom_call.1} parent=1 // pred_check
      _
    $region67: #{tpu_custom_call.1} parent=1 // pred_check_branch
      %2426 = sbr.rel (0) target = $region69
    $region68: #{tpu_custom_call.1} parent=1 // pred_region
      %2427 = dma.done [#allocation6], 1024
    $region69: #{tpu_custom_call.1} parent=1 // pred_fallthru
      _
    // Predicated region
    $region70: #{tpu_custom_call.1} parent=1 // pred_check
      _
    $region71: #{tpu_custom_call.1} parent=1 // pred_check_branch
      %2429 = sbr.rel (0) target = $region73
    $region72: #{tpu_custom_call.1} parent=1 // pred_region
      %2430 = dma.done [#allocation14], 1024
    $region73: #{tpu_custom_call.1} parent=1 // pred_fallthru
      _
    // Predicated region
    $region74: #{tpu_custom_call.1} parent=1 // pred_check
      _
    $region75: #{tpu_custom_call.1} parent=1 // pred_check_branch
      %2432 = sbr.rel (0) target = $region77
    $region76: #{tpu_custom_call.1} parent=1 // pred_region
      %2433 = dma.done [#allocation14], 256
    $region77: #{tpu_custom_call.1} parent=1 // pred_fallthru
      _
    %2434 = vsyncpa [#allocation5], 1
    %2435 = vsyncpa [#allocation8], 1
    %2436 = vsyncpa [#allocation11], 1
    %2437 = vsyncpa [#allocation6], 1
    %2438 = vsyncpa [#allocation14], 1

</llo_original>
